<compile_context>
chip_gen: v7x
topology: tpu7x:2x2x1
jax: 0.10.0
libtpu: 0.0.40
codegen_flags: <defaults>
</compile_context>

<pallas_src>
import functools

import jax
import jax.numpy as jnp
from jax import lax
from jax.experimental import pallas as pl
from jax.experimental.pallas import tpu as pltpu

INPUT_DIM = 35
HIDDEN = 50
OUT_DIM = 2
NUM_GATES = 4
GATE_PAD = 128                      # per-gate lane padding (i|f|g|o -> 4x128)
GATES_PAD = NUM_GATES * GATE_PAD    # 512
H_PAD = 128                         # hidden state padded to one full lane extent
OUT_PAD = 128                       # output head padded for a lane-dense store


# ---------------------------------------------------------------------------
# Fused kernel: input projection + LSTM recurrence + output head.
# ---------------------------------------------------------------------------
def _fused_kernel(x_ref, w1_ref, b1_ref, wih_ref, bl_ref, whh_ref, w2_ref,
                  b2_ref, y_ref, gx_scr, h_scr, *, n_steps, b_pad):
    # ---- Stage 1 (batched, MXU): gates_x = relu(X @ W1 + b1) @ W_ih_pad + bl
    z = jnp.dot(x_ref[...], w1_ref[...], preferred_element_type=jnp.float32)
    z = jnp.maximum(z + b1_ref[...], 0.0)
    gx_scr[...] = (
        jnp.dot(z, wih_ref[...], preferred_element_type=jnp.float32) + bl_ref[...]
    )

    # ---- Stage 2: LSTM recurrence.  h/c carried in registers; W_hh (bf16)
    # read inside each step so its live range is one matmul, not the loop.
    def step(t, carry):
        h_prev, c_prev = carry
        base = t * b_pad                                        # multiple of 8
        gx_t = gx_scr[pl.ds(base, b_pad), :]                    # (b_pad, 512)
        gates = gx_t + jnp.dot(
            h_prev.astype(jnp.bfloat16), whh_ref[...],
            preferred_element_type=jnp.float32)                 # (b_pad, 512)
        i_g = jax.nn.sigmoid(gates[:, 0 * GATE_PAD:1 * GATE_PAD])
        f_g = jax.nn.sigmoid(gates[:, 1 * GATE_PAD:2 * GATE_PAD])
        g_g = jnp.tanh(gates[:, 2 * GATE_PAD:3 * GATE_PAD])
        o_g = jax.nn.sigmoid(gates[:, 3 * GATE_PAD:4 * GATE_PAD])
        c_new = f_g * c_prev + i_g * g_g
        h_new = o_g * jnp.tanh(c_new)
        h_scr[pl.ds(base, b_pad), :] = h_new                    # aligned, lane-dense
        return (h_new, c_new)

    h0 = jnp.zeros((b_pad, H_PAD), jnp.float32)
    c0 = jnp.zeros((b_pad, H_PAD), jnp.float32)
    lax.fori_loop(0, n_steps, step, (h0, c0), unroll=True)

    # ---- Stage 3 (batched): y = tanh(relu(H) @ W2_pad + b2_pad)
    zz = jnp.maximum(h_scr[...], 0.0)
    y_ref[...] = jnp.tanh(
        jnp.dot(zz, w2_ref[...], preferred_element_type=jnp.float32) + b2_ref[...]
    )


def seekndestroy_forward(inputs, padded_params):
    """inputs: (T, B, 35) float32 -> (T*B, 2) float32 (matches torch view(-1, H))."""
    T, B, F = inputs.shape
    assert F == INPUT_DIM
    w1, b1, wih_pad, bl_pad, whh_pad, w2_pad, b2_pad = padded_params

    b_pad = ((B + 7) // 8) * 8                  # sublane-align the batch
    if b_pad != B:
        inputs = jnp.pad(inputs, ((0, 0), (0, b_pad - B), (0, 0)))
    m_pad = T * b_pad
    x2d = inputs.reshape(m_pad, INPUT_DIM)

    kernel = functools.partial(_fused_kernel, n_steps=T, b_pad=b_pad)

    y_pad = pl.pallas_call(
        kernel,
        out_shape=jax.ShapeDtypeStruct((m_pad, OUT_PAD), jnp.float32),
        grid_spec=pltpu.PrefetchScalarGridSpec(
            num_scalar_prefetch=0,
            grid=(1,),
            in_specs=[
                pl.BlockSpec((m_pad, INPUT_DIM), lambda i: (0, 0)),
                pl.BlockSpec((INPUT_DIM, INPUT_DIM), lambda i: (0, 0)),
                pl.BlockSpec((1, INPUT_DIM), lambda i: (0, 0)),
                pl.BlockSpec((INPUT_DIM, GATES_PAD), lambda i: (0, 0)),
                pl.BlockSpec((1, GATES_PAD), lambda i: (0, 0)),
                pl.BlockSpec((H_PAD, GATES_PAD), lambda i: (0, 0)),
                pl.BlockSpec((H_PAD, OUT_PAD), lambda i: (0, 0)),
                pl.BlockSpec((1, OUT_PAD), lambda i: (0, 0)),
            ],
            out_specs=pl.BlockSpec((m_pad, OUT_PAD), lambda i: (0, 0)),
            scratch_shapes=[
                pltpu.VMEM((m_pad, GATES_PAD), jnp.float32),   # gates_x
                pltpu.VMEM((m_pad, H_PAD), jnp.float32),       # hidden sequence
            ],
        ),
        compiler_params=pltpu.CompilerParams(
            dimension_semantics=("arbitrary",)),
    )(x2d, w1, b1, wih_pad, bl_pad, whh_pad, w2_pad, b2_pad)

    # Drop padded batch rows and padded output lanes (exactness preserved).
    y = y_pad.reshape(T, b_pad, OUT_PAD)[:, :B, :OUT_DIM].reshape(T * B, OUT_DIM)
    return y


# ---------------------------------------------------------------------------
# Parameters (synthetic, deterministic).  Raw layout mirrors PyTorch (already
# transposed to (in, out)); prepare_params() zero-pads to the kernel layout.
# ---------------------------------------------------------------------------
def init_params(key):
    ks = jax.random.split(key, 8)
    s = 0.1
    w1 = s * jax.random.normal(ks[0], (INPUT_DIM, INPUT_DIM), jnp.float32)      # deep_1^T
    b1 = s * jax.random.normal(ks[1], (1, INPUT_DIM), jnp.float32)
    wih = s * jax.random.normal(ks[2], (INPUT_DIM, 4 * HIDDEN), jnp.float32)    # W_ih^T (i|f|g|o)
    whh = s * jax.random.normal(ks[3], (HIDDEN, 4 * HIDDEN), jnp.float32)       # W_hh^T
    b_ih = s * jax.random.normal(ks[4], (1, 4 * HIDDEN), jnp.float32)
    b_hh = s * jax.random.normal(ks[5], (1, 4 * HIDDEN), jnp.float32)
    w2 = s * jax.random.normal(ks[6], (HIDDEN, OUT_DIM), jnp.float32)           # deep_2^T
    b2 = s * jax.random.normal(ks[7], (1, OUT_DIM), jnp.float32)
    return (w1, b1, wih, whh, b_ih, b_hh, w2, b2)


def prepare_params(raw_params):
    """Zero-pad gates/hidden/output to 128-lane slots; W_hh -> bf16 (f32 accum in-kernel)."""
    w1, b1, wih, whh, b_ih, b_hh, w2, b2 = raw_params
    bl = b_ih + b_hh

    def pad_gate_cols(w):                                  # (K, 200) -> (K, 512)
        out = jnp.zeros((w.shape[0], GATES_PAD), w.dtype)
        for k in range(NUM_GATES):
            out = out.at[:, k * GATE_PAD:k * GATE_PAD + HIDDEN].set(
                w[:, k * HIDDEN:(k + 1) * HIDDEN])
        return out

    wih_pad = pad_gate_cols(wih)                                       # (35, 512) f32
    bl_pad = pad_gate_cols(bl)                                         # (1, 512) f32
    whh_pad = jnp.zeros((H_PAD, GATES_PAD), jnp.float32)
    whh_pad = whh_pad.at[:HIDDEN, :].set(pad_gate_cols(whh))
    whh_pad = whh_pad.astype(jnp.bfloat16)                             # (128, 512) bf16
    w2_pad = jnp.zeros((H_PAD, OUT_PAD), jnp.float32).at[:HIDDEN, :OUT_DIM].set(w2)
    b2_pad = jnp.zeros((1, OUT_PAD), jnp.float32).at[:, :OUT_DIM].set(b2)
    return (w1, b1, wih_pad, bl_pad, whh_pad, w2_pad, b2_pad)


def reference_forward(inputs, raw_params):
    """Pure-JAX reference (f32, highest precision) of the PyTorch forward."""
    w1, b1, wih, whh, b_ih, b_hh, w2, b2 = raw_params
    hi = lax.Precision.HIGHEST
    T, B, _ = inputs.shape
    x = jnp.maximum(jnp.dot(inputs, w1, precision=hi) + b1, 0.0)

    def cell(carry, x_t):
        h, c = carry
        g = (jnp.dot(x_t, wih, precision=hi)
             + jnp.dot(h, whh, precision=hi) + b_ih + b_hh)
        i = jax.nn.sigmoid(g[:, 0 * HIDDEN:1 * HIDDEN])
        f = jax.nn.sigmoid(g[:, 1 * HIDDEN:2 * HIDDEN])
        gg = jnp.tanh(g[:, 2 * HIDDEN:3 * HIDDEN])
        o = jax.nn.sigmoid(g[:, 3 * HIDDEN:4 * HIDDEN])
        c = f * c + i * gg
        h = o * jnp.tanh(c)
        return (h, c), h

    init = (jnp.zeros((B, HIDDEN), jnp.float32),
            jnp.zeros((B, HIDDEN), jnp.float32))
    _, hs = lax.scan(cell, init, x)
    z = jnp.maximum(hs.reshape(T * B, HIDDEN), 0.0)
    return jnp.tanh(jnp.dot(z, w2, precision=hi) + b2)


if __name__ == "__main__":
    key = jax.random.PRNGKey(0)
    k_in, k_par = jax.random.split(key)

    T, B = 8, 2   # time-major (seq_len, batch, features), like torch nn.LSTM default
    inputs = jax.random.normal(k_in, (T, B, INPUT_DIM), jnp.float32)
    raw_params = init_params(k_par)
    kernel_params = prepare_params(raw_params)

    fwd = jax.jit(seekndestroy_forward)
    out = fwd(inputs, kernel_params)
    out = jax.block_until_ready(out)
    assert out.shape == (T * B, OUT_DIM)

    ref = jax.block_until_ready(reference_forward(inputs, raw_params))
    assert float(jnp.max(jnp.abs(out - ref))) < 2e-2

    print("KERNEL_OK")
</pallas_src>

<mosaic_0001>
module attributes {stable_mosaic.version = 11 : i64} {
  func.func @_fused_kernel(%arg0: i32, %arg1: memref<64x35xf32, #tpu.memory_space<vmem>>, %arg2: memref<35x35xf32, #tpu.memory_space<vmem>>, %arg3: memref<1x35xf32, #tpu.memory_space<vmem>>, %arg4: memref<35x512xf32, #tpu.memory_space<vmem>>, %arg5: memref<1x512xf32, #tpu.memory_space<vmem>>, %arg6: memref<128x512xbf16, #tpu.memory_space<vmem>>, %arg7: memref<128x128xf32, #tpu.memory_space<vmem>>, %arg8: memref<1x128xf32, #tpu.memory_space<vmem>>, %arg9: memref<64x128xf32, #tpu.memory_space<vmem>>, %arg10: memref<64x512xf32, #tpu.memory_space<vmem>>, %arg11: memref<64x128xf32, #tpu.memory_space<vmem>>) attributes {dimension_semantics = [#tpu.dimension_semantics<arbitrary>], iteration_bounds = array<i64: 1>, scalar_prefetch = 0 : i64, scratch_operands = 2 : i64, tpu.core_type = #tpu.core_type<tc>, window_params = [{pipeline_mode = #tpu.pipeline_mode<synchronous>, transform_indices = @transform_0, window_bounds = array<i64: 64, 35>}, {pipeline_mode = #tpu.pipeline_mode<synchronous>, transform_indices = @transform_1, window_bounds = array<i64: 35, 35>}, {pipeline_mode = #tpu.pipeline_mode<synchronous>, transform_indices = @transform_2, window_bounds = array<i64: 1, 35>}, {pipeline_mode = #tpu.pipeline_mode<synchronous>, transform_indices = @transform_3, window_bounds = array<i64: 35, 512>}, {pipeline_mode = #tpu.pipeline_mode<synchronous>, transform_indices = @transform_4, window_bounds = array<i64: 1, 512>}, {pipeline_mode = #tpu.pipeline_mode<synchronous>, transform_indices = @transform_5, window_bounds = array<i64: 128, 512>}, {pipeline_mode = #tpu.pipeline_mode<synchronous>, transform_indices = @transform_6, window_bounds = array<i64: 128, 128>}, {pipeline_mode = #tpu.pipeline_mode<synchronous>, transform_indices = @transform_7, window_bounds = array<i64: 1, 128>}, {pipeline_mode = #tpu.pipeline_mode<synchronous>, transform_indices = @transform_8, window_bounds = array<i64: 64, 128>}]} {
    %c0 = arith.constant 0 : index
    %c0_0 = arith.constant 0 : index
    %0 = vector.load %arg1[%c0, %c0_0] : memref<64x35xf32, #tpu.memory_space<vmem>>, vector<64x35xf32>
    %c0_1 = arith.constant 0 : index
    %c0_2 = arith.constant 0 : index
    %1 = vector.load %arg2[%c0_1, %c0_2] : memref<35x35xf32, #tpu.memory_space<vmem>>, vector<35x35xf32>
    %cst = arith.constant dense<0.000000e+00> : vector<64x35xf32>
    %2 = tpu.matmul %0, %1, %cst {dimension_numbers = #tpu.dot_dimension_numbers<[1], [0], [0], [1], [0, 0, 1, 1], [], []>} : vector<64x35xf32>, vector<35x35xf32>, vector<64x35xf32> -> vector<64x35xf32>
    %c0_3 = arith.constant 0 : index
    %c0_4 = arith.constant 0 : index
    %3 = vector.load %arg3[%c0_3, %c0_4] : memref<1x35xf32, #tpu.memory_space<vmem>>, vector<1x35xf32>
    %4 = vector.broadcast %3 : vector<1x35xf32> to vector<64x35xf32>
    %5 = arith.addf %2, %4 : vector<64x35xf32>
    %cst_5 = arith.constant 0.000000e+00 : f32
    %6 = vector.broadcast %cst_5 : f32 to vector<64x35xf32>
    %7 = arith.maximumf %5, %6 : vector<64x35xf32>
    %c0_6 = arith.constant 0 : index
    %c0_7 = arith.constant 0 : index
    %8 = vector.load %arg4[%c0_6, %c0_7] : memref<35x512xf32, #tpu.memory_space<vmem>>, vector<35x512xf32>
    %cst_8 = arith.constant dense<0.000000e+00> : vector<64x512xf32>
    %9 = tpu.matmul %7, %8, %cst_8 {dimension_numbers = #tpu.dot_dimension_numbers<[1], [0], [0], [1], [0, 0, 1, 1], [], []>} : vector<64x35xf32>, vector<35x512xf32>, vector<64x512xf32> -> vector<64x512xf32>
    %c0_9 = arith.constant 0 : index
    %c0_10 = arith.constant 0 : index
    %10 = vector.load %arg5[%c0_9, %c0_10] : memref<1x512xf32, #tpu.memory_space<vmem>>, vector<1x512xf32>
    %11 = vector.broadcast %10 : vector<1x512xf32> to vector<64x512xf32>
    %12 = arith.addf %9, %11 : vector<64x512xf32>
    %c0_11 = arith.constant 0 : index
    %c0_12 = arith.constant 0 : index
    %13 = vector.load %arg10[%c0_11, %c0_12] : memref<64x512xf32, #tpu.memory_space<vmem>>, vector<64x512xf32>
    tpu.vector_store %arg10[%c0_11, %c0_12], %12 {strides = array<i32>} : memref<64x512xf32, #tpu.memory_space<vmem>>, vector<64x512xf32>,
    %cst_13 = arith.constant 0.000000e+00 : f32
    %14 = vector.broadcast %cst_13 : f32 to vector<8x128xf32>
    %cst_14 = arith.constant 0.000000e+00 : f32
    %15 = vector.broadcast %cst_14 : f32 to vector<8x128xf32>
    %c0_i32 = arith.constant 0 : i32
    %c8_i32 = arith.constant 8 : i32
    %16 = arith.muli %c0_i32, %c8_i32 : i32
    %17 = arith.index_cast %16 : i32 to index
    %c0_15 = arith.constant 0 : index
    %18 = vector.load %arg10[%17, %c0_15] : memref<64x512xf32, #tpu.memory_space<vmem>>, vector<8x512xf32>
    %19 = arith.truncf %14 : vector<8x128xf32> to vector<8x128xbf16>
    %c0_16 = arith.constant 0 : index
    %c0_17 = arith.constant 0 : index
    %20 = vector.load %arg6[%c0_16, %c0_17] : memref<128x512xbf16, #tpu.memory_space<vmem>>, vector<128x512xbf16>
    %cst_18 = arith.constant dense<0.000000e+00> : vector<8x512xf32>
    %21 = tpu.matmul %19, %20, %cst_18 {dimension_numbers = #tpu.dot_dimension_numbers<[1], [0], [0], [1], [0, 0, 1, 1], [], []>} : vector<8x128xbf16>, vector<128x512xbf16>, vector<8x512xf32> -> vector<8x512xf32>
    %22 = arith.addf %18, %21 : vector<8x512xf32>
    %23 = vector.extract_strided_slice %22 {offsets = [0, 0], sizes = [8, 128], strides = [1, 1]} : vector<8x512xf32> to vector<8x128xf32>
    %24 = arith.negf %23 : vector<8x128xf32>
    %25 = math.exp %24 : vector<8x128xf32>
    %cst_19 = arith.constant 1.000000e+00 : f32
    %26 = vector.broadcast %cst_19 : f32 to vector<8x128xf32>
    %27 = arith.addf %26, %25 : vector<8x128xf32>
    %28 = arith.divf %26, %27 : vector<8x128xf32>
    %29 = vector.extract_strided_slice %22 {offsets = [0, 128], sizes = [8, 128], strides = [1, 1]} : vector<8x512xf32> to vector<8x128xf32>
    %30 = arith.negf %29 : vector<8x128xf32>
    %31 = math.exp %30 : vector<8x128xf32>
    %cst_20 = arith.constant 1.000000e+00 : f32
    %32 = vector.broadcast %cst_20 : f32 to vector<8x128xf32>
    %33 = arith.addf %32, %31 : vector<8x128xf32>
    %34 = arith.divf %32, %33 : vector<8x128xf32>
    %35 = vector.extract_strided_slice %22 {offsets = [0, 256], sizes = [8, 128], strides = [1, 1]} : vector<8x512xf32> to vector<8x128xf32>
    %36 = math.tanh %35 : vector<8x128xf32>
    %37 = vector.extract_strided_slice %22 {offsets = [0, 384], sizes = [8, 128], strides = [1, 1]} : vector<8x512xf32> to vector<8x128xf32>
    %38 = arith.negf %37 : vector<8x128xf32>
    %39 = math.exp %38 : vector<8x128xf32>
    %cst_21 = arith.constant 1.000000e+00 : f32
    %40 = vector.broadcast %cst_21 : f32 to vector<8x128xf32>
    %41 = arith.addf %40, %39 : vector<8x128xf32>
    %42 = arith.divf %40, %41 : vector<8x128xf32>
    %43 = arith.mulf %34, %15 : vector<8x128xf32>
    %44 = arith.mulf %28, %36 : vector<8x128xf32>
    %45 = arith.addf %43, %44 : vector<8x128xf32>
    %46 = math.tanh %45 : vector<8x128xf32>
    %47 = arith.mulf %42, %46 : vector<8x128xf32>
    %48 = arith.index_cast %16 : i32 to index
    %c0_22 = arith.constant 0 : index
    %49 = vector.load %arg11[%48, %c0_22] : memref<64x128xf32, #tpu.memory_space<vmem>>, vector<8x128xf32>
    tpu.vector_store %arg11[%48, %c0_22], %47 {strides = array<i32>} : memref<64x128xf32, #tpu.memory_space<vmem>>, vector<8x128xf32>,
    %c1_i32 = arith.constant 1 : i32
    %c8_i32_23 = arith.constant 8 : i32
    %50 = arith.muli %c1_i32, %c8_i32_23 : i32
    %51 = arith.index_cast %50 : i32 to index
    %c0_24 = arith.constant 0 : index
    %52 = vector.load %arg10[%51, %c0_24] : memref<64x512xf32, #tpu.memory_space<vmem>>, vector<8x512xf32>
    %53 = arith.truncf %47 : vector<8x128xf32> to vector<8x128xbf16>
    %c0_25 = arith.constant 0 : index
    %c0_26 = arith.constant 0 : index
    %54 = vector.load %arg6[%c0_25, %c0_26] : memref<128x512xbf16, #tpu.memory_space<vmem>>, vector<128x512xbf16>
    %cst_27 = arith.constant dense<0.000000e+00> : vector<8x512xf32>
    %55 = tpu.matmul %53, %54, %cst_27 {dimension_numbers = #tpu.dot_dimension_numbers<[1], [0], [0], [1], [0, 0, 1, 1], [], []>} : vector<8x128xbf16>, vector<128x512xbf16>, vector<8x512xf32> -> vector<8x512xf32>
    %56 = arith.addf %52, %55 : vector<8x512xf32>
    %57 = vector.extract_strided_slice %56 {offsets = [0, 0], sizes = [8, 128], strides = [1, 1]} : vector<8x512xf32> to vector<8x128xf32>
    %58 = arith.negf %57 : vector<8x128xf32>
    %59 = math.exp %58 : vector<8x128xf32>
    %cst_28 = arith.constant 1.000000e+00 : f32
    %60 = vector.broadcast %cst_28 : f32 to vector<8x128xf32>
    %61 = arith.addf %60, %59 : vector<8x128xf32>
    %62 = arith.divf %60, %61 : vector<8x128xf32>
    %63 = vector.extract_strided_slice %56 {offsets = [0, 128], sizes = [8, 128], strides = [1, 1]} : vector<8x512xf32> to vector<8x128xf32>
    %64 = arith.negf %63 : vector<8x128xf32>
    %65 = math.exp %64 : vector<8x128xf32>
    %cst_29 = arith.constant 1.000000e+00 : f32
    %66 = vector.broadcast %cst_29 : f32 to vector<8x128xf32>
    %67 = arith.addf %66, %65 : vector<8x128xf32>
    %68 = arith.divf %66, %67 : vector<8x128xf32>
    %69 = vector.extract_strided_slice %56 {offsets = [0, 256], sizes = [8, 128], strides = [1, 1]} : vector<8x512xf32> to vector<8x128xf32>
    %70 = math.tanh %69 : vector<8x128xf32>
    %71 = vector.extract_strided_slice %56 {offsets = [0, 384], sizes = [8, 128], strides = [1, 1]} : vector<8x512xf32> to vector<8x128xf32>
    %72 = arith.negf %71 : vector<8x128xf32>
    %73 = math.exp %72 : vector<8x128xf32>
    %cst_30 = arith.constant 1.000000e+00 : f32
    %74 = vector.broadcast %cst_30 : f32 to vector<8x128xf32>
    %75 = arith.addf %74, %73 : vector<8x128xf32>
    %76 = arith.divf %74, %75 : vector<8x128xf32>
    %77 = arith.mulf %68, %45 : vector<8x128xf32>
    %78 = arith.mulf %62, %70 : vector<8x128xf32>
    %79 = arith.addf %77, %78 : vector<8x128xf32>
    %80 = math.tanh %79 : vector<8x128xf32>
    %81 = arith.mulf %76, %80 : vector<8x128xf32>
    %82 = arith.index_cast %50 : i32 to index
    %c0_31 = arith.constant 0 : index
    %83 = vector.load %arg11[%82, %c0_31] : memref<64x128xf32, #tpu.memory_space<vmem>>, vector<8x128xf32>
    tpu.vector_store %arg11[%82, %c0_31], %81 {strides = array<i32>} : memref<64x128xf32, #tpu.memory_space<vmem>>, vector<8x128xf32>,
    %c2_i32 = arith.constant 2 : i32
    %c8_i32_32 = arith.constant 8 : i32
    %84 = arith.muli %c2_i32, %c8_i32_32 : i32
    %85 = arith.index_cast %84 : i32 to index
    %c0_33 = arith.constant 0 : index
    %86 = vector.load %arg10[%85, %c0_33] : memref<64x512xf32, #tpu.memory_space<vmem>>, vector<8x512xf32>
    %87 = arith.truncf %81 : vector<8x128xf32> to vector<8x128xbf16>
    %c0_34 = arith.constant 0 : index
    %c0_35 = arith.constant 0 : index
    %88 = vector.load %arg6[%c0_34, %c0_35] : memref<128x512xbf16, #tpu.memory_space<vmem>>, vector<128x512xbf16>
    %cst_36 = arith.constant dense<0.000000e+00> : vector<8x512xf32>
    %89 = tpu.matmul %87, %88, %cst_36 {dimension_numbers = #tpu.dot_dimension_numbers<[1], [0], [0], [1], [0, 0, 1, 1], [], []>} : vector<8x128xbf16>, vector<128x512xbf16>, vector<8x512xf32> -> vector<8x512xf32>
    %90 = arith.addf %86, %89 : vector<8x512xf32>
    %91 = vector.extract_strided_slice %90 {offsets = [0, 0], sizes = [8, 128], strides = [1, 1]} : vector<8x512xf32> to vector<8x128xf32>
    %92 = arith.negf %91 : vector<8x128xf32>
    %93 = math.exp %92 : vector<8x128xf32>
    %cst_37 = arith.constant 1.000000e+00 : f32
    %94 = vector.broadcast %cst_37 : f32 to vector<8x128xf32>
    %95 = arith.addf %94, %93 : vector<8x128xf32>
    %96 = arith.divf %94, %95 : vector<8x128xf32>
    %97 = vector.extract_strided_slice %90 {offsets = [0, 128], sizes = [8, 128], strides = [1, 1]} : vector<8x512xf32> to vector<8x128xf32>
    %98 = arith.negf %97 : vector<8x128xf32>
    %99 = math.exp %98 : vector<8x128xf32>
    %cst_38 = arith.constant 1.000000e+00 : f32
    %100 = vector.broadcast %cst_38 : f32 to vector<8x128xf32>
    %101 = arith.addf %100, %99 : vector<8x128xf32>
    %102 = arith.divf %100, %101 : vector<8x128xf32>
    %103 = vector.extract_strided_slice %90 {offsets = [0, 256], sizes = [8, 128], strides = [1, 1]} : vector<8x512xf32> to vector<8x128xf32>
    %104 = math.tanh %103 : vector<8x128xf32>
    %105 = vector.extract_strided_slice %90 {offsets = [0, 384], sizes = [8, 128], strides = [1, 1]} : vector<8x512xf32> to vector<8x128xf32>
    %106 = arith.negf %105 : vector<8x128xf32>
    %107 = math.exp %106 : vector<8x128xf32>
    %cst_39 = arith.constant 1.000000e+00 : f32
    %108 = vector.broadcast %cst_39 : f32 to vector<8x128xf32>
    %109 = arith.addf %108, %107 : vector<8x128xf32>
    %110 = arith.divf %108, %109 : vector<8x128xf32>
    %111 = arith.mulf %102, %79 : vector<8x128xf32>
    %112 = arith.mulf %96, %104 : vector<8x128xf32>
    %113 = arith.addf %111, %112 : vector<8x128xf32>
    %114 = math.tanh %113 : vector<8x128xf32>
    %115 = arith.mulf %110, %114 : vector<8x128xf32>
    %116 = arith.index_cast %84 : i32 to index
    %c0_40 = arith.constant 0 : index
    %117 = vector.load %arg11[%116, %c0_40] : memref<64x128xf32, #tpu.memory_space<vmem>>, vector<8x128xf32>
    tpu.vector_store %arg11[%116, %c0_40], %115 {strides = array<i32>} : memref<64x128xf32, #tpu.memory_space<vmem>>, vector<8x128xf32>,
    %c3_i32 = arith.constant 3 : i32
    %c8_i32_41 = arith.constant 8 : i32
    %118 = arith.muli %c3_i32, %c8_i32_41 : i32
    %119 = arith.index_cast %118 : i32 to index
    %c0_42 = arith.constant 0 : index
    %120 = vector.load %arg10[%119, %c0_42] : memref<64x512xf32, #tpu.memory_space<vmem>>, vector<8x512xf32>
    %121 = arith.truncf %115 : vector<8x128xf32> to vector<8x128xbf16>
    %c0_43 = arith.constant 0 : index
    %c0_44 = arith.constant 0 : index
    %122 = vector.load %arg6[%c0_43, %c0_44] : memref<128x512xbf16, #tpu.memory_space<vmem>>, vector<128x512xbf16>
    %cst_45 = arith.constant dense<0.000000e+00> : vector<8x512xf32>
    %123 = tpu.matmul %121, %122, %cst_45 {dimension_numbers = #tpu.dot_dimension_numbers<[1], [0], [0], [1], [0, 0, 1, 1], [], []>} : vector<8x128xbf16>, vector<128x512xbf16>, vector<8x512xf32> -> vector<8x512xf32>
    %124 = arith.addf %120, %123 : vector<8x512xf32>
    %125 = vector.extract_strided_slice %124 {offsets = [0, 0], sizes = [8, 128], strides = [1, 1]} : vector<8x512xf32> to vector<8x128xf32>
    %126 = arith.negf %125 : vector<8x128xf32>
    %127 = math.exp %126 : vector<8x128xf32>
    %cst_46 = arith.constant 1.000000e+00 : f32
    %128 = vector.broadcast %cst_46 : f32 to vector<8x128xf32>
    %129 = arith.addf %128, %127 : vector<8x128xf32>
    %130 = arith.divf %128, %129 : vector<8x128xf32>
    %131 = vector.extract_strided_slice %124 {offsets = [0, 128], sizes = [8, 128], strides = [1, 1]} : vector<8x512xf32> to vector<8x128xf32>
    %132 = arith.negf %131 : vector<8x128xf32>
    %133 = math.exp %132 : vector<8x128xf32>
    %cst_47 = arith.constant 1.000000e+00 : f32
    %134 = vector.broadcast %cst_47 : f32 to vector<8x128xf32>
    %135 = arith.addf %134, %133 : vector<8x128xf32>
    %136 = arith.divf %134, %135 : vector<8x128xf32>
    %137 = vector.extract_strided_slice %124 {offsets = [0, 256], sizes = [8, 128], strides = [1, 1]} : vector<8x512xf32> to vector<8x128xf32>
    %138 = math.tanh %137 : vector<8x128xf32>
    %139 = vector.extract_strided_slice %124 {offsets = [0, 384], sizes = [8, 128], strides = [1, 1]} : vector<8x512xf32> to vector<8x128xf32>
    %140 = arith.negf %139 : vector<8x128xf32>
    %141 = math.exp %140 : vector<8x128xf32>
    %cst_48 = arith.constant 1.000000e+00 : f32
    %142 = vector.broadcast %cst_48 : f32 to vector<8x128xf32>
    %143 = arith.addf %142, %141 : vector<8x128xf32>
    %144 = arith.divf %142, %143 : vector<8x128xf32>
    %145 = arith.mulf %136, %113 : vector<8x128xf32>
    %146 = arith.mulf %130, %138 : vector<8x128xf32>
    %147 = arith.addf %145, %146 : vector<8x128xf32>
    %148 = math.tanh %147 : vector<8x128xf32>
    %149 = arith.mulf %144, %148 : vector<8x128xf32>
    %150 = arith.index_cast %118 : i32 to index
    %c0_49 = arith.constant 0 : index
    %151 = vector.load %arg11[%150, %c0_49] : memref<64x128xf32, #tpu.memory_space<vmem>>, vector<8x128xf32>
    tpu.vector_store %arg11[%150, %c0_49], %149 {strides = array<i32>} : memref<64x128xf32, #tpu.memory_space<vmem>>, vector<8x128xf32>,
    %c4_i32 = arith.constant 4 : i32
    %c8_i32_50 = arith.constant 8 : i32
    %152 = arith.muli %c4_i32, %c8_i32_50 : i32
    %153 = arith.index_cast %152 : i32 to index
    %c0_51 = arith.constant 0 : index
    %154 = vector.load %arg10[%153, %c0_51] : memref<64x512xf32, #tpu.memory_space<vmem>>, vector<8x512xf32>
    %155 = arith.truncf %149 : vector<8x128xf32> to vector<8x128xbf16>
    %c0_52 = arith.constant 0 : index
    %c0_53 = arith.constant 0 : index
    %156 = vector.load %arg6[%c0_52, %c0_53] : memref<128x512xbf16, #tpu.memory_space<vmem>>, vector<128x512xbf16>
    %cst_54 = arith.constant dense<0.000000e+00> : vector<8x512xf32>
    %157 = tpu.matmul %155, %156, %cst_54 {dimension_numbers = #tpu.dot_dimension_numbers<[1], [0], [0], [1], [0, 0, 1, 1], [], []>} : vector<8x128xbf16>, vector<128x512xbf16>, vector<8x512xf32> -> vector<8x512xf32>
    %158 = arith.addf %154, %157 : vector<8x512xf32>
    %159 = vector.extract_strided_slice %158 {offsets = [0, 0], sizes = [8, 128], strides = [1, 1]} : vector<8x512xf32> to vector<8x128xf32>
    %160 = arith.negf %159 : vector<8x128xf32>
    %161 = math.exp %160 : vector<8x128xf32>
    %cst_55 = arith.constant 1.000000e+00 : f32
    %162 = vector.broadcast %cst_55 : f32 to vector<8x128xf32>
    %163 = arith.addf %162, %161 : vector<8x128xf32>
    %164 = arith.divf %162, %163 : vector<8x128xf32>
    %165 = vector.extract_strided_slice %158 {offsets = [0, 128], sizes = [8, 128], strides = [1, 1]} : vector<8x512xf32> to vector<8x128xf32>
    %166 = arith.negf %165 : vector<8x128xf32>
    %167 = math.exp %166 : vector<8x128xf32>
    %cst_56 = arith.constant 1.000000e+00 : f32
    %168 = vector.broadcast %cst_56 : f32 to vector<8x128xf32>
    %169 = arith.addf %168, %167 : vector<8x128xf32>
    %170 = arith.divf %168, %169 : vector<8x128xf32>
    %171 = vector.extract_strided_slice %158 {offsets = [0, 256], sizes = [8, 128], strides = [1, 1]} : vector<8x512xf32> to vector<8x128xf32>
    %172 = math.tanh %171 : vector<8x128xf32>
    %173 = vector.extract_strided_slice %158 {offsets = [0, 384], sizes = [8, 128], strides = [1, 1]} : vector<8x512xf32> to vector<8x128xf32>
    %174 = arith.negf %173 : vector<8x128xf32>
    %175 = math.exp %174 : vector<8x128xf32>
    %cst_57 = arith.constant 1.000000e+00 : f32
    %176 = vector.broadcast %cst_57 : f32 to vector<8x128xf32>
    %177 = arith.addf %176, %175 : vector<8x128xf32>
    %178 = arith.divf %176, %177 : vector<8x128xf32>
    %179 = arith.mulf %170, %147 : vector<8x128xf32>
    %180 = arith.mulf %164, %172 : vector<8x128xf32>
    %181 = arith.addf %179, %180 : vector<8x128xf32>
    %182 = math.tanh %181 : vector<8x128xf32>
    %183 = arith.mulf %178, %182 : vector<8x128xf32>
    %184 = arith.index_cast %152 : i32 to index
    %c0_58 = arith.constant 0 : index
    %185 = vector.load %arg11[%184, %c0_58] : memref<64x128xf32, #tpu.memory_space<vmem>>, vector<8x128xf32>
    tpu.vector_store %arg11[%184, %c0_58], %183 {strides = array<i32>} : memref<64x128xf32, #tpu.memory_space<vmem>>, vector<8x128xf32>,
    %c5_i32 = arith.constant 5 : i32
    %c8_i32_59 = arith.constant 8 : i32
    %186 = arith.muli %c5_i32, %c8_i32_59 : i32
    %187 = arith.index_cast %186 : i32 to index
    %c0_60 = arith.constant 0 : index
    %188 = vector.load %arg10[%187, %c0_60] : memref<64x512xf32, #tpu.memory_space<vmem>>, vector<8x512xf32>
    %189 = arith.truncf %183 : vector<8x128xf32> to vector<8x128xbf16>
    %c0_61 = arith.constant 0 : index
    %c0_62 = arith.constant 0 : index
    %190 = vector.load %arg6[%c0_61, %c0_62] : memref<128x512xbf16, #tpu.memory_space<vmem>>, vector<128x512xbf16>
    %cst_63 = arith.constant dense<0.000000e+00> : vector<8x512xf32>
    %191 = tpu.matmul %189, %190, %cst_63 {dimension_numbers = #tpu.dot_dimension_numbers<[1], [0], [0], [1], [0, 0, 1, 1], [], []>} : vector<8x128xbf16>, vector<128x512xbf16>, vector<8x512xf32> -> vector<8x512xf32>
    %192 = arith.addf %188, %191 : vector<8x512xf32>
    %193 = vector.extract_strided_slice %192 {offsets = [0, 0], sizes = [8, 128], strides = [1, 1]} : vector<8x512xf32> to vector<8x128xf32>
    %194 = arith.negf %193 : vector<8x128xf32>
    %195 = math.exp %194 : vector<8x128xf32>
    %cst_64 = arith.constant 1.000000e+00 : f32
    %196 = vector.broadcast %cst_64 : f32 to vector<8x128xf32>
    %197 = arith.addf %196, %195 : vector<8x128xf32>
    %198 = arith.divf %196, %197 : vector<8x128xf32>
    %199 = vector.extract_strided_slice %192 {offsets = [0, 128], sizes = [8, 128], strides = [1, 1]} : vector<8x512xf32> to vector<8x128xf32>
    %200 = arith.negf %199 : vector<8x128xf32>
    %201 = math.exp %200 : vector<8x128xf32>
    %cst_65 = arith.constant 1.000000e+00 : f32
    %202 = vector.broadcast %cst_65 : f32 to vector<8x128xf32>
    %203 = arith.addf %202, %201 : vector<8x128xf32>
    %204 = arith.divf %202, %203 : vector<8x128xf32>
    %205 = vector.extract_strided_slice %192 {offsets = [0, 256], sizes = [8, 128], strides = [1, 1]} : vector<8x512xf32> to vector<8x128xf32>
    %206 = math.tanh %205 : vector<8x128xf32>
    %207 = vector.extract_strided_slice %192 {offsets = [0, 384], sizes = [8, 128], strides = [1, 1]} : vector<8x512xf32> to vector<8x128xf32>
    %208 = arith.negf %207 : vector<8x128xf32>
    %209 = math.exp %208 : vector<8x128xf32>
    %cst_66 = arith.constant 1.000000e+00 : f32
    %210 = vector.broadcast %cst_66 : f32 to vector<8x128xf32>
    %211 = arith.addf %210, %209 : vector<8x128xf32>
    %212 = arith.divf %210, %211 : vector<8x128xf32>
    %213 = arith.mulf %204, %181 : vector<8x128xf32>
    %214 = arith.mulf %198, %206 : vector<8x128xf32>
    %215 = arith.addf %213, %214 : vector<8x128xf32>
    %216 = math.tanh %215 : vector<8x128xf32>
    %217 = arith.mulf %212, %216 : vector<8x128xf32>
    %218 = arith.index_cast %186 : i32 to index
    %c0_67 = arith.constant 0 : index
    %219 = vector.load %arg11[%218, %c0_67] : memref<64x128xf32, #tpu.memory_space<vmem>>, vector<8x128xf32>
    tpu.vector_store %arg11[%218, %c0_67], %217 {strides = array<i32>} : memref<64x128xf32, #tpu.memory_space<vmem>>, vector<8x128xf32>,
    %c6_i32 = arith.constant 6 : i32
    %c8_i32_68 = arith.constant 8 : i32
    %220 = arith.muli %c6_i32, %c8_i32_68 : i32
    %221 = arith.index_cast %220 : i32 to index
    %c0_69 = arith.constant 0 : index
    %222 = vector.load %arg10[%221, %c0_69] : memref<64x512xf32, #tpu.memory_space<vmem>>, vector<8x512xf32>
    %223 = arith.truncf %217 : vector<8x128xf32> to vector<8x128xbf16>
    %c0_70 = arith.constant 0 : index
    %c0_71 = arith.constant 0 : index
    %224 = vector.load %arg6[%c0_70, %c0_71] : memref<128x512xbf16, #tpu.memory_space<vmem>>, vector<128x512xbf16>
    %cst_72 = arith.constant dense<0.000000e+00> : vector<8x512xf32>
    %225 = tpu.matmul %223, %224, %cst_72 {dimension_numbers = #tpu.dot_dimension_numbers<[1], [0], [0], [1], [0, 0, 1, 1], [], []>} : vector<8x128xbf16>, vector<128x512xbf16>, vector<8x512xf32> -> vector<8x512xf32>
    %226 = arith.addf %222, %225 : vector<8x512xf32>
    %227 = vector.extract_strided_slice %226 {offsets = [0, 0], sizes = [8, 128], strides = [1, 1]} : vector<8x512xf32> to vector<8x128xf32>
    %228 = arith.negf %227 : vector<8x128xf32>
    %229 = math.exp %228 : vector<8x128xf32>
    %cst_73 = arith.constant 1.000000e+00 : f32
    %230 = vector.broadcast %cst_73 : f32 to vector<8x128xf32>
    %231 = arith.addf %230, %229 : vector<8x128xf32>
    %232 = arith.divf %230, %231 : vector<8x128xf32>
    %233 = vector.extract_strided_slice %226 {offsets = [0, 128], sizes = [8, 128], strides = [1, 1]} : vector<8x512xf32> to vector<8x128xf32>
    %234 = arith.negf %233 : vector<8x128xf32>
    %235 = math.exp %234 : vector<8x128xf32>
    %cst_74 = arith.constant 1.000000e+00 : f32
    %236 = vector.broadcast %cst_74 : f32 to vector<8x128xf32>
    %237 = arith.addf %236, %235 : vector<8x128xf32>
    %238 = arith.divf %236, %237 : vector<8x128xf32>
    %239 = vector.extract_strided_slice %226 {offsets = [0, 256], sizes = [8, 128], strides = [1, 1]} : vector<8x512xf32> to vector<8x128xf32>
    %240 = math.tanh %239 : vector<8x128xf32>
    %241 = vector.extract_strided_slice %226 {offsets = [0, 384], sizes = [8, 128], strides = [1, 1]} : vector<8x512xf32> to vector<8x128xf32>
    %242 = arith.negf %241 : vector<8x128xf32>
    %243 = math.exp %242 : vector<8x128xf32>
    %cst_75 = arith.constant 1.000000e+00 : f32
    %244 = vector.broadcast %cst_75 : f32 to vector<8x128xf32>
    %245 = arith.addf %244, %243 : vector<8x128xf32>
    %246 = arith.divf %244, %245 : vector<8x128xf32>
    %247 = arith.mulf %238, %215 : vector<8x128xf32>
    %248 = arith.mulf %232, %240 : vector<8x128xf32>
    %249 = arith.addf %247, %248 : vector<8x128xf32>
    %250 = math.tanh %249 : vector<8x128xf32>
    %251 = arith.mulf %246, %250 : vector<8x128xf32>
    %252 = arith.index_cast %220 : i32 to index
    %c0_76 = arith.constant 0 : index
    %253 = vector.load %arg11[%252, %c0_76] : memref<64x128xf32, #tpu.memory_space<vmem>>, vector<8x128xf32>
    tpu.vector_store %arg11[%252, %c0_76], %251 {strides = array<i32>} : memref<64x128xf32, #tpu.memory_space<vmem>>, vector<8x128xf32>,
    %c7_i32 = arith.constant 7 : i32
    %c8_i32_77 = arith.constant 8 : i32
    %254 = arith.muli %c7_i32, %c8_i32_77 : i32
    %255 = arith.index_cast %254 : i32 to index
    %c0_78 = arith.constant 0 : index
    %256 = vector.load %arg10[%255, %c0_78] : memref<64x512xf32, #tpu.memory_space<vmem>>, vector<8x512xf32>
    %257 = arith.truncf %251 : vector<8x128xf32> to vector<8x128xbf16>
    %c0_79 = arith.constant 0 : index
    %c0_80 = arith.constant 0 : index
    %258 = vector.load %arg6[%c0_79, %c0_80] : memref<128x512xbf16, #tpu.memory_space<vmem>>, vector<128x512xbf16>
    %cst_81 = arith.constant dense<0.000000e+00> : vector<8x512xf32>
    %259 = tpu.matmul %257, %258, %cst_81 {dimension_numbers = #tpu.dot_dimension_numbers<[1], [0], [0], [1], [0, 0, 1, 1], [], []>} : vector<8x128xbf16>, vector<128x512xbf16>, vector<8x512xf32> -> vector<8x512xf32>
    %260 = arith.addf %256, %259 : vector<8x512xf32>
    %261 = vector.extract_strided_slice %260 {offsets = [0, 0], sizes = [8, 128], strides = [1, 1]} : vector<8x512xf32> to vector<8x128xf32>
    %262 = arith.negf %261 : vector<8x128xf32>
    %263 = math.exp %262 : vector<8x128xf32>
    %cst_82 = arith.constant 1.000000e+00 : f32
    %264 = vector.broadcast %cst_82 : f32 to vector<8x128xf32>
    %265 = arith.addf %264, %263 : vector<8x128xf32>
    %266 = arith.divf %264, %265 : vector<8x128xf32>
    %267 = vector.extract_strided_slice %260 {offsets = [0, 128], sizes = [8, 128], strides = [1, 1]} : vector<8x512xf32> to vector<8x128xf32>
    %268 = arith.negf %267 : vector<8x128xf32>
    %269 = math.exp %268 : vector<8x128xf32>
    %cst_83 = arith.constant 1.000000e+00 : f32
    %270 = vector.broadcast %cst_83 : f32 to vector<8x128xf32>
    %271 = arith.addf %270, %269 : vector<8x128xf32>
    %272 = arith.divf %270, %271 : vector<8x128xf32>
    %273 = vector.extract_strided_slice %260 {offsets = [0, 256], sizes = [8, 128], strides = [1, 1]} : vector<8x512xf32> to vector<8x128xf32>
    %274 = math.tanh %273 : vector<8x128xf32>
    %275 = vector.extract_strided_slice %260 {offsets = [0, 384], sizes = [8, 128], strides = [1, 1]} : vector<8x512xf32> to vector<8x128xf32>
    %276 = arith.negf %275 : vector<8x128xf32>
    %277 = math.exp %276 : vector<8x128xf32>
    %cst_84 = arith.constant 1.000000e+00 : f32
    %278 = vector.broadcast %cst_84 : f32 to vector<8x128xf32>
    %279 = arith.addf %278, %277 : vector<8x128xf32>
    %280 = arith.divf %278, %279 : vector<8x128xf32>
    %281 = arith.mulf %272, %249 : vector<8x128xf32>
    %282 = arith.mulf %266, %274 : vector<8x128xf32>
    %283 = arith.addf %281, %282 : vector<8x128xf32>
    %284 = math.tanh %283 : vector<8x128xf32>
    %285 = arith.mulf %280, %284 : vector<8x128xf32>
    %286 = arith.index_cast %254 : i32 to index
    %c0_85 = arith.constant 0 : index
    %287 = vector.load %arg11[%286, %c0_85] : memref<64x128xf32, #tpu.memory_space<vmem>>, vector<8x128xf32>
    tpu.vector_store %arg11[%286, %c0_85], %285 {strides = array<i32>} : memref<64x128xf32, #tpu.memory_space<vmem>>, vector<8x128xf32>,
    %c8_i32_86 = arith.constant 8 : i32
    %c0_87 = arith.constant 0 : index
    %c0_88 = arith.constant 0 : index
    %288 = vector.load %arg11[%c0_87, %c0_88] : memref<64x128xf32, #tpu.memory_space<vmem>>, vector<64x128xf32>
    %cst_89 = arith.constant 0.000000e+00 : f32
    %289 = vector.broadcast %cst_89 : f32 to vector<64x128xf32>
    %290 = arith.maximumf %288, %289 : vector<64x128xf32>
    %c0_90 = arith.constant 0 : index
    %c0_91 = arith.constant 0 : index
    %291 = vector.load %arg7[%c0_90, %c0_91] : memref<128x128xf32, #tpu.memory_space<vmem>>, vector<128x128xf32>
    %cst_92 = arith.constant dense<0.000000e+00> : vector<64x128xf32>
    %292 = tpu.matmul %290, %291, %cst_92 {dimension_numbers = #tpu.dot_dimension_numbers<[1], [0], [0], [1], [0, 0, 1, 1], [], []>} : vector<64x128xf32>, vector<128x128xf32>, vector<64x128xf32> -> vector<64x128xf32>
    %c0_93 = arith.constant 0 : index
    %c0_94 = arith.constant 0 : index
    %293 = vector.load %arg8[%c0_93, %c0_94] : memref<1x128xf32, #tpu.memory_space<vmem>>, vector<1x128xf32>
    %294 = vector.broadcast %293 : vector<1x128xf32> to vector<64x128xf32>
    %295 = arith.addf %292, %294 : vector<64x128xf32>
    %296 = math.tanh %295 : vector<64x128xf32>
    %c0_95 = arith.constant 0 : index
    %c0_96 = arith.constant 0 : index
    %297 = vector.load %arg9[%c0_95, %c0_96] : memref<64x128xf32, #tpu.memory_space<vmem>>, vector<64x128xf32>
    tpu.vector_store %arg9[%c0_95, %c0_96], %296 {strides = array<i32>} : memref<64x128xf32, #tpu.memory_space<vmem>>, vector<64x128xf32>,
    return
  }
  func.func @transform_0(%arg0: i32) -> (i32, i32) {
    %c0_i32 = arith.constant 0 : i32
    %c0_i32_0 = arith.constant 0 : i32
    %c0_i32_1 = arith.constant 0 : i32
    return %c0_i32, %c0_i32_0 : i32, i32
  }
  func.func @transform_1(%arg0: i32) -> (i32, i32) {
    %c0_i32 = arith.constant 0 : i32
    %c0_i32_0 = arith.constant 0 : i32
    %c0_i32_1 = arith.constant 0 : i32
    return %c0_i32, %c0_i32_0 : i32, i32
  }
  func.func @transform_2(%arg0: i32) -> (i32, i32) {
    %c0_i32 = arith.constant 0 : i32
    %c0_i32_0 = arith.constant 0 : i32
    %c0_i32_1 = arith.constant 0 : i32
    return %c0_i32, %c0_i32_0 : i32, i32
  }
  func.func @transform_3(%arg0: i32) -> (i32, i32) {
    %c0_i32 = arith.constant 0 : i32
    %c0_i32_0 = arith.constant 0 : i32
    %c0_i32_1 = arith.constant 0 : i32
    return %c0_i32, %c0_i32_0 : i32, i32
  }
  func.func @transform_4(%arg0: i32) -> (i32, i32) {
    %c0_i32 = arith.constant 0 : i32
    %c0_i32_0 = arith.constant 0 : i32
    %c0_i32_1 = arith.constant 0 : i32
    return %c0_i32, %c0_i32_0 : i32, i32
  }
  func.func @transform_5(%arg0: i32) -> (i32, i32) {
    %c0_i32 = arith.constant 0 : i32
    %c0_i32_0 = arith.constant 0 : i32
    %c0_i32_1 = arith.constant 0 : i32
    return %c0_i32, %c0_i32_0 : i32, i32
  }
  func.func @transform_6(%arg0: i32) -> (i32, i32) {
    %c0_i32 = arith.constant 0 : i32
    %c0_i32_0 = arith.constant 0 : i32
    %c0_i32_1 = arith.constant 0 : i32
    return %c0_i32, %c0_i32_0 : i32, i32
  }
  func.func @transform_7(%arg0: i32) -> (i32, i32) {
    %c0_i32 = arith.constant 0 : i32
    %c0_i32_0 = arith.constant 0 : i32
    %c0_i32_1 = arith.constant 0 : i32
    return %c0_i32, %c0_i32_0 : i32, i32
  }
  func.func @transform_8(%arg0: i32) -> (i32, i32) {
    %c0_i32 = arith.constant 0 : i32
    %c0_i32_0 = arith.constant 0 : i32
    %c0_i32_1 = arith.constant 0 : i32
    return %c0_i32, %c0_i32_0 : i32, i32
  }
}

</mosaic_0001>

<llo_original>
// kernel: seekndestroy_forward.1
$region0: #{seekndestroy_forward.1}
  #allocation0 [shape = 'u32[]', space=smem, size = 0x4, offset = 0x4, fixed_abs, tag = 'smem constant byte address 0x4 - core index']
  #allocation1 [shape = 'u32[144,128]{1,0:T(1,128)}', space=vmem, size = 0x12000, scoped, tag = 'internal scratch']
  #allocation2 [shape = 'f32[64,512]{1,0:T(8,128)}', space=vmem, size = 0x20000, scoped, tag = 'scratch operand']
  #allocation3 [shape = 'f32[64,128]{1,0:T(8,128)}', space=vmem, size = 0x8000, scoped, tag = 'scratch operand']
  %s0 = inlined_call_operand.vmem [shape: f32[64,35], index: 0, kind: input, shape index: {}]
  %s1 = inlined_call_operand.vmem [shape: f32[35,35], index: 1, kind: input, shape index: {}]
  %s2 = inlined_call_operand.vmem [shape: f32[1,35], index: 2, kind: input, shape index: {}]
  %s3 = inlined_call_operand.hbm [shape: f32[35,512], index: 3, kind: input, shape index: {}]
  %s4 = inlined_call_operand.vmem [shape: f32[1,512], index: 4, kind: input, shape index: {}]
  %s5 = inlined_call_operand.hbm [shape: bf16[128,512], index: 5, kind: input, shape index: {}]
  %s6 = inlined_call_operand.hbm [shape: f32[128,128], index: 6, kind: input, shape index: {}]
  %s7 = inlined_call_operand.vmem [shape: f32[1,128], index: 7, kind: input, shape index: {}]
  %s8 = inlined_call_operand.vmem [shape: f32[64,128], index: 8, kind: output, shape index: {}]
  %s9 = sld [smem:[#allocation0]]
  $region54: #{seekndestroy_forward.1} parent=0
    _
  %s11 = ssub.s32 1, %s9
  %s12 = scalar_select 0, %s11, %s9
  $region1: #{seekndestroy_forward.1} parent=0
    #allocation4 [shape = 'u8[81920]{0}', space=vmem, size = 0x14000, scoped, tag = 'input window, operand 3, single buffered']
    #allocation5 [shape = 's32[1]{0}', space=sflag, size = 0x4, scoped, tag = 'scoped memory for seekndestroy_forward.1']
    #allocation6 [shape = 'u8[131072]{0}', space=vmem, size = 0x20000, scoped, tag = 'input window, operand 5, single buffered']
    #allocation7 [shape = 's32[1]{0}', space=sflag, size = 0x4, scoped, tag = 'scoped memory for seekndestroy_forward.1']
    #allocation8 [shape = 'u8[65536]{0}', space=vmem, size = 0x10000, scoped, tag = 'input window, operand 6, single buffered']
    %13 = vsyncpa [#allocation5], 0
    %14 = vsyncpa [#allocation7], 0
    // Predicated region
    $region2: #{seekndestroy_forward.1} parent=1 // pred_check
      _
    $region3: #{seekndestroy_forward.1} parent=1 // pred_check_branch
      %16 = sbr.rel (0) target = $region5
    $region4: #{seekndestroy_forward.1} parent=1 // pred_region
      _
    $region5: #{seekndestroy_forward.1} parent=1 // pred_fallthru
      _
    // Predicated region
    $region6: #{seekndestroy_forward.1} parent=1 // pred_check
      _
    $region7: #{seekndestroy_forward.1} parent=1 // pred_check_branch
      %18 = sbr.rel (0) target = $region9
    $region8: #{seekndestroy_forward.1} parent=1 // pred_region
      _
    $region9: #{seekndestroy_forward.1} parent=1 // pred_fallthru
      _
    // Predicated region
    $region10: #{seekndestroy_forward.1} parent=1 // pred_check
      _
    $region11: #{seekndestroy_forward.1} parent=1 // pred_check_branch
      %20 = sbr.rel (0) target = $region13
    $region12: #{seekndestroy_forward.1} parent=1 // pred_region
      _
    $region13: #{seekndestroy_forward.1} parent=1 // pred_fallthru
      _
    // Predicated region
    $region14: #{seekndestroy_forward.1} parent=1 // pred_check
      _
    $region15: #{seekndestroy_forward.1} parent=1 // pred_check_branch
      %22 = sbr.rel (0) target = $region17
    $region16: #{seekndestroy_forward.1} parent=1 // pred_region
      %s24 = ssub.s32 2560, 2560
      %25 = vsyncadd [#allocation5], %s24
      %s26 = sshll.u32 [#allocation4], 4
      %s27 = int_to_ptr.vmem [resolvable:$true] %s26
      %32 = dma.hbm_to_vmem [thread:$0]  %s3, 2560, %s27, [#allocation5], 512, 512, 32
    $region17: #{seekndestroy_forward.1} parent=1 // pred_fallthru
      _
    // Predicated region
    $region18: #{seekndestroy_forward.1} parent=1 // pred_check
      _
    $region19: #{seekndestroy_forward.1} parent=1 // pred_check_branch
      %34 = sbr.rel (0) target = $region21
    $region20: #{seekndestroy_forward.1} parent=1 // pred_region
      _
    $region21: #{seekndestroy_forward.1} parent=1 // pred_fallthru
      _
    // Predicated region
    $region22: #{seekndestroy_forward.1} parent=1 // pred_check
      _
    $region23: #{seekndestroy_forward.1} parent=1 // pred_check_branch
      %36 = sbr.rel (0) target = $region25
    $region24: #{seekndestroy_forward.1} parent=1 // pred_region
      %s38 = ssub.s32 4096, 4096
      %39 = vsyncadd [#allocation7], %s38
      %s40 = sshll.u32 [#allocation6], 4
      %s41 = int_to_ptr.vmem [resolvable:$true] %s40
      %46 = dma.hbm_to_vmem [thread:$0]  %s5, 4096, %s41, [#allocation7], 256, 256, 16
    $region25: #{seekndestroy_forward.1} parent=1 // pred_fallthru
      _
    // Predicated region
    $region26: #{seekndestroy_forward.1} parent=1 // pred_check
      _
    $region27: #{seekndestroy_forward.1} parent=1 // pred_check_branch
      %48 = sbr.rel (0) target = $region29
    $region28: #{seekndestroy_forward.1} parent=1 // pred_region
      %s50 = ssub.s32 2048, 2048
      %51 = vsyncadd [#allocation7], %s50
      %s52 = sshll.u32 [#allocation8], 4
      %s53 = int_to_ptr.vmem [resolvable:$true] %s52
      %58 = dma.hbm_to_vmem [thread:$0]  %s6, 2048, %s53, [#allocation7], 128, 128, 8
    $region29: #{seekndestroy_forward.1} parent=1 // pred_fallthru
      _
    // Predicated region
    $region30: #{seekndestroy_forward.1} parent=1 // pred_check
      _
    $region31: #{seekndestroy_forward.1} parent=1 // pred_check_branch
      %60 = sbr.rel (0) target = $region33
    $region32: #{seekndestroy_forward.1} parent=1 // pred_region
      _
    $region33: #{seekndestroy_forward.1} parent=1 // pred_fallthru
      _
    // Predicated region
    $region34: #{seekndestroy_forward.1} parent=1 // pred_check
      _
    $region35: #{seekndestroy_forward.1} parent=1 // pred_check_branch
      %62 = sbr.rel (0) target = $region37
    $region36: #{seekndestroy_forward.1} parent=1 // pred_region
      %63 = dma.done [#allocation5], 2560
    $region37: #{seekndestroy_forward.1} parent=1 // pred_fallthru
      _
    // Predicated region
    $region38: #{seekndestroy_forward.1} parent=1 // pred_check
      _
    $region39: #{seekndestroy_forward.1} parent=1 // pred_check_branch
      %65 = sbr.rel (0) target = $region41
    $region40: #{seekndestroy_forward.1} parent=1 // pred_region
      %66 = dma.done [#allocation7], 4096
    $region41: #{seekndestroy_forward.1} parent=1 // pred_fallthru
      _
    // Predicated region
    $region42: #{seekndestroy_forward.1} parent=1 // pred_check
      _
    $region43: #{seekndestroy_forward.1} parent=1 // pred_check_branch
      %68 = sbr.rel (0) target = $region45
    $region44: #{seekndestroy_forward.1} parent=1 // pred_region
      %69 = dma.done [#allocation7], 2048
    $region45: #{seekndestroy_forward.1} parent=1 // pred_fallthru
      _
    %v71 = vld [vmem:[%s0] sm:$0xff]
    %v72 = vld [vmem:[%s0 + $0x8] sm:$0xff]
    %v73 = vld [vmem:[%s0 + $0x10] sm:$0xff]
    %v74 = vld [vmem:[%s0 + $0x18] sm:$0xff]
    %v75 = vld [vmem:[%s0 + $0x20] sm:$0xff]
    %v76 = vld [vmem:[%s0 + $0x28] sm:$0xff]
    %v77 = vld [vmem:[%s0 + $0x30] sm:$0xff]
    %v78 = vld [vmem:[%s0 + $0x38] sm:$0xff]
    %v79 = vld [vmem:[%s1] sm:$0xff]
    %v80 = vld [vmem:[%s1 + $0x8] sm:$0xff]
    %v81 = vld [vmem:[%s1 + $0x10] sm:$0xff]
    %v82 = vld [vmem:[%s1 + $0x18] sm:$0xff]
    %v83 = vld [vmem:[%s1 + $0x20] sm:$0x7]
    %v84 = vld [vmem:[%s2] sm:$0x1]
    %v86 = vlaneseq
    %v87 = vshrl.u32 %v86, 7
    %v88 = vsub.s32 0, %v87
    %v89 = vrot.slane %v84, %v88
    %vm91 = vcmask 285696
    %v93 = vsel %vm91, %v71, 0
    %v96 = vsel %vm91, %v72, 0
    %v99 = vsel %vm91, %v73, 0
    %v102 = vsel %vm91, %v74, 0
    %v105 = vsel %vm91, %v75, 0
    %v108 = vsel %vm91, %v76, 0
    %v111 = vsel %vm91, %v77, 0
    %v114 = vsel %vm91, %v78, 0
    %vm116 = vcmask 1042432
    %v118 = vsel %vm116, %v83, 0
    %120 = vmatprep.subr.mxu0 0.0
    %121 = vmatpush1.msra.mxu0 %v79
    %122 = vmatprep.subr.mxu0 0.0
    %123 = vmatpush1.msra.mxu0 %v80
    %124 = vmatprep.subr.mxu0 0.0
    %125 = vmatpush1.msra.mxu0 %v81
    %126 = vmatprep.subr.mxu0 0.0
    %127 = vmatpush1.msra.mxu0 %v82
    %128 = vmatprep.subr.mxu0 0.0
    %129 = vmatpush1.msra.mxu0 %v118
    %130 = vmatprep.subr.mxu0 0.0
    %131 = vmatpush1.msra.mxu0 0.0
    %132 = vmatprep.subr.mxu0 0.0
    %133 = vmatpush1.msra.mxu0 0.0
    %134 = vmatprep.subr.mxu0 0.0
    %135 = vmatpush1.msra.mxu0 0.0
    %136 = vmatprep.subr.mxu0 0.0
    %137 = vmatpush1.msra.mxu0 0.0
    %138 = vmatprep.subr.mxu0 0.0
    %139 = vmatpush1.msra.mxu0 0.0
    %140 = vmatprep.subr.mxu0 0.0
    %141 = vmatpush1.msra.mxu0 0.0
    %142 = vmatprep.subr.mxu0 0.0
    %143 = vmatpush1.msra.mxu0 0.0
    %144 = vmatprep.subr.mxu0 0.0
    %145 = vmatpush1.msra.mxu0 0.0
    %146 = vmatprep.subr.mxu0 0.0
    %147 = vmatpush1.msra.mxu0 0.0
    %148 = vmatprep.subr.mxu0 0.0
    %149 = vmatpush1.msra.mxu0 0.0
    %150 = vmatprep.subr.mxu0 0.0
    %151 = vmatpush1.msra.mxu0 0.0
    %152 = vmatprep.subr.mxu0 0.0
    %153 = vmatpush1.msra.mxu0 0.0
    %154 = vmatprep.subr.mxu0 0.0
    %155 = vmatpush1.msra.mxu0 0.0
    %156 = vmatprep.subr.mxu0 0.0
    %157 = vmatpush1.msra.mxu0 0.0
    %158 = vmatprep.subr.mxu0 0.0
    %159 = vmatpush1.msra.mxu0 0.0
    %160 = vmatprep.subr.mxu0 0.0
    %161 = vmatpush1.msra.mxu0 0.0
    %162 = vmatprep.subr.mxu0 0.0
    %163 = vmatpush1.msra.mxu0 0.0
    %164 = vmatprep.subr.mxu0 0.0
    %165 = vmatpush1.msra.mxu0 0.0
    %166 = vmatprep.subr.mxu0 0.0
    %167 = vmatpush1.msra.mxu0 0.0
    %168 = vmatprep.subr.mxu0 0.0
    %169 = vmatpush1.msra.mxu0 0.0
    %170 = vmatprep.subr.mxu0 0.0
    %171 = vmatpush1.msra.mxu0 0.0
    %172 = vmatprep.subr.mxu0 0.0
    %173 = vmatpush1.msra.mxu0 0.0
    %174 = vmatprep.subr.mxu0 0.0
    %175 = vmatpush1.msra.mxu0 0.0
    %176 = vmatprep.subr.mxu0 0.0
    %177 = vmatpush1.msra.mxu0 0.0
    %178 = vmatprep.subr.mxu0 0.0
    %179 = vmatpush1.msra.mxu0 0.0
    %180 = vmatprep.subr.mxu0 0.0
    %181 = vmatpush1.msra.mxu0 0.0
    %182 = vmatprep.subr.mxu0 0.0
    %183 = vmatpush1.msra.mxu0 0.0
    %184 = vmatprep.mubr.f32.mxu0 0.0
    %185 = vmatmul.mubr.f32.gmra.mrb[0].mxu0 %v93
    %v186 = vpop.f32.mrb[0].mxu0
    %v187 = vadd.f32 %v89, %v186
    %v188 = vpop.f32.mrb[0].mxu0
    %189 = vmatprep.mubr.f32.mxu0 0.0
    %190 = vmatmul.mubr.f32.gmra.mrb[0].mxu0 %v96
    %v191 = vpop.f32.mrb[0].mxu0
    %v192 = vadd.f32 %v89, %v191
    %v193 = vpop.f32.mrb[0].mxu0
    %194 = vmatprep.mubr.f32.mxu0 0.0
    %195 = vmatmul.mubr.f32.gmra.mrb[0].mxu0 %v99
    %v196 = vpop.f32.mrb[0].mxu0
    %v197 = vadd.f32 %v89, %v196
    %v198 = vpop.f32.mrb[0].mxu0
    %199 = vmatprep.mubr.f32.mxu0 0.0
    %200 = vmatmul.mubr.f32.gmra.mrb[0].mxu0 %v102
    %v201 = vpop.f32.mrb[0].mxu0
    %v202 = vadd.f32 %v89, %v201
    %v203 = vpop.f32.mrb[0].mxu0
    %204 = vmatprep.mubr.f32.mxu0 0.0
    %205 = vmatmul.mubr.f32.gmra.mrb[0].mxu0 %v105
    %v206 = vpop.f32.mrb[0].mxu0
    %v207 = vadd.f32 %v89, %v206
    %v208 = vpop.f32.mrb[0].mxu0
    %209 = vmatprep.mubr.f32.mxu0 0.0
    %210 = vmatmul.mubr.f32.gmra.mrb[0].mxu0 %v108
    %v211 = vpop.f32.mrb[0].mxu0
    %v212 = vadd.f32 %v89, %v211
    %v213 = vpop.f32.mrb[0].mxu0
    %214 = vmatprep.mubr.f32.mxu0 0.0
    %215 = vmatmul.mubr.f32.gmra.mrb[0].mxu0 %v111
    %v216 = vpop.f32.mrb[0].mxu0
    %v217 = vadd.f32 %v89, %v216
    %v218 = vpop.f32.mrb[0].mxu0
    %219 = vmatprep.mubr.f32.mxu0 0.0
    %220 = vmatmul.mubr.f32.gmra.mrb[0].mxu0 %v114
    %v221 = vpop.f32.mrb[0].mxu0
    %v222 = vadd.f32 %v89, %v221
    %v223 = vpop.f32.mrb[0].mxu0
    %224 = vdwg.mxu0
    %v225 = vmax.f32 %v187, 0.0
    %v226 = vmax.f32 %v192, 0.0
    %v227 = vmax.f32 %v197, 0.0
    %v228 = vmax.f32 %v202, 0.0
    %v229 = vmax.f32 %v207, 0.0
    %v230 = vmax.f32 %v212, 0.0
    %v231 = vmax.f32 %v217, 0.0
    %v232 = vmax.f32 %v222, 0.0
    %v233 = vld [vmem:[#allocation4] sm:$0xff]
    %v234 = vld [vmem:[#allocation4 + $0x8] sm:$0xff]
    %v235 = vld [vmem:[#allocation4 + $0x10] sm:$0xff]
    %v236 = vld [vmem:[#allocation4 + $0x18] sm:$0xff]
    %v237 = vld [vmem:[#allocation4 + $0x20] sm:$0xff]
    %v238 = vld [vmem:[#allocation4 + $0x28] sm:$0xff]
    %v239 = vld [vmem:[#allocation4 + $0x30] sm:$0xff]
    %v240 = vld [vmem:[#allocation4 + $0x38] sm:$0xff]
    %v241 = vld [vmem:[#allocation4 + $0x40] sm:$0xff]
    %v242 = vld [vmem:[#allocation4 + $0x48] sm:$0xff]
    %v243 = vld [vmem:[#allocation4 + $0x50] sm:$0xff]
    %v244 = vld [vmem:[#allocation4 + $0x58] sm:$0xff]
    %v245 = vld [vmem:[#allocation4 + $0x60] sm:$0xff]
    %v246 = vld [vmem:[#allocation4 + $0x68] sm:$0xff]
    %v247 = vld [vmem:[#allocation4 + $0x70] sm:$0xff]
    %v248 = vld [vmem:[#allocation4 + $0x78] sm:$0xff]
    %v249 = vld [vmem:[#allocation4 + $0x80] sm:$0x7]
    %v250 = vld [vmem:[#allocation4 + $0x88] sm:$0x7]
    %v251 = vld [vmem:[#allocation4 + $0x90] sm:$0x7]
    %v252 = vld [vmem:[#allocation4 + $0x98] sm:$0x7]
    %v253 = vld [vmem:[%s4] sm:$0xf]
    %v255 = vlaneseq
    %v256 = vshrl.u32 %v255, 7
    %v257 = vsub.s32 0, %v256
    %v258 = vrot.slane %v253, %v257
    %v259 = vlaneseq
    %v260 = vshrl.u32 %v259, 7
    %v261 = vsub.s32 1, %v260
    %v262 = vrot.slane %v253, %v261
    %v263 = vlaneseq
    %v264 = vshrl.u32 %v263, 7
    %v265 = vsub.s32 2, %v264
    %v266 = vrot.slane %v253, %v265
    %v267 = vlaneseq
    %v268 = vshrl.u32 %v267, 7
    %v269 = vsub.s32 3, %v268
    %v270 = vrot.slane %v253, %v269
    %v276 = vsel %vm91, %v225, 0
    %v279 = vsel %vm91, %v226, 0
    %v282 = vsel %vm91, %v227, 0
    %v285 = vsel %vm91, %v228, 0
    %v288 = vsel %vm91, %v229, 0
    %v291 = vsel %vm91, %v230, 0
    %v294 = vsel %vm91, %v231, 0
    %v297 = vsel %vm91, %v232, 0
    %v300 = vsel %vm116, %v249, 0
    %v303 = vsel %vm116, %v250, 0
    %v306 = vsel %vm116, %v251, 0
    %v309 = vsel %vm116, %v252, 0
    %311 = vmatprep.subr.mxu0 %v234
    %312 = vmatpush1.msra.mxu0 %v233
    %313 = vmatprep.subr.mxu0 %v238
    %314 = vmatpush1.msra.mxu0 %v237
    %315 = vmatprep.subr.mxu0 %v242
    %316 = vmatpush1.msra.mxu0 %v241
    %317 = vmatprep.subr.mxu0 %v246
    %318 = vmatpush1.msra.mxu0 %v245
    %319 = vmatprep.subr.mxu0 %v303
    %320 = vmatpush1.msra.mxu0 %v300
    %321 = vmatprep.subr.mxu0 0.0
    %322 = vmatpush1.msra.mxu0 0.0
    %323 = vmatprep.subr.mxu0 0.0
    %324 = vmatpush1.msra.mxu0 0.0
    %325 = vmatprep.subr.mxu0 0.0
    %326 = vmatpush1.msra.mxu0 0.0
    %327 = vmatprep.subr.mxu0 0.0
    %328 = vmatpush1.msra.mxu0 0.0
    %329 = vmatprep.subr.mxu0 0.0
    %330 = vmatpush1.msra.mxu0 0.0
    %331 = vmatprep.subr.mxu0 0.0
    %332 = vmatpush1.msra.mxu0 0.0
    %333 = vmatprep.subr.mxu0 0.0
    %334 = vmatpush1.msra.mxu0 0.0
    %335 = vmatprep.subr.mxu0 0.0
    %336 = vmatpush1.msra.mxu0 0.0
    %337 = vmatprep.subr.mxu0 0.0
    %338 = vmatpush1.msra.mxu0 0.0
    %339 = vmatprep.subr.mxu0 0.0
    %340 = vmatpush1.msra.mxu0 0.0
    %341 = vmatprep.subr.mxu0 0.0
    %342 = vmatpush1.msra.mxu0 0.0
    %343 = vmatprep.subr.mxu0 0.0
    %344 = vmatpush1.msra.mxu0 0.0
    %345 = vmatprep.subr.mxu0 0.0
    %346 = vmatpush1.msra.mxu0 0.0
    %347 = vmatprep.subr.mxu0 0.0
    %348 = vmatpush1.msra.mxu0 0.0
    %349 = vmatprep.subr.mxu0 0.0
    %350 = vmatpush1.msra.mxu0 0.0
    %351 = vmatprep.subr.mxu0 0.0
    %352 = vmatpush1.msra.mxu0 0.0
    %353 = vmatprep.subr.mxu0 0.0
    %354 = vmatpush1.msra.mxu0 0.0
    %355 = vmatprep.subr.mxu0 0.0
    %356 = vmatpush1.msra.mxu0 0.0
    %357 = vmatprep.subr.mxu0 0.0
    %358 = vmatpush1.msra.mxu0 0.0
    %359 = vmatprep.subr.mxu0 0.0
    %360 = vmatpush1.msra.mxu0 0.0
    %361 = vmatprep.subr.mxu0 0.0
    %362 = vmatpush1.msra.mxu0 0.0
    %363 = vmatprep.subr.mxu0 0.0
    %364 = vmatpush1.msra.mxu0 0.0
    %365 = vmatprep.subr.mxu0 0.0
    %366 = vmatpush1.msra.mxu0 0.0
    %367 = vmatprep.subr.mxu0 0.0
    %368 = vmatpush1.msra.mxu0 0.0
    %369 = vmatprep.subr.mxu0 0.0
    %370 = vmatpush1.msra.mxu0 0.0
    %371 = vmatprep.subr.mxu0 0.0
    %372 = vmatpush1.msra.mxu0 0.0
    %373 = vmatprep.subr.mxu0 0.0
    %374 = vmatpush1.msra.mxu0 0.0
    %375 = vmatprep.mubr.f32.mxu0 0.0
    %376 = vmatmul.mubr.f32.gmra.mrb[0].mxu0 %v276
    %v377 = vpop.f32.mrb[0].mxu0
    %v378 = vadd.f32 %v258, %v377
    %v379 = vpop.f32.mrb[0].mxu0
    %v380 = vadd.f32 %v262, %v379
    %381 = vmatprep.mubr.f32.mxu0 0.0
    %382 = vmatmul.mubr.f32.gmra.mrb[0].mxu0 %v279
    %v383 = vpop.f32.mrb[0].mxu0
    %v384 = vadd.f32 %v258, %v383
    %v385 = vpop.f32.mrb[0].mxu0
    %v386 = vadd.f32 %v262, %v385
    %387 = vmatprep.mubr.f32.mxu0 0.0
    %388 = vmatmul.mubr.f32.gmra.mrb[0].mxu0 %v282
    %v389 = vpop.f32.mrb[0].mxu0
    %v390 = vadd.f32 %v258, %v389
    %v391 = vpop.f32.mrb[0].mxu0
    %v392 = vadd.f32 %v262, %v391
    %393 = vmatprep.mubr.f32.mxu0 0.0
    %394 = vmatmul.mubr.f32.gmra.mrb[0].mxu0 %v285
    %v395 = vpop.f32.mrb[0].mxu0
    %v396 = vadd.f32 %v258, %v395
    %v397 = vpop.f32.mrb[0].mxu0
    %v398 = vadd.f32 %v262, %v397
    %399 = vmatprep.mubr.f32.mxu0 0.0
    %400 = vmatmul.mubr.f32.gmra.mrb[0].mxu0 %v288
    %v401 = vpop.f32.mrb[0].mxu0
    %v402 = vadd.f32 %v258, %v401
    %v403 = vpop.f32.mrb[0].mxu0
    %v404 = vadd.f32 %v262, %v403
    %405 = vmatprep.mubr.f32.mxu0 0.0
    %406 = vmatmul.mubr.f32.gmra.mrb[0].mxu0 %v291
    %v407 = vpop.f32.mrb[0].mxu0
    %v408 = vadd.f32 %v258, %v407
    %v409 = vpop.f32.mrb[0].mxu0
    %v410 = vadd.f32 %v262, %v409
    %411 = vmatprep.mubr.f32.mxu0 0.0
    %412 = vmatmul.mubr.f32.gmra.mrb[0].mxu0 %v294
    %v413 = vpop.f32.mrb[0].mxu0
    %v414 = vadd.f32 %v258, %v413
    %v415 = vpop.f32.mrb[0].mxu0
    %v416 = vadd.f32 %v262, %v415
    %417 = vmatprep.mubr.f32.mxu0 0.0
    %418 = vmatmul.mubr.f32.gmra.mrb[0].mxu0 %v297
    %v419 = vpop.f32.mrb[0].mxu0
    %v420 = vadd.f32 %v258, %v419
    %v421 = vpop.f32.mrb[0].mxu0
    %v422 = vadd.f32 %v262, %v421
    %423 = vdwg.mxu0
    %424 = vmatprep.subr.mxu0 %v236
    %425 = vmatpush1.msra.mxu0 %v235
    %426 = vmatprep.subr.mxu0 %v240
    %427 = vmatpush1.msra.mxu0 %v239
    %428 = vmatprep.subr.mxu0 %v244
    %429 = vmatpush1.msra.mxu0 %v243
    %430 = vmatprep.subr.mxu0 %v248
    %431 = vmatpush1.msra.mxu0 %v247
    %432 = vmatprep.subr.mxu0 %v309
    %433 = vmatpush1.msra.mxu0 %v306
    %434 = vmatprep.subr.mxu0 0.0
    %435 = vmatpush1.msra.mxu0 0.0
    %436 = vmatprep.subr.mxu0 0.0
    %437 = vmatpush1.msra.mxu0 0.0
    %438 = vmatprep.subr.mxu0 0.0
    %439 = vmatpush1.msra.mxu0 0.0
    %440 = vmatprep.subr.mxu0 0.0
    %441 = vmatpush1.msra.mxu0 0.0
    %442 = vmatprep.subr.mxu0 0.0
    %443 = vmatpush1.msra.mxu0 0.0
    %444 = vmatprep.subr.mxu0 0.0
    %445 = vmatpush1.msra.mxu0 0.0
    %446 = vmatprep.subr.mxu0 0.0
    %447 = vmatpush1.msra.mxu0 0.0
    %448 = vmatprep.subr.mxu0 0.0
    %449 = vmatpush1.msra.mxu0 0.0
    %450 = vmatprep.subr.mxu0 0.0
    %451 = vmatpush1.msra.mxu0 0.0
    %452 = vmatprep.subr.mxu0 0.0
    %453 = vmatpush1.msra.mxu0 0.0
    %454 = vmatprep.subr.mxu0 0.0
    %455 = vmatpush1.msra.mxu0 0.0
    %456 = vmatprep.subr.mxu0 0.0
    %457 = vmatpush1.msra.mxu0 0.0
    %458 = vmatprep.subr.mxu0 0.0
    %459 = vmatpush1.msra.mxu0 0.0
    %460 = vmatprep.subr.mxu0 0.0
    %461 = vmatpush1.msra.mxu0 0.0
    %462 = vmatprep.subr.mxu0 0.0
    %463 = vmatpush1.msra.mxu0 0.0
    %464 = vmatprep.subr.mxu0 0.0
    %465 = vmatpush1.msra.mxu0 0.0
    %466 = vmatprep.subr.mxu0 0.0
    %467 = vmatpush1.msra.mxu0 0.0
    %468 = vmatprep.subr.mxu0 0.0
    %469 = vmatpush1.msra.mxu0 0.0
    %470 = vmatprep.subr.mxu0 0.0
    %471 = vmatpush1.msra.mxu0 0.0
    %472 = vmatprep.subr.mxu0 0.0
    %473 = vmatpush1.msra.mxu0 0.0
    %474 = vmatprep.subr.mxu0 0.0
    %475 = vmatpush1.msra.mxu0 0.0
    %476 = vmatprep.subr.mxu0 0.0
    %477 = vmatpush1.msra.mxu0 0.0
    %478 = vmatprep.subr.mxu0 0.0
    %479 = vmatpush1.msra.mxu0 0.0
    %480 = vmatprep.subr.mxu0 0.0
    %481 = vmatpush1.msra.mxu0 0.0
    %482 = vmatprep.subr.mxu0 0.0
    %483 = vmatpush1.msra.mxu0 0.0
    %484 = vmatprep.subr.mxu0 0.0
    %485 = vmatpush1.msra.mxu0 0.0
    %486 = vmatprep.subr.mxu0 0.0
    %487 = vmatpush1.msra.mxu0 0.0
    %488 = vmatprep.mubr.f32.mxu0 0.0
    %489 = vmatmul.mubr.f32.gmra.mrb[0].mxu0 %v276
    %v490 = vpop.f32.mrb[0].mxu0
    %v491 = vadd.f32 %v266, %v490
    %v492 = vpop.f32.mrb[0].mxu0
    %v493 = vadd.f32 %v270, %v492
    %494 = vmatprep.mubr.f32.mxu0 0.0
    %495 = vmatmul.mubr.f32.gmra.mrb[0].mxu0 %v279
    %v496 = vpop.f32.mrb[0].mxu0
    %v497 = vadd.f32 %v266, %v496
    %v498 = vpop.f32.mrb[0].mxu0
    %v499 = vadd.f32 %v270, %v498
    %500 = vmatprep.mubr.f32.mxu0 0.0
    %501 = vmatmul.mubr.f32.gmra.mrb[0].mxu0 %v282
    %v502 = vpop.f32.mrb[0].mxu0
    %v503 = vadd.f32 %v266, %v502
    %v504 = vpop.f32.mrb[0].mxu0
    %v505 = vadd.f32 %v270, %v504
    %506 = vmatprep.mubr.f32.mxu0 0.0
    %507 = vmatmul.mubr.f32.gmra.mrb[0].mxu0 %v285
    %v508 = vpop.f32.mrb[0].mxu0
    %v509 = vadd.f32 %v266, %v508
    %v510 = vpop.f32.mrb[0].mxu0
    %v511 = vadd.f32 %v270, %v510
    %512 = vmatprep.mubr.f32.mxu0 0.0
    %513 = vmatmul.mubr.f32.gmra.mrb[0].mxu0 %v288
    %v514 = vpop.f32.mrb[0].mxu0
    %v515 = vadd.f32 %v266, %v514
    %v516 = vpop.f32.mrb[0].mxu0
    %v517 = vadd.f32 %v270, %v516
    %518 = vmatprep.mubr.f32.mxu0 0.0
    %519 = vmatmul.mubr.f32.gmra.mrb[0].mxu0 %v291
    %v520 = vpop.f32.mrb[0].mxu0
    %v521 = vadd.f32 %v266, %v520
    %v522 = vpop.f32.mrb[0].mxu0
    %v523 = vadd.f32 %v270, %v522
    %524 = vmatprep.mubr.f32.mxu0 0.0
    %525 = vmatmul.mubr.f32.gmra.mrb[0].mxu0 %v294
    %v526 = vpop.f32.mrb[0].mxu0
    %v527 = vadd.f32 %v266, %v526
    %v528 = vpop.f32.mrb[0].mxu0
    %v529 = vadd.f32 %v270, %v528
    %530 = vmatprep.mubr.f32.mxu0 0.0
    %531 = vmatmul.mubr.f32.gmra.mrb[0].mxu0 %v297
    %v532 = vpop.f32.mrb[0].mxu0
    %v533 = vadd.f32 %v266, %v532
    %v534 = vpop.f32.mrb[0].mxu0
    %v535 = vadd.f32 %v270, %v534
    %536 = vdwg.mxu0
    %537 = vst [vmem:[#allocation2] sm:$0xff] %v378
    %538 = vst [vmem:[#allocation2 + $0x8] sm:$0xff] %v380
    %539 = vst [vmem:[#allocation2 + $0x10] sm:$0xff] %v491
    %540 = vst [vmem:[#allocation2 + $0x18] sm:$0xff] %v493
    %541 = vst [vmem:[#allocation2 + $0x20] sm:$0xff] %v384
    %542 = vst [vmem:[#allocation2 + $0x28] sm:$0xff] %v386
    %543 = vst [vmem:[#allocation2 + $0x30] sm:$0xff] %v497
    %544 = vst [vmem:[#allocation2 + $0x38] sm:$0xff] %v499
    %545 = vst [vmem:[#allocation2 + $0x40] sm:$0xff] %v390
    %546 = vst [vmem:[#allocation2 + $0x48] sm:$0xff] %v392
    %547 = vst [vmem:[#allocation2 + $0x50] sm:$0xff] %v503
    %548 = vst [vmem:[#allocation2 + $0x58] sm:$0xff] %v505
    %549 = vst [vmem:[#allocation2 + $0x60] sm:$0xff] %v396
    %550 = vst [vmem:[#allocation2 + $0x68] sm:$0xff] %v398
    %551 = vst [vmem:[#allocation2 + $0x70] sm:$0xff] %v509
    %552 = vst [vmem:[#allocation2 + $0x78] sm:$0xff] %v511
    %553 = vst [vmem:[#allocation2 + $0x80] sm:$0xff] %v402
    %554 = vst [vmem:[#allocation2 + $0x88] sm:$0xff] %v404
    %555 = vst [vmem:[#allocation2 + $0x90] sm:$0xff] %v515
    %556 = vst [vmem:[#allocation2 + $0x98] sm:$0xff] %v517
    %557 = vst [vmem:[#allocation2 + $0xa0] sm:$0xff] %v408
    %558 = vst [vmem:[#allocation2 + $0xa8] sm:$0xff] %v410
    %559 = vst [vmem:[#allocation2 + $0xb0] sm:$0xff] %v521
    %560 = vst [vmem:[#allocation2 + $0xb8] sm:$0xff] %v523
    %561 = vst [vmem:[#allocation2 + $0xc0] sm:$0xff] %v414
    %562 = vst [vmem:[#allocation2 + $0xc8] sm:$0xff] %v416
    %563 = vst [vmem:[#allocation2 + $0xd0] sm:$0xff] %v527
    %564 = vst [vmem:[#allocation2 + $0xd8] sm:$0xff] %v529
    %565 = vst [vmem:[#allocation2 + $0xe0] sm:$0xff] %v420
    %566 = vst [vmem:[#allocation2 + $0xe8] sm:$0xff] %v422
    %567 = vst [vmem:[#allocation2 + $0xf0] sm:$0xff] %v533
    %568 = vst [vmem:[#allocation2 + $0xf8] sm:$0xff] %v535
    %v569 = vld [vmem:[#allocation2] sm:$0xff]
    %v570 = vld [vmem:[#allocation2 + $0x8] sm:$0xff]
    %v571 = vld [vmem:[#allocation2 + $0x10] sm:$0xff]
    %v572 = vld [vmem:[#allocation2 + $0x18] sm:$0xff]
    %v573 = vld [vmem:[#allocation6] sm:$0xff]
    %v574 = vld [vmem:[#allocation6 + $0x8] sm:$0xff]
    %v575 = vld [vmem:[#allocation6 + $0x10] sm:$0xff]
    %v576 = vld [vmem:[#allocation6 + $0x18] sm:$0xff]
    %v577 = vld [vmem:[#allocation6 + $0x20] sm:$0xff]
    %v578 = vld [vmem:[#allocation6 + $0x28] sm:$0xff]
    %v579 = vld [vmem:[#allocation6 + $0x30] sm:$0xff]
    %v580 = vld [vmem:[#allocation6 + $0x38] sm:$0xff]
    %v581 = vld [vmem:[#allocation6 + $0x40] sm:$0xff]
    %v582 = vld [vmem:[#allocation6 + $0x48] sm:$0xff]
    %v583 = vld [vmem:[#allocation6 + $0x50] sm:$0xff]
    %v584 = vld [vmem:[#allocation6 + $0x58] sm:$0xff]
    %v585 = vld [vmem:[#allocation6 + $0x60] sm:$0xff]
    %v586 = vld [vmem:[#allocation6 + $0x68] sm:$0xff]
    %v587 = vld [vmem:[#allocation6 + $0x70] sm:$0xff]
    %v588 = vld [vmem:[#allocation6 + $0x78] sm:$0xff]
    %v589 = vld [vmem:[#allocation6 + $0x80] sm:$0xff]
    %v590 = vld [vmem:[#allocation6 + $0x88] sm:$0xff]
    %v591 = vld [vmem:[#allocation6 + $0x90] sm:$0xff]
    %v592 = vld [vmem:[#allocation6 + $0x98] sm:$0xff]
    %v593 = vld [vmem:[#allocation6 + $0xa0] sm:$0xff]
    %v594 = vld [vmem:[#allocation6 + $0xa8] sm:$0xff]
    %v595 = vld [vmem:[#allocation6 + $0xb0] sm:$0xff]
    %v596 = vld [vmem:[#allocation6 + $0xb8] sm:$0xff]
    %v597 = vld [vmem:[#allocation6 + $0xc0] sm:$0xff]
    %v598 = vld [vmem:[#allocation6 + $0xc8] sm:$0xff]
    %v599 = vld [vmem:[#allocation6 + $0xd0] sm:$0xff]
    %v600 = vld [vmem:[#allocation6 + $0xd8] sm:$0xff]
    %v601 = vld [vmem:[#allocation6 + $0xe0] sm:$0xff]
    %v602 = vld [vmem:[#allocation6 + $0xe8] sm:$0xff]
    %v603 = vld [vmem:[#allocation6 + $0xf0] sm:$0xff]
    %v604 = vld [vmem:[#allocation6 + $0xf8] sm:$0xff]
    %v637 = vunpack.c.l.b16 %v573
    %v638 = vunpack.c.h.b16 %v573
    %v639 = vunpack.c.l.b16 %v574
    %v640 = vunpack.c.h.b16 %v574
    %v641 = vunpack.c.l.b16 %v575
    %v642 = vunpack.c.h.b16 %v575
    %v643 = vunpack.c.l.b16 %v576
    %v644 = vunpack.c.h.b16 %v576
    %v645 = vunpack.c.l.b16 %v577
    %v646 = vunpack.c.h.b16 %v577
    %v647 = vunpack.c.l.b16 %v578
    %v648 = vunpack.c.h.b16 %v578
    %v649 = vunpack.c.l.b16 %v579
    %v650 = vunpack.c.h.b16 %v579
    %v651 = vunpack.c.l.b16 %v580
    %v652 = vunpack.c.h.b16 %v580
    %v653 = vunpack.c.l.b16 %v581
    %v654 = vunpack.c.h.b16 %v581
    %v655 = vunpack.c.l.b16 %v582
    %v656 = vunpack.c.h.b16 %v582
    %v657 = vunpack.c.l.b16 %v583
    %v658 = vunpack.c.h.b16 %v583
    %v659 = vunpack.c.l.b16 %v584
    %v660 = vunpack.c.h.b16 %v584
    %v661 = vunpack.c.l.b16 %v585
    %v662 = vunpack.c.h.b16 %v585
    %v663 = vunpack.c.l.b16 %v586
    %v664 = vunpack.c.h.b16 %v586
    %v665 = vunpack.c.l.b16 %v587
    %v666 = vunpack.c.h.b16 %v587
    %v667 = vunpack.c.l.b16 %v588
    %v668 = vunpack.c.h.b16 %v588
    %v669 = vunpack.c.l.b16 %v589
    %v670 = vunpack.c.h.b16 %v589
    %v671 = vunpack.c.l.b16 %v590
    %v672 = vunpack.c.h.b16 %v590
    %v673 = vunpack.c.l.b16 %v591
    %v674 = vunpack.c.h.b16 %v591
    %v675 = vunpack.c.l.b16 %v592
    %v676 = vunpack.c.h.b16 %v592
    %v677 = vunpack.c.l.b16 %v593
    %v678 = vunpack.c.h.b16 %v593
    %v679 = vunpack.c.l.b16 %v594
    %v680 = vunpack.c.h.b16 %v594
    %v681 = vunpack.c.l.b16 %v595
    %v682 = vunpack.c.h.b16 %v595
    %v683 = vunpack.c.l.b16 %v596
    %v684 = vunpack.c.h.b16 %v596
    %v685 = vunpack.c.l.b16 %v597
    %v686 = vunpack.c.h.b16 %v597
    %v687 = vunpack.c.l.b16 %v598
    %v688 = vunpack.c.h.b16 %v598
    %v689 = vunpack.c.l.b16 %v599
    %v690 = vunpack.c.h.b16 %v599
    %v691 = vunpack.c.l.b16 %v600
    %v692 = vunpack.c.h.b16 %v600
    %v693 = vunpack.c.l.b16 %v601
    %v694 = vunpack.c.h.b16 %v601
    %v695 = vunpack.c.l.b16 %v602
    %v696 = vunpack.c.h.b16 %v602
    %v697 = vunpack.c.l.b16 %v603
    %v698 = vunpack.c.h.b16 %v603
    %v699 = vunpack.c.l.b16 %v604
    %v700 = vunpack.c.h.b16 %v604
    %v701 = vpack.c.b16 %v641, %v637
    %v702 = vpack.c.b16 %v642, %v638
    %v703 = vpack.c.b16 %v643, %v639
    %v704 = vpack.c.b16 %v644, %v640
    %v705 = vpack.c.b16 %v649, %v645
    %v706 = vpack.c.b16 %v650, %v646
    %v707 = vpack.c.b16 %v651, %v647
    %v708 = vpack.c.b16 %v652, %v648
    %v709 = vpack.c.b16 %v657, %v653
    %v710 = vpack.c.b16 %v658, %v654
    %v711 = vpack.c.b16 %v659, %v655
    %v712 = vpack.c.b16 %v660, %v656
    %v713 = vpack.c.b16 %v665, %v661
    %v714 = vpack.c.b16 %v666, %v662
    %v715 = vpack.c.b16 %v667, %v663
    %v716 = vpack.c.b16 %v668, %v664
    %v717 = vpack.c.b16 %v673, %v669
    %v718 = vpack.c.b16 %v674, %v670
    %v719 = vpack.c.b16 %v675, %v671
    %v720 = vpack.c.b16 %v676, %v672
    %v721 = vpack.c.b16 %v681, %v677
    %v722 = vpack.c.b16 %v682, %v678
    %v723 = vpack.c.b16 %v683, %v679
    %v724 = vpack.c.b16 %v684, %v680
    %v725 = vpack.c.b16 %v689, %v685
    %v726 = vpack.c.b16 %v690, %v686
    %v727 = vpack.c.b16 %v691, %v687
    %v728 = vpack.c.b16 %v692, %v688
    %v729 = vpack.c.b16 %v697, %v693
    %v730 = vpack.c.b16 %v698, %v694
    %v731 = vpack.c.b16 %v699, %v695
    %v732 = vpack.c.b16 %v700, %v696
    %765 = vmatprep.subr.bf16.mxu0 %v702
    %766 = vmatpush1.bf16.msra.mxu0 %v701
    %767 = vmatprep.subr.bf16.mxu0 %v706
    %768 = vmatpush1.bf16.msra.mxu0 %v705
    %769 = vmatprep.subr.bf16.mxu0 %v710
    %770 = vmatpush1.bf16.msra.mxu0 %v709
    %771 = vmatprep.subr.bf16.mxu0 %v714
    %772 = vmatpush1.bf16.msra.mxu0 %v713
    %773 = vmatprep.subr.bf16.mxu0 %v718
    %774 = vmatpush1.bf16.msra.mxu0 %v717
    %775 = vmatprep.subr.bf16.mxu0 %v722
    %776 = vmatpush1.bf16.msra.mxu0 %v721
    %777 = vmatprep.subr.bf16.mxu0 %v726
    %778 = vmatpush1.bf16.msra.mxu0 %v725
    %779 = vmatprep.subr.bf16.mxu0 %v730
    %780 = vmatpush1.bf16.msra.mxu0 %v729
    %781 = vmatprep.subr.bf16.mxu0 0
    %782 = vmatpush1.bf16.msra.mxu0 0
    %783 = vmatprep.subr.bf16.mxu0 0
    %784 = vmatpush1.bf16.msra.mxu0 0
    %785 = vmatprep.subr.bf16.mxu0 0
    %786 = vmatpush1.bf16.msra.mxu0 0
    %787 = vmatprep.subr.bf16.mxu0 0
    %788 = vmatpush1.bf16.msra.mxu0 0
    %789 = vmatprep.subr.bf16.mxu0 0
    %790 = vmatpush1.bf16.msra.mxu0 0
    %791 = vmatprep.subr.bf16.mxu0 0
    %792 = vmatpush1.bf16.msra.mxu0 0
    %793 = vmatprep.subr.bf16.mxu0 0
    %794 = vmatpush1.bf16.msra.mxu0 0
    %795 = vmatprep.subr.bf16.mxu0 0
    %796 = vmatpush1.bf16.msra.mxu0 0
    %797 = vmatprep.mubr.bf16.mxu0 0
    %798 = vmatmul.mubr.bf16.gmra.mrb[0].mxu0 0
    %v799 = vpop.f32.mrb[0].mxu0
    %v800 = vadd.f32 0.0, %v799
    %v801 = vpop.f32.mrb[0].mxu0
    %v802 = vadd.f32 0.0, %v801
    %v803 = vpop.f32.mrb[0].mxu0
    %v804 = vpop.f32.mrb[0].mxu0
    %805 = vdwg.mxu0
    %806 = vmatprep.subr.bf16.mxu0 %v704
    %807 = vmatpush1.bf16.msra.mxu0 %v703
    %808 = vmatprep.subr.bf16.mxu0 %v708
    %809 = vmatpush1.bf16.msra.mxu0 %v707
    %810 = vmatprep.subr.bf16.mxu0 %v712
    %811 = vmatpush1.bf16.msra.mxu0 %v711
    %812 = vmatprep.subr.bf16.mxu0 %v716
    %813 = vmatpush1.bf16.msra.mxu0 %v715
    %814 = vmatprep.subr.bf16.mxu0 %v720
    %815 = vmatpush1.bf16.msra.mxu0 %v719
    %816 = vmatprep.subr.bf16.mxu0 %v724
    %817 = vmatpush1.bf16.msra.mxu0 %v723
    %818 = vmatprep.subr.bf16.mxu0 %v728
    %819 = vmatpush1.bf16.msra.mxu0 %v727
    %820 = vmatprep.subr.bf16.mxu0 %v732
    %821 = vmatpush1.bf16.msra.mxu0 %v731
    %822 = vmatprep.subr.bf16.mxu0 0
    %823 = vmatpush1.bf16.msra.mxu0 0
    %824 = vmatprep.subr.bf16.mxu0 0
    %825 = vmatpush1.bf16.msra.mxu0 0
    %826 = vmatprep.subr.bf16.mxu0 0
    %827 = vmatpush1.bf16.msra.mxu0 0
    %828 = vmatprep.subr.bf16.mxu0 0
    %829 = vmatpush1.bf16.msra.mxu0 0
    %830 = vmatprep.subr.bf16.mxu0 0
    %831 = vmatpush1.bf16.msra.mxu0 0
    %832 = vmatprep.subr.bf16.mxu0 0
    %833 = vmatpush1.bf16.msra.mxu0 0
    %834 = vmatprep.subr.bf16.mxu0 0
    %835 = vmatpush1.bf16.msra.mxu0 0
    %836 = vmatprep.subr.bf16.mxu0 0
    %837 = vmatpush1.bf16.msra.mxu0 0
    %838 = vmatprep.mubr.bf16.mxu0 0
    %839 = vmatmul.mubr.bf16.gmra.mrb[0].mxu0 0
    %v840 = vpop.f32.mrb[0].mxu0
    %v841 = vadd.f32 0.0, %v840
    %v842 = vpop.f32.mrb[0].mxu0
    %v843 = vadd.f32 0.0, %v842
    %v844 = vpop.f32.mrb[0].mxu0
    %v845 = vpop.f32.mrb[0].mxu0
    %846 = vdwg.mxu0
    %v847 = vadd.f32 %v569, %v800
    %v848 = vadd.f32 %v570, %v802
    %v849 = vadd.f32 %v571, %v841
    %v850 = vadd.f32 %v572, %v843
    %v851 = vxor.u32 %v847, 2147483648
    %v852 = vmul.f32 %v851, 1.442695
    %v853 = vpow.pop %v852
    %v854 = vadd.f32 %v853, 1.0
    %v855 = vrcp.pop %v854
    %v856 = vmul.f32 1.0, %v855
    %v857 = vxor.u32 %v848, 2147483648
    %v858 = vmul.f32 %v857, 1.442695
    %v859 = vpow.pop %v858
    %v860 = vadd.f32 %v859, 1.0
    %v861 = vrcp.pop %v860
    %v862 = vmul.f32 1.0, %v861
    %v863 = vtanh.pop %v849
    %v864 = vxor.u32 %v850, 2147483648
    %v865 = vmul.f32 %v864, 1.442695
    %v866 = vpow.pop %v865
    %v867 = vadd.f32 %v866, 1.0
    %v868 = vrcp.pop %v867
    %v869 = vmul.f32 1.0, %v868
    %v870 = vmul.f32 %v862, 0.0
    %v871 = vmul.f32 %v856, %v863
    %v872 = vadd.f32 %v870, %v871
    %v873 = vtanh.pop %v872
    %v874 = vmul.f32 %v869, %v873
    %875 = vst [vmem:[#allocation3] sm:$0xff] %v874
    %v876 = vld [vmem:[#allocation2 + $0x20] sm:$0xff]
    %v877 = vld [vmem:[#allocation2 + $0x28] sm:$0xff]
    %v878 = vld [vmem:[#allocation2 + $0x30] sm:$0xff]
    %v879 = vld [vmem:[#allocation2 + $0x38] sm:$0xff]
    %v880 = vpack.c.bf16 %v874, %v874
    %v881 = vld [vmem:[#allocation6] sm:$0xff]
    %v882 = vld [vmem:[#allocation6 + $0x8] sm:$0xff]
    %v883 = vld [vmem:[#allocation6 + $0x10] sm:$0xff]
    %v884 = vld [vmem:[#allocation6 + $0x18] sm:$0xff]
    %v885 = vld [vmem:[#allocation6 + $0x20] sm:$0xff]
    %v886 = vld [vmem:[#allocation6 + $0x28] sm:$0xff]
    %v887 = vld [vmem:[#allocation6 + $0x30] sm:$0xff]
    %v888 = vld [vmem:[#allocation6 + $0x38] sm:$0xff]
    %v889 = vld [vmem:[#allocation6 + $0x40] sm:$0xff]
    %v890 = vld [vmem:[#allocation6 + $0x48] sm:$0xff]
    %v891 = vld [vmem:[#allocation6 + $0x50] sm:$0xff]
    %v892 = vld [vmem:[#allocation6 + $0x58] sm:$0xff]
    %v893 = vld [vmem:[#allocation6 + $0x60] sm:$0xff]
    %v894 = vld [vmem:[#allocation6 + $0x68] sm:$0xff]
    %v895 = vld [vmem:[#allocation6 + $0x70] sm:$0xff]
    %v896 = vld [vmem:[#allocation6 + $0x78] sm:$0xff]
    %v897 = vld [vmem:[#allocation6 + $0x80] sm:$0xff]
    %v898 = vld [vmem:[#allocation6 + $0x88] sm:$0xff]
    %v899 = vld [vmem:[#allocation6 + $0x90] sm:$0xff]
    %v900 = vld [vmem:[#allocation6 + $0x98] sm:$0xff]
    %v901 = vld [vmem:[#allocation6 + $0xa0] sm:$0xff]
    %v902 = vld [vmem:[#allocation6 + $0xa8] sm:$0xff]
    %v903 = vld [vmem:[#allocation6 + $0xb0] sm:$0xff]
    %v904 = vld [vmem:[#allocation6 + $0xb8] sm:$0xff]
    %v905 = vld [vmem:[#allocation6 + $0xc0] sm:$0xff]
    %v906 = vld [vmem:[#allocation6 + $0xc8] sm:$0xff]
    %v907 = vld [vmem:[#allocation6 + $0xd0] sm:$0xff]
    %v908 = vld [vmem:[#allocation6 + $0xd8] sm:$0xff]
    %v909 = vld [vmem:[#allocation6 + $0xe0] sm:$0xff]
    %v910 = vld [vmem:[#allocation6 + $0xe8] sm:$0xff]
    %v911 = vld [vmem:[#allocation6 + $0xf0] sm:$0xff]
    %v912 = vld [vmem:[#allocation6 + $0xf8] sm:$0xff]
    %v945 = vunpack.c.l.b16 %v881
    %v946 = vunpack.c.h.b16 %v881
    %v947 = vunpack.c.l.b16 %v882
    %v948 = vunpack.c.h.b16 %v882
    %v949 = vunpack.c.l.b16 %v883
    %v950 = vunpack.c.h.b16 %v883
    %v951 = vunpack.c.l.b16 %v884
    %v952 = vunpack.c.h.b16 %v884
    %v953 = vunpack.c.l.b16 %v885
    %v954 = vunpack.c.h.b16 %v885
    %v955 = vunpack.c.l.b16 %v886
    %v956 = vunpack.c.h.b16 %v886
    %v957 = vunpack.c.l.b16 %v887
    %v958 = vunpack.c.h.b16 %v887
    %v959 = vunpack.c.l.b16 %v888
    %v960 = vunpack.c.h.b16 %v888
    %v961 = vunpack.c.l.b16 %v889
    %v962 = vunpack.c.h.b16 %v889
    %v963 = vunpack.c.l.b16 %v890
    %v964 = vunpack.c.h.b16 %v890
    %v965 = vunpack.c.l.b16 %v891
    %v966 = vunpack.c.h.b16 %v891
    %v967 = vunpack.c.l.b16 %v892
    %v968 = vunpack.c.h.b16 %v892
    %v969 = vunpack.c.l.b16 %v893
    %v970 = vunpack.c.h.b16 %v893
    %v971 = vunpack.c.l.b16 %v894
    %v972 = vunpack.c.h.b16 %v894
    %v973 = vunpack.c.l.b16 %v895
    %v974 = vunpack.c.h.b16 %v895
    %v975 = vunpack.c.l.b16 %v896
    %v976 = vunpack.c.h.b16 %v896
    %v977 = vunpack.c.l.b16 %v897
    %v978 = vunpack.c.h.b16 %v897
    %v979 = vunpack.c.l.b16 %v898
    %v980 = vunpack.c.h.b16 %v898
    %v981 = vunpack.c.l.b16 %v899
    %v982 = vunpack.c.h.b16 %v899
    %v983 = vunpack.c.l.b16 %v900
    %v984 = vunpack.c.h.b16 %v900
    %v985 = vunpack.c.l.b16 %v901
    %v986 = vunpack.c.h.b16 %v901
    %v987 = vunpack.c.l.b16 %v902
    %v988 = vunpack.c.h.b16 %v902
    %v989 = vunpack.c.l.b16 %v903
    %v990 = vunpack.c.h.b16 %v903
    %v991 = vunpack.c.l.b16 %v904
    %v992 = vunpack.c.h.b16 %v904
    %v993 = vunpack.c.l.b16 %v905
    %v994 = vunpack.c.h.b16 %v905
    %v995 = vunpack.c.l.b16 %v906
    %v996 = vunpack.c.h.b16 %v906
    %v997 = vunpack.c.l.b16 %v907
    %v998 = vunpack.c.h.b16 %v907
    %v999 = vunpack.c.l.b16 %v908
    %v1000 = vunpack.c.h.b16 %v908
    %v1001 = vunpack.c.l.b16 %v909
    %v1002 = vunpack.c.h.b16 %v909
    %v1003 = vunpack.c.l.b16 %v910
    %v1004 = vunpack.c.h.b16 %v910
    %v1005 = vunpack.c.l.b16 %v911
    %v1006 = vunpack.c.h.b16 %v911
    %v1007 = vunpack.c.l.b16 %v912
    %v1008 = vunpack.c.h.b16 %v912
    %v1009 = vpack.c.b16 %v949, %v945
    %v1010 = vpack.c.b16 %v950, %v946
    %v1011 = vpack.c.b16 %v951, %v947
    %v1012 = vpack.c.b16 %v952, %v948
    %v1013 = vpack.c.b16 %v957, %v953
    %v1014 = vpack.c.b16 %v958, %v954
    %v1015 = vpack.c.b16 %v959, %v955
    %v1016 = vpack.c.b16 %v960, %v956
    %v1017 = vpack.c.b16 %v965, %v961
    %v1018 = vpack.c.b16 %v966, %v962
    %v1019 = vpack.c.b16 %v967, %v963
    %v1020 = vpack.c.b16 %v968, %v964
    %v1021 = vpack.c.b16 %v973, %v969
    %v1022 = vpack.c.b16 %v974, %v970
    %v1023 = vpack.c.b16 %v975, %v971
    %v1024 = vpack.c.b16 %v976, %v972
    %v1025 = vpack.c.b16 %v981, %v977
    %v1026 = vpack.c.b16 %v982, %v978
    %v1027 = vpack.c.b16 %v983, %v979
    %v1028 = vpack.c.b16 %v984, %v980
    %v1029 = vpack.c.b16 %v989, %v985
    %v1030 = vpack.c.b16 %v990, %v986
    %v1031 = vpack.c.b16 %v991, %v987
    %v1032 = vpack.c.b16 %v992, %v988
    %v1033 = vpack.c.b16 %v997, %v993
    %v1034 = vpack.c.b16 %v998, %v994
    %v1035 = vpack.c.b16 %v999, %v995
    %v1036 = vpack.c.b16 %v1000, %v996
    %v1037 = vpack.c.b16 %v1005, %v1001
    %v1038 = vpack.c.b16 %v1006, %v1002
    %v1039 = vpack.c.b16 %v1007, %v1003
    %v1040 = vpack.c.b16 %v1008, %v1004
    %1073 = vmatprep.subr.bf16.mxu0 %v1010
    %1074 = vmatpush1.bf16.msra.mxu0 %v1009
    %1075 = vmatprep.subr.bf16.mxu0 %v1014
    %1076 = vmatpush1.bf16.msra.mxu0 %v1013
    %1077 = vmatprep.subr.bf16.mxu0 %v1018
    %1078 = vmatpush1.bf16.msra.mxu0 %v1017
    %1079 = vmatprep.subr.bf16.mxu0 %v1022
    %1080 = vmatpush1.bf16.msra.mxu0 %v1021
    %1081 = vmatprep.subr.bf16.mxu0 %v1026
    %1082 = vmatpush1.bf16.msra.mxu0 %v1025
    %1083 = vmatprep.subr.bf16.mxu0 %v1030
    %1084 = vmatpush1.bf16.msra.mxu0 %v1029
    %1085 = vmatprep.subr.bf16.mxu0 %v1034
    %1086 = vmatpush1.bf16.msra.mxu0 %v1033
    %1087 = vmatprep.subr.bf16.mxu0 %v1038
    %1088 = vmatpush1.bf16.msra.mxu0 %v1037
    %1089 = vmatprep.subr.bf16.mxu0 0
    %1090 = vmatpush1.bf16.msra.mxu0 0
    %1091 = vmatprep.subr.bf16.mxu0 0
    %1092 = vmatpush1.bf16.msra.mxu0 0
    %1093 = vmatprep.subr.bf16.mxu0 0
    %1094 = vmatpush1.bf16.msra.mxu0 0
    %1095 = vmatprep.subr.bf16.mxu0 0
    %1096 = vmatpush1.bf16.msra.mxu0 0
    %1097 = vmatprep.subr.bf16.mxu0 0
    %1098 = vmatpush1.bf16.msra.mxu0 0
    %1099 = vmatprep.subr.bf16.mxu0 0
    %1100 = vmatpush1.bf16.msra.mxu0 0
    %1101 = vmatprep.subr.bf16.mxu0 0
    %1102 = vmatpush1.bf16.msra.mxu0 0
    %1103 = vmatprep.subr.bf16.mxu0 0
    %1104 = vmatpush1.bf16.msra.mxu0 0
    %1105 = vmatprep.mubr.bf16.mxu0 0
    %1106 = vmatmul.mubr.bf16.gmra.mrb[0].mxu0 %v880
    %v1107 = vpop.f32.mrb[0].mxu0
    %v1108 = vadd.f32 0.0, %v1107
    %v1109 = vpop.f32.mrb[0].mxu0
    %v1110 = vadd.f32 0.0, %v1109
    %v1111 = vpop.f32.mrb[0].mxu0
    %v1112 = vpop.f32.mrb[0].mxu0
    %1113 = vdwg.mxu0
    %1114 = vmatprep.subr.bf16.mxu0 %v1012
    %1115 = vmatpush1.bf16.msra.mxu0 %v1011
    %1116 = vmatprep.subr.bf16.mxu0 %v1016
    %1117 = vmatpush1.bf16.msra.mxu0 %v1015
    %1118 = vmatprep.subr.bf16.mxu0 %v1020
    %1119 = vmatpush1.bf16.msra.mxu0 %v1019
    %1120 = vmatprep.subr.bf16.mxu0 %v1024
    %1121 = vmatpush1.bf16.msra.mxu0 %v1023
    %1122 = vmatprep.subr.bf16.mxu0 %v1028
    %1123 = vmatpush1.bf16.msra.mxu0 %v1027
    %1124 = vmatprep.subr.bf16.mxu0 %v1032
    %1125 = vmatpush1.bf16.msra.mxu0 %v1031
    %1126 = vmatprep.subr.bf16.mxu0 %v1036
    %1127 = vmatpush1.bf16.msra.mxu0 %v1035
    %1128 = vmatprep.subr.bf16.mxu0 %v1040
    %1129 = vmatpush1.bf16.msra.mxu0 %v1039
    %1130 = vmatprep.subr.bf16.mxu0 0
    %1131 = vmatpush1.bf16.msra.mxu0 0
    %1132 = vmatprep.subr.bf16.mxu0 0
    %1133 = vmatpush1.bf16.msra.mxu0 0
    %1134 = vmatprep.subr.bf16.mxu0 0
    %1135 = vmatpush1.bf16.msra.mxu0 0
    %1136 = vmatprep.subr.bf16.mxu0 0
    %1137 = vmatpush1.bf16.msra.mxu0 0
    %1138 = vmatprep.subr.bf16.mxu0 0
    %1139 = vmatpush1.bf16.msra.mxu0 0
    %1140 = vmatprep.subr.bf16.mxu0 0
    %1141 = vmatpush1.bf16.msra.mxu0 0
    %1142 = vmatprep.subr.bf16.mxu0 0
    %1143 = vmatpush1.bf16.msra.mxu0 0
    %1144 = vmatprep.subr.bf16.mxu0 0
    %1145 = vmatpush1.bf16.msra.mxu0 0
    %1146 = vmatprep.mubr.bf16.mxu0 0
    %1147 = vmatmul.mubr.bf16.gmra.mrb[0].mxu0 %v880
    %v1148 = vpop.f32.mrb[0].mxu0
    %v1149 = vadd.f32 0.0, %v1148
    %v1150 = vpop.f32.mrb[0].mxu0
    %v1151 = vadd.f32 0.0, %v1150
    %v1152 = vpop.f32.mrb[0].mxu0
    %v1153 = vpop.f32.mrb[0].mxu0
    %1154 = vdwg.mxu0
    %v1155 = vadd.f32 %v876, %v1108
    %v1156 = vadd.f32 %v877, %v1110
    %v1157 = vadd.f32 %v878, %v1149
    %v1158 = vadd.f32 %v879, %v1151
    %v1159 = vxor.u32 %v1155, 2147483648
    %v1160 = vmul.f32 %v1159, 1.442695
    %v1161 = vpow.pop %v1160
    %v1162 = vadd.f32 %v1161, 1.0
    %v1163 = vrcp.pop %v1162
    %v1164 = vmul.f32 1.0, %v1163
    %v1165 = vxor.u32 %v1156, 2147483648
    %v1166 = vmul.f32 %v1165, 1.442695
    %v1167 = vpow.pop %v1166
    %v1168 = vadd.f32 %v1167, 1.0
    %v1169 = vrcp.pop %v1168
    %v1170 = vmul.f32 1.0, %v1169
    %v1171 = vtanh.pop %v1157
    %v1172 = vxor.u32 %v1158, 2147483648
    %v1173 = vmul.f32 %v1172, 1.442695
    %v1174 = vpow.pop %v1173
    %v1175 = vadd.f32 %v1174, 1.0
    %v1176 = vrcp.pop %v1175
    %v1177 = vmul.f32 1.0, %v1176
    %v1178 = vmul.f32 %v1170, %v872
    %v1179 = vmul.f32 %v1164, %v1171
    %v1180 = vadd.f32 %v1178, %v1179
    %v1181 = vtanh.pop %v1180
    %v1182 = vmul.f32 %v1177, %v1181
    %1183 = vst [vmem:[#allocation3 + $0x8] sm:$0xff] %v1182
    %v1184 = vld [vmem:[#allocation2 + $0x40] sm:$0xff]
    %v1185 = vld [vmem:[#allocation2 + $0x48] sm:$0xff]
    %v1186 = vld [vmem:[#allocation2 + $0x50] sm:$0xff]
    %v1187 = vld [vmem:[#allocation2 + $0x58] sm:$0xff]
    %v1188 = vpack.c.bf16 %v1182, %v1182
    %v1189 = vld [vmem:[#allocation6] sm:$0xff]
    %v1190 = vld [vmem:[#allocation6 + $0x8] sm:$0xff]
    %v1191 = vld [vmem:[#allocation6 + $0x10] sm:$0xff]
    %v1192 = vld [vmem:[#allocation6 + $0x18] sm:$0xff]
    %v1193 = vld [vmem:[#allocation6 + $0x20] sm:$0xff]
    %v1194 = vld [vmem:[#allocation6 + $0x28] sm:$0xff]
    %v1195 = vld [vmem:[#allocation6 + $0x30] sm:$0xff]
    %v1196 = vld [vmem:[#allocation6 + $0x38] sm:$0xff]
    %v1197 = vld [vmem:[#allocation6 + $0x40] sm:$0xff]
    %v1198 = vld [vmem:[#allocation6 + $0x48] sm:$0xff]
    %v1199 = vld [vmem:[#allocation6 + $0x50] sm:$0xff]
    %v1200 = vld [vmem:[#allocation6 + $0x58] sm:$0xff]
    %v1201 = vld [vmem:[#allocation6 + $0x60] sm:$0xff]
    %v1202 = vld [vmem:[#allocation6 + $0x68] sm:$0xff]
    %v1203 = vld [vmem:[#allocation6 + $0x70] sm:$0xff]
    %v1204 = vld [vmem:[#allocation6 + $0x78] sm:$0xff]
    %v1205 = vld [vmem:[#allocation6 + $0x80] sm:$0xff]
    %v1206 = vld [vmem:[#allocation6 + $0x88] sm:$0xff]
    %v1207 = vld [vmem:[#allocation6 + $0x90] sm:$0xff]
    %v1208 = vld [vmem:[#allocation6 + $0x98] sm:$0xff]
    %v1209 = vld [vmem:[#allocation6 + $0xa0] sm:$0xff]
    %v1210 = vld [vmem:[#allocation6 + $0xa8] sm:$0xff]
    %v1211 = vld [vmem:[#allocation6 + $0xb0] sm:$0xff]
    %v1212 = vld [vmem:[#allocation6 + $0xb8] sm:$0xff]
    %v1213 = vld [vmem:[#allocation6 + $0xc0] sm:$0xff]
    %v1214 = vld [vmem:[#allocation6 + $0xc8] sm:$0xff]
    %v1215 = vld [vmem:[#allocation6 + $0xd0] sm:$0xff]
    %v1216 = vld [vmem:[#allocation6 + $0xd8] sm:$0xff]
    %v1217 = vld [vmem:[#allocation6 + $0xe0] sm:$0xff]
    %v1218 = vld [vmem:[#allocation6 + $0xe8] sm:$0xff]
    %v1219 = vld [vmem:[#allocation6 + $0xf0] sm:$0xff]
    %v1220 = vld [vmem:[#allocation6 + $0xf8] sm:$0xff]
    %v1253 = vunpack.c.l.b16 %v1189
    %v1254 = vunpack.c.h.b16 %v1189
    %v1255 = vunpack.c.l.b16 %v1190
    %v1256 = vunpack.c.h.b16 %v1190
    %v1257 = vunpack.c.l.b16 %v1191
    %v1258 = vunpack.c.h.b16 %v1191
    %v1259 = vunpack.c.l.b16 %v1192
    %v1260 = vunpack.c.h.b16 %v1192
    %v1261 = vunpack.c.l.b16 %v1193
    %v1262 = vunpack.c.h.b16 %v1193
    %v1263 = vunpack.c.l.b16 %v1194
    %v1264 = vunpack.c.h.b16 %v1194
    %v1265 = vunpack.c.l.b16 %v1195
    %v1266 = vunpack.c.h.b16 %v1195
    %v1267 = vunpack.c.l.b16 %v1196
    %v1268 = vunpack.c.h.b16 %v1196
    %v1269 = vunpack.c.l.b16 %v1197
    %v1270 = vunpack.c.h.b16 %v1197
    %v1271 = vunpack.c.l.b16 %v1198
    %v1272 = vunpack.c.h.b16 %v1198
    %v1273 = vunpack.c.l.b16 %v1199
    %v1274 = vunpack.c.h.b16 %v1199
    %v1275 = vunpack.c.l.b16 %v1200
    %v1276 = vunpack.c.h.b16 %v1200
    %v1277 = vunpack.c.l.b16 %v1201
    %v1278 = vunpack.c.h.b16 %v1201
    %v1279 = vunpack.c.l.b16 %v1202
    %v1280 = vunpack.c.h.b16 %v1202
    %v1281 = vunpack.c.l.b16 %v1203
    %v1282 = vunpack.c.h.b16 %v1203
    %v1283 = vunpack.c.l.b16 %v1204
    %v1284 = vunpack.c.h.b16 %v1204
    %v1285 = vunpack.c.l.b16 %v1205
    %v1286 = vunpack.c.h.b16 %v1205
    %v1287 = vunpack.c.l.b16 %v1206
    %v1288 = vunpack.c.h.b16 %v1206
    %v1289 = vunpack.c.l.b16 %v1207
    %v1290 = vunpack.c.h.b16 %v1207
    %v1291 = vunpack.c.l.b16 %v1208
    %v1292 = vunpack.c.h.b16 %v1208
    %v1293 = vunpack.c.l.b16 %v1209
    %v1294 = vunpack.c.h.b16 %v1209
    %v1295 = vunpack.c.l.b16 %v1210
    %v1296 = vunpack.c.h.b16 %v1210
    %v1297 = vunpack.c.l.b16 %v1211
    %v1298 = vunpack.c.h.b16 %v1211
    %v1299 = vunpack.c.l.b16 %v1212
    %v1300 = vunpack.c.h.b16 %v1212
    %v1301 = vunpack.c.l.b16 %v1213
    %v1302 = vunpack.c.h.b16 %v1213
    %v1303 = vunpack.c.l.b16 %v1214
    %v1304 = vunpack.c.h.b16 %v1214
    %v1305 = vunpack.c.l.b16 %v1215
    %v1306 = vunpack.c.h.b16 %v1215
    %v1307 = vunpack.c.l.b16 %v1216
    %v1308 = vunpack.c.h.b16 %v1216
    %v1309 = vunpack.c.l.b16 %v1217
    %v1310 = vunpack.c.h.b16 %v1217
    %v1311 = vunpack.c.l.b16 %v1218
    %v1312 = vunpack.c.h.b16 %v1218
    %v1313 = vunpack.c.l.b16 %v1219
    %v1314 = vunpack.c.h.b16 %v1219
    %v1315 = vunpack.c.l.b16 %v1220
    %v1316 = vunpack.c.h.b16 %v1220
    %v1317 = vpack.c.b16 %v1257, %v1253
    %v1318 = vpack.c.b16 %v1258, %v1254
    %v1319 = vpack.c.b16 %v1259, %v1255
    %v1320 = vpack.c.b16 %v1260, %v1256
    %v1321 = vpack.c.b16 %v1265, %v1261
    %v1322 = vpack.c.b16 %v1266, %v1262
    %v1323 = vpack.c.b16 %v1267, %v1263
    %v1324 = vpack.c.b16 %v1268, %v1264
    %v1325 = vpack.c.b16 %v1273, %v1269
    %v1326 = vpack.c.b16 %v1274, %v1270
    %v1327 = vpack.c.b16 %v1275, %v1271
    %v1328 = vpack.c.b16 %v1276, %v1272
    %v1329 = vpack.c.b16 %v1281, %v1277
    %v1330 = vpack.c.b16 %v1282, %v1278
    %v1331 = vpack.c.b16 %v1283, %v1279
    %v1332 = vpack.c.b16 %v1284, %v1280
    %v1333 = vpack.c.b16 %v1289, %v1285
    %v1334 = vpack.c.b16 %v1290, %v1286
    %v1335 = vpack.c.b16 %v1291, %v1287
    %v1336 = vpack.c.b16 %v1292, %v1288
    %v1337 = vpack.c.b16 %v1297, %v1293
    %v1338 = vpack.c.b16 %v1298, %v1294
    %v1339 = vpack.c.b16 %v1299, %v1295
    %v1340 = vpack.c.b16 %v1300, %v1296
    %v1341 = vpack.c.b16 %v1305, %v1301
    %v1342 = vpack.c.b16 %v1306, %v1302
    %v1343 = vpack.c.b16 %v1307, %v1303
    %v1344 = vpack.c.b16 %v1308, %v1304
    %v1345 = vpack.c.b16 %v1313, %v1309
    %v1346 = vpack.c.b16 %v1314, %v1310
    %v1347 = vpack.c.b16 %v1315, %v1311
    %v1348 = vpack.c.b16 %v1316, %v1312
    %1381 = vmatprep.subr.bf16.mxu0 %v1318
    %1382 = vmatpush1.bf16.msra.mxu0 %v1317
    %1383 = vmatprep.subr.bf16.mxu0 %v1322
    %1384 = vmatpush1.bf16.msra.mxu0 %v1321
    %1385 = vmatprep.subr.bf16.mxu0 %v1326
    %1386 = vmatpush1.bf16.msra.mxu0 %v1325
    %1387 = vmatprep.subr.bf16.mxu0 %v1330
    %1388 = vmatpush1.bf16.msra.mxu0 %v1329
    %1389 = vmatprep.subr.bf16.mxu0 %v1334
    %1390 = vmatpush1.bf16.msra.mxu0 %v1333
    %1391 = vmatprep.subr.bf16.mxu0 %v1338
    %1392 = vmatpush1.bf16.msra.mxu0 %v1337
    %1393 = vmatprep.subr.bf16.mxu0 %v1342
    %1394 = vmatpush1.bf16.msra.mxu0 %v1341
    %1395 = vmatprep.subr.bf16.mxu0 %v1346
    %1396 = vmatpush1.bf16.msra.mxu0 %v1345
    %1397 = vmatprep.subr.bf16.mxu0 0
    %1398 = vmatpush1.bf16.msra.mxu0 0
    %1399 = vmatprep.subr.bf16.mxu0 0
    %1400 = vmatpush1.bf16.msra.mxu0 0
    %1401 = vmatprep.subr.bf16.mxu0 0
    %1402 = vmatpush1.bf16.msra.mxu0 0
    %1403 = vmatprep.subr.bf16.mxu0 0
    %1404 = vmatpush1.bf16.msra.mxu0 0
    %1405 = vmatprep.subr.bf16.mxu0 0
    %1406 = vmatpush1.bf16.msra.mxu0 0
    %1407 = vmatprep.subr.bf16.mxu0 0
    %1408 = vmatpush1.bf16.msra.mxu0 0
    %1409 = vmatprep.subr.bf16.mxu0 0
    %1410 = vmatpush1.bf16.msra.mxu0 0
    %1411 = vmatprep.subr.bf16.mxu0 0
    %1412 = vmatpush1.bf16.msra.mxu0 0
    %1413 = vmatprep.mubr.bf16.mxu0 0
    %1414 = vmatmul.mubr.bf16.gmra.mrb[0].mxu0 %v1188
    %v1415 = vpop.f32.mrb[0].mxu0
    %v1416 = vadd.f32 0.0, %v1415
    %v1417 = vpop.f32.mrb[0].mxu0
    %v1418 = vadd.f32 0.0, %v1417
    %v1419 = vpop.f32.mrb[0].mxu0
    %v1420 = vpop.f32.mrb[0].mxu0
    %1421 = vdwg.mxu0
    %1422 = vmatprep.subr.bf16.mxu0 %v1320
    %1423 = vmatpush1.bf16.msra.mxu0 %v1319
    %1424 = vmatprep.subr.bf16.mxu0 %v1324
    %1425 = vmatpush1.bf16.msra.mxu0 %v1323
    %1426 = vmatprep.subr.bf16.mxu0 %v1328
    %1427 = vmatpush1.bf16.msra.mxu0 %v1327
    %1428 = vmatprep.subr.bf16.mxu0 %v1332
    %1429 = vmatpush1.bf16.msra.mxu0 %v1331
    %1430 = vmatprep.subr.bf16.mxu0 %v1336
    %1431 = vmatpush1.bf16.msra.mxu0 %v1335
    %1432 = vmatprep.subr.bf16.mxu0 %v1340
    %1433 = vmatpush1.bf16.msra.mxu0 %v1339
    %1434 = vmatprep.subr.bf16.mxu0 %v1344
    %1435 = vmatpush1.bf16.msra.mxu0 %v1343
    %1436 = vmatprep.subr.bf16.mxu0 %v1348
    %1437 = vmatpush1.bf16.msra.mxu0 %v1347
    %1438 = vmatprep.subr.bf16.mxu0 0
    %1439 = vmatpush1.bf16.msra.mxu0 0
    %1440 = vmatprep.subr.bf16.mxu0 0
    %1441 = vmatpush1.bf16.msra.mxu0 0
    %1442 = vmatprep.subr.bf16.mxu0 0
    %1443 = vmatpush1.bf16.msra.mxu0 0
    %1444 = vmatprep.subr.bf16.mxu0 0
    %1445 = vmatpush1.bf16.msra.mxu0 0
    %1446 = vmatprep.subr.bf16.mxu0 0
    %1447 = vmatpush1.bf16.msra.mxu0 0
    %1448 = vmatprep.subr.bf16.mxu0 0
    %1449 = vmatpush1.bf16.msra.mxu0 0
    %1450 = vmatprep.subr.bf16.mxu0 0
    %1451 = vmatpush1.bf16.msra.mxu0 0
    %1452 = vmatprep.subr.bf16.mxu0 0
    %1453 = vmatpush1.bf16.msra.mxu0 0
    %1454 = vmatprep.mubr.bf16.mxu0 0
    %1455 = vmatmul.mubr.bf16.gmra.mrb[0].mxu0 %v1188
    %v1456 = vpop.f32.mrb[0].mxu0
    %v1457 = vadd.f32 0.0, %v1456
    %v1458 = vpop.f32.mrb[0].mxu0
    %v1459 = vadd.f32 0.0, %v1458
    %v1460 = vpop.f32.mrb[0].mxu0
    %v1461 = vpop.f32.mrb[0].mxu0
    %1462 = vdwg.mxu0
    %v1463 = vadd.f32 %v1184, %v1416
    %v1464 = vadd.f32 %v1185, %v1418
    %v1465 = vadd.f32 %v1186, %v1457
    %v1466 = vadd.f32 %v1187, %v1459
    %v1467 = vxor.u32 %v1463, 2147483648
    %v1468 = vmul.f32 %v1467, 1.442695
    %v1469 = vpow.pop %v1468
    %v1470 = vadd.f32 %v1469, 1.0
    %v1471 = vrcp.pop %v1470
    %v1472 = vmul.f32 1.0, %v1471
    %v1473 = vxor.u32 %v1464, 2147483648
    %v1474 = vmul.f32 %v1473, 1.442695
    %v1475 = vpow.pop %v1474
    %v1476 = vadd.f32 %v1475, 1.0
    %v1477 = vrcp.pop %v1476
    %v1478 = vmul.f32 1.0, %v1477
    %v1479 = vtanh.pop %v1465
    %v1480 = vxor.u32 %v1466, 2147483648
    %v1481 = vmul.f32 %v1480, 1.442695
    %v1482 = vpow.pop %v1481
    %v1483 = vadd.f32 %v1482, 1.0
    %v1484 = vrcp.pop %v1483
    %v1485 = vmul.f32 1.0, %v1484
    %v1486 = vmul.f32 %v1478, %v1180
    %v1487 = vmul.f32 %v1472, %v1479
    %v1488 = vadd.f32 %v1486, %v1487
    %v1489 = vtanh.pop %v1488
    %v1490 = vmul.f32 %v1485, %v1489
    %1491 = vst [vmem:[#allocation3 + $0x10] sm:$0xff] %v1490
    %v1492 = vld [vmem:[#allocation2 + $0x60] sm:$0xff]
    %v1493 = vld [vmem:[#allocation2 + $0x68] sm:$0xff]
    %v1494 = vld [vmem:[#allocation2 + $0x70] sm:$0xff]
    %v1495 = vld [vmem:[#allocation2 + $0x78] sm:$0xff]
    %v1496 = vpack.c.bf16 %v1490, %v1490
    %v1497 = vld [vmem:[#allocation6] sm:$0xff]
    %v1498 = vld [vmem:[#allocation6 + $0x8] sm:$0xff]
    %v1499 = vld [vmem:[#allocation6 + $0x10] sm:$0xff]
    %v1500 = vld [vmem:[#allocation6 + $0x18] sm:$0xff]
    %v1501 = vld [vmem:[#allocation6 + $0x20] sm:$0xff]
    %v1502 = vld [vmem:[#allocation6 + $0x28] sm:$0xff]
    %v1503 = vld [vmem:[#allocation6 + $0x30] sm:$0xff]
    %v1504 = vld [vmem:[#allocation6 + $0x38] sm:$0xff]
    %v1505 = vld [vmem:[#allocation6 + $0x40] sm:$0xff]
    %v1506 = vld [vmem:[#allocation6 + $0x48] sm:$0xff]
    %v1507 = vld [vmem:[#allocation6 + $0x50] sm:$0xff]
    %v1508 = vld [vmem:[#allocation6 + $0x58] sm:$0xff]
    %v1509 = vld [vmem:[#allocation6 + $0x60] sm:$0xff]
    %v1510 = vld [vmem:[#allocation6 + $0x68] sm:$0xff]
    %v1511 = vld [vmem:[#allocation6 + $0x70] sm:$0xff]
    %v1512 = vld [vmem:[#allocation6 + $0x78] sm:$0xff]
    %v1513 = vld [vmem:[#allocation6 + $0x80] sm:$0xff]
    %v1514 = vld [vmem:[#allocation6 + $0x88] sm:$0xff]
    %v1515 = vld [vmem:[#allocation6 + $0x90] sm:$0xff]
    %v1516 = vld [vmem:[#allocation6 + $0x98] sm:$0xff]
    %v1517 = vld [vmem:[#allocation6 + $0xa0] sm:$0xff]
    %v1518 = vld [vmem:[#allocation6 + $0xa8] sm:$0xff]
    %v1519 = vld [vmem:[#allocation6 + $0xb0] sm:$0xff]
    %v1520 = vld [vmem:[#allocation6 + $0xb8] sm:$0xff]
    %v1521 = vld [vmem:[#allocation6 + $0xc0] sm:$0xff]
    %v1522 = vld [vmem:[#allocation6 + $0xc8] sm:$0xff]
    %v1523 = vld [vmem:[#allocation6 + $0xd0] sm:$0xff]
    %v1524 = vld [vmem:[#allocation6 + $0xd8] sm:$0xff]
    %v1525 = vld [vmem:[#allocation6 + $0xe0] sm:$0xff]
    %v1526 = vld [vmem:[#allocation6 + $0xe8] sm:$0xff]
    %v1527 = vld [vmem:[#allocation6 + $0xf0] sm:$0xff]
    %v1528 = vld [vmem:[#allocation6 + $0xf8] sm:$0xff]
    %v1561 = vunpack.c.l.b16 %v1497
    %v1562 = vunpack.c.h.b16 %v1497
    %v1563 = vunpack.c.l.b16 %v1498
    %v1564 = vunpack.c.h.b16 %v1498
    %v1565 = vunpack.c.l.b16 %v1499
    %v1566 = vunpack.c.h.b16 %v1499
    %v1567 = vunpack.c.l.b16 %v1500
    %v1568 = vunpack.c.h.b16 %v1500
    %v1569 = vunpack.c.l.b16 %v1501
    %v1570 = vunpack.c.h.b16 %v1501
    %v1571 = vunpack.c.l.b16 %v1502
    %v1572 = vunpack.c.h.b16 %v1502
    %v1573 = vunpack.c.l.b16 %v1503
    %v1574 = vunpack.c.h.b16 %v1503
    %v1575 = vunpack.c.l.b16 %v1504
    %v1576 = vunpack.c.h.b16 %v1504
    %v1577 = vunpack.c.l.b16 %v1505
    %v1578 = vunpack.c.h.b16 %v1505
    %v1579 = vunpack.c.l.b16 %v1506
    %v1580 = vunpack.c.h.b16 %v1506
    %v1581 = vunpack.c.l.b16 %v1507
    %v1582 = vunpack.c.h.b16 %v1507
    %v1583 = vunpack.c.l.b16 %v1508
    %v1584 = vunpack.c.h.b16 %v1508
    %v1585 = vunpack.c.l.b16 %v1509
    %v1586 = vunpack.c.h.b16 %v1509
    %v1587 = vunpack.c.l.b16 %v1510
    %v1588 = vunpack.c.h.b16 %v1510
    %v1589 = vunpack.c.l.b16 %v1511
    %v1590 = vunpack.c.h.b16 %v1511
    %v1591 = vunpack.c.l.b16 %v1512
    %v1592 = vunpack.c.h.b16 %v1512
    %v1593 = vunpack.c.l.b16 %v1513
    %v1594 = vunpack.c.h.b16 %v1513
    %v1595 = vunpack.c.l.b16 %v1514
    %v1596 = vunpack.c.h.b16 %v1514
    %v1597 = vunpack.c.l.b16 %v1515
    %v1598 = vunpack.c.h.b16 %v1515
    %v1599 = vunpack.c.l.b16 %v1516
    %v1600 = vunpack.c.h.b16 %v1516
    %v1601 = vunpack.c.l.b16 %v1517
    %v1602 = vunpack.c.h.b16 %v1517
    %v1603 = vunpack.c.l.b16 %v1518
    %v1604 = vunpack.c.h.b16 %v1518
    %v1605 = vunpack.c.l.b16 %v1519
    %v1606 = vunpack.c.h.b16 %v1519
    %v1607 = vunpack.c.l.b16 %v1520
    %v1608 = vunpack.c.h.b16 %v1520
    %v1609 = vunpack.c.l.b16 %v1521
    %v1610 = vunpack.c.h.b16 %v1521
    %v1611 = vunpack.c.l.b16 %v1522
    %v1612 = vunpack.c.h.b16 %v1522
    %v1613 = vunpack.c.l.b16 %v1523
    %v1614 = vunpack.c.h.b16 %v1523
    %v1615 = vunpack.c.l.b16 %v1524
    %v1616 = vunpack.c.h.b16 %v1524
    %v1617 = vunpack.c.l.b16 %v1525
    %v1618 = vunpack.c.h.b16 %v1525
    %v1619 = vunpack.c.l.b16 %v1526
    %v1620 = vunpack.c.h.b16 %v1526
    %v1621 = vunpack.c.l.b16 %v1527
    %v1622 = vunpack.c.h.b16 %v1527
    %v1623 = vunpack.c.l.b16 %v1528
    %v1624 = vunpack.c.h.b16 %v1528
    %v1625 = vpack.c.b16 %v1565, %v1561
    %v1626 = vpack.c.b16 %v1566, %v1562
    %v1627 = vpack.c.b16 %v1567, %v1563
    %v1628 = vpack.c.b16 %v1568, %v1564
    %v1629 = vpack.c.b16 %v1573, %v1569
    %v1630 = vpack.c.b16 %v1574, %v1570
    %v1631 = vpack.c.b16 %v1575, %v1571
    %v1632 = vpack.c.b16 %v1576, %v1572
    %v1633 = vpack.c.b16 %v1581, %v1577
    %v1634 = vpack.c.b16 %v1582, %v1578
    %v1635 = vpack.c.b16 %v1583, %v1579
    %v1636 = vpack.c.b16 %v1584, %v1580
    %v1637 = vpack.c.b16 %v1589, %v1585
    %v1638 = vpack.c.b16 %v1590, %v1586
    %v1639 = vpack.c.b16 %v1591, %v1587
    %v1640 = vpack.c.b16 %v1592, %v1588
    %v1641 = vpack.c.b16 %v1597, %v1593
    %v1642 = vpack.c.b16 %v1598, %v1594
    %v1643 = vpack.c.b16 %v1599, %v1595
    %v1644 = vpack.c.b16 %v1600, %v1596
    %v1645 = vpack.c.b16 %v1605, %v1601
    %v1646 = vpack.c.b16 %v1606, %v1602
    %v1647 = vpack.c.b16 %v1607, %v1603
    %v1648 = vpack.c.b16 %v1608, %v1604
    %v1649 = vpack.c.b16 %v1613, %v1609
    %v1650 = vpack.c.b16 %v1614, %v1610
    %v1651 = vpack.c.b16 %v1615, %v1611
    %v1652 = vpack.c.b16 %v1616, %v1612
    %v1653 = vpack.c.b16 %v1621, %v1617
    %v1654 = vpack.c.b16 %v1622, %v1618
    %v1655 = vpack.c.b16 %v1623, %v1619
    %v1656 = vpack.c.b16 %v1624, %v1620
    %1689 = vmatprep.subr.bf16.mxu0 %v1626
    %1690 = vmatpush1.bf16.msra.mxu0 %v1625
    %1691 = vmatprep.subr.bf16.mxu0 %v1630
    %1692 = vmatpush1.bf16.msra.mxu0 %v1629
    %1693 = vmatprep.subr.bf16.mxu0 %v1634
    %1694 = vmatpush1.bf16.msra.mxu0 %v1633
    %1695 = vmatprep.subr.bf16.mxu0 %v1638
    %1696 = vmatpush1.bf16.msra.mxu0 %v1637
    %1697 = vmatprep.subr.bf16.mxu0 %v1642
    %1698 = vmatpush1.bf16.msra.mxu0 %v1641
    %1699 = vmatprep.subr.bf16.mxu0 %v1646
    %1700 = vmatpush1.bf16.msra.mxu0 %v1645
    %1701 = vmatprep.subr.bf16.mxu0 %v1650
    %1702 = vmatpush1.bf16.msra.mxu0 %v1649
    %1703 = vmatprep.subr.bf16.mxu0 %v1654
    %1704 = vmatpush1.bf16.msra.mxu0 %v1653
    %1705 = vmatprep.subr.bf16.mxu0 0
    %1706 = vmatpush1.bf16.msra.mxu0 0
    %1707 = vmatprep.subr.bf16.mxu0 0
    %1708 = vmatpush1.bf16.msra.mxu0 0
    %1709 = vmatprep.subr.bf16.mxu0 0
    %1710 = vmatpush1.bf16.msra.mxu0 0
    %1711 = vmatprep.subr.bf16.mxu0 0
    %1712 = vmatpush1.bf16.msra.mxu0 0
    %1713 = vmatprep.subr.bf16.mxu0 0
    %1714 = vmatpush1.bf16.msra.mxu0 0
    %1715 = vmatprep.subr.bf16.mxu0 0
    %1716 = vmatpush1.bf16.msra.mxu0 0
    %1717 = vmatprep.subr.bf16.mxu0 0
    %1718 = vmatpush1.bf16.msra.mxu0 0
    %1719 = vmatprep.subr.bf16.mxu0 0
    %1720 = vmatpush1.bf16.msra.mxu0 0
    %1721 = vmatprep.mubr.bf16.mxu0 0
    %1722 = vmatmul.mubr.bf16.gmra.mrb[0].mxu0 %v1496
    %v1723 = vpop.f32.mrb[0].mxu0
    %v1724 = vadd.f32 0.0, %v1723
    %v1725 = vpop.f32.mrb[0].mxu0
    %v1726 = vadd.f32 0.0, %v1725
    %v1727 = vpop.f32.mrb[0].mxu0
    %v1728 = vpop.f32.mrb[0].mxu0
    %1729 = vdwg.mxu0
    %1730 = vmatprep.subr.bf16.mxu0 %v1628
    %1731 = vmatpush1.bf16.msra.mxu0 %v1627
    %1732 = vmatprep.subr.bf16.mxu0 %v1632
    %1733 = vmatpush1.bf16.msra.mxu0 %v1631
    %1734 = vmatprep.subr.bf16.mxu0 %v1636
    %1735 = vmatpush1.bf16.msra.mxu0 %v1635
    %1736 = vmatprep.subr.bf16.mxu0 %v1640
    %1737 = vmatpush1.bf16.msra.mxu0 %v1639
    %1738 = vmatprep.subr.bf16.mxu0 %v1644
    %1739 = vmatpush1.bf16.msra.mxu0 %v1643
    %1740 = vmatprep.subr.bf16.mxu0 %v1648
    %1741 = vmatpush1.bf16.msra.mxu0 %v1647
    %1742 = vmatprep.subr.bf16.mxu0 %v1652
    %1743 = vmatpush1.bf16.msra.mxu0 %v1651
    %1744 = vmatprep.subr.bf16.mxu0 %v1656
    %1745 = vmatpush1.bf16.msra.mxu0 %v1655
    %1746 = vmatprep.subr.bf16.mxu0 0
    %1747 = vmatpush1.bf16.msra.mxu0 0
    %1748 = vmatprep.subr.bf16.mxu0 0
    %1749 = vmatpush1.bf16.msra.mxu0 0
    %1750 = vmatprep.subr.bf16.mxu0 0
    %1751 = vmatpush1.bf16.msra.mxu0 0
    %1752 = vmatprep.subr.bf16.mxu0 0
    %1753 = vmatpush1.bf16.msra.mxu0 0
    %1754 = vmatprep.subr.bf16.mxu0 0
    %1755 = vmatpush1.bf16.msra.mxu0 0
    %1756 = vmatprep.subr.bf16.mxu0 0
    %1757 = vmatpush1.bf16.msra.mxu0 0
    %1758 = vmatprep.subr.bf16.mxu0 0
    %1759 = vmatpush1.bf16.msra.mxu0 0
    %1760 = vmatprep.subr.bf16.mxu0 0
    %1761 = vmatpush1.bf16.msra.mxu0 0
    %1762 = vmatprep.mubr.bf16.mxu0 0
    %1763 = vmatmul.mubr.bf16.gmra.mrb[0].mxu0 %v1496
    %v1764 = vpop.f32.mrb[0].mxu0
    %v1765 = vadd.f32 0.0, %v1764
    %v1766 = vpop.f32.mrb[0].mxu0
    %v1767 = vadd.f32 0.0, %v1766
    %v1768 = vpop.f32.mrb[0].mxu0
    %v1769 = vpop.f32.mrb[0].mxu0
    %1770 = vdwg.mxu0
    %v1771 = vadd.f32 %v1492, %v1724
    %v1772 = vadd.f32 %v1493, %v1726
    %v1773 = vadd.f32 %v1494, %v1765
    %v1774 = vadd.f32 %v1495, %v1767
    %v1775 = vxor.u32 %v1771, 2147483648
    %v1776 = vmul.f32 %v1775, 1.442695
    %v1777 = vpow.pop %v1776
    %v1778 = vadd.f32 %v1777, 1.0
    %v1779 = vrcp.pop %v1778
    %v1780 = vmul.f32 1.0, %v1779
    %v1781 = vxor.u32 %v1772, 2147483648
    %v1782 = vmul.f32 %v1781, 1.442695
    %v1783 = vpow.pop %v1782
    %v1784 = vadd.f32 %v1783, 1.0
    %v1785 = vrcp.pop %v1784
    %v1786 = vmul.f32 1.0, %v1785
    %v1787 = vtanh.pop %v1773
    %v1788 = vxor.u32 %v1774, 2147483648
    %v1789 = vmul.f32 %v1788, 1.442695
    %v1790 = vpow.pop %v1789
    %v1791 = vadd.f32 %v1790, 1.0
    %v1792 = vrcp.pop %v1791
    %v1793 = vmul.f32 1.0, %v1792
    %v1794 = vmul.f32 %v1786, %v1488
    %v1795 = vmul.f32 %v1780, %v1787
    %v1796 = vadd.f32 %v1794, %v1795
    %v1797 = vtanh.pop %v1796
    %v1798 = vmul.f32 %v1793, %v1797
    %1799 = vst [vmem:[#allocation3 + $0x18] sm:$0xff] %v1798
    %v1800 = vld [vmem:[#allocation2 + $0x80] sm:$0xff]
    %v1801 = vld [vmem:[#allocation2 + $0x88] sm:$0xff]
    %v1802 = vld [vmem:[#allocation2 + $0x90] sm:$0xff]
    %v1803 = vld [vmem:[#allocation2 + $0x98] sm:$0xff]
    %v1804 = vpack.c.bf16 %v1798, %v1798
    %v1805 = vld [vmem:[#allocation6] sm:$0xff]
    %v1806 = vld [vmem:[#allocation6 + $0x8] sm:$0xff]
    %v1807 = vld [vmem:[#allocation6 + $0x10] sm:$0xff]
    %v1808 = vld [vmem:[#allocation6 + $0x18] sm:$0xff]
    %v1809 = vld [vmem:[#allocation6 + $0x20] sm:$0xff]
    %v1810 = vld [vmem:[#allocation6 + $0x28] sm:$0xff]
    %v1811 = vld [vmem:[#allocation6 + $0x30] sm:$0xff]
    %v1812 = vld [vmem:[#allocation6 + $0x38] sm:$0xff]
    %v1813 = vld [vmem:[#allocation6 + $0x40] sm:$0xff]
    %v1814 = vld [vmem:[#allocation6 + $0x48] sm:$0xff]
    %v1815 = vld [vmem:[#allocation6 + $0x50] sm:$0xff]
    %v1816 = vld [vmem:[#allocation6 + $0x58] sm:$0xff]
    %v1817 = vld [vmem:[#allocation6 + $0x60] sm:$0xff]
    %v1818 = vld [vmem:[#allocation6 + $0x68] sm:$0xff]
    %v1819 = vld [vmem:[#allocation6 + $0x70] sm:$0xff]
    %v1820 = vld [vmem:[#allocation6 + $0x78] sm:$0xff]
    %v1821 = vld [vmem:[#allocation6 + $0x80] sm:$0xff]
    %v1822 = vld [vmem:[#allocation6 + $0x88] sm:$0xff]
    %v1823 = vld [vmem:[#allocation6 + $0x90] sm:$0xff]
    %v1824 = vld [vmem:[#allocation6 + $0x98] sm:$0xff]
    %v1825 = vld [vmem:[#allocation6 + $0xa0] sm:$0xff]
    %v1826 = vld [vmem:[#allocation6 + $0xa8] sm:$0xff]
    %v1827 = vld [vmem:[#allocation6 + $0xb0] sm:$0xff]
    %v1828 = vld [vmem:[#allocation6 + $0xb8] sm:$0xff]
    %v1829 = vld [vmem:[#allocation6 + $0xc0] sm:$0xff]
    %v1830 = vld [vmem:[#allocation6 + $0xc8] sm:$0xff]
    %v1831 = vld [vmem:[#allocation6 + $0xd0] sm:$0xff]
    %v1832 = vld [vmem:[#allocation6 + $0xd8] sm:$0xff]
    %v1833 = vld [vmem:[#allocation6 + $0xe0] sm:$0xff]
    %v1834 = vld [vmem:[#allocation6 + $0xe8] sm:$0xff]
    %v1835 = vld [vmem:[#allocation6 + $0xf0] sm:$0xff]
    %v1836 = vld [vmem:[#allocation6 + $0xf8] sm:$0xff]
    %v1869 = vunpack.c.l.b16 %v1805
    %v1870 = vunpack.c.h.b16 %v1805
    %v1871 = vunpack.c.l.b16 %v1806
    %v1872 = vunpack.c.h.b16 %v1806
    %v1873 = vunpack.c.l.b16 %v1807
    %v1874 = vunpack.c.h.b16 %v1807
    %v1875 = vunpack.c.l.b16 %v1808
    %v1876 = vunpack.c.h.b16 %v1808
    %v1877 = vunpack.c.l.b16 %v1809
    %v1878 = vunpack.c.h.b16 %v1809
    %v1879 = vunpack.c.l.b16 %v1810
    %v1880 = vunpack.c.h.b16 %v1810
    %v1881 = vunpack.c.l.b16 %v1811
    %v1882 = vunpack.c.h.b16 %v1811
    %v1883 = vunpack.c.l.b16 %v1812
    %v1884 = vunpack.c.h.b16 %v1812
    %v1885 = vunpack.c.l.b16 %v1813
    %v1886 = vunpack.c.h.b16 %v1813
    %v1887 = vunpack.c.l.b16 %v1814
    %v1888 = vunpack.c.h.b16 %v1814
    %v1889 = vunpack.c.l.b16 %v1815
    %v1890 = vunpack.c.h.b16 %v1815
    %v1891 = vunpack.c.l.b16 %v1816
    %v1892 = vunpack.c.h.b16 %v1816
    %v1893 = vunpack.c.l.b16 %v1817
    %v1894 = vunpack.c.h.b16 %v1817
    %v1895 = vunpack.c.l.b16 %v1818
    %v1896 = vunpack.c.h.b16 %v1818
    %v1897 = vunpack.c.l.b16 %v1819
    %v1898 = vunpack.c.h.b16 %v1819
    %v1899 = vunpack.c.l.b16 %v1820
    %v1900 = vunpack.c.h.b16 %v1820
    %v1901 = vunpack.c.l.b16 %v1821
    %v1902 = vunpack.c.h.b16 %v1821
    %v1903 = vunpack.c.l.b16 %v1822
    %v1904 = vunpack.c.h.b16 %v1822
    %v1905 = vunpack.c.l.b16 %v1823
    %v1906 = vunpack.c.h.b16 %v1823
    %v1907 = vunpack.c.l.b16 %v1824
    %v1908 = vunpack.c.h.b16 %v1824
    %v1909 = vunpack.c.l.b16 %v1825
    %v1910 = vunpack.c.h.b16 %v1825
    %v1911 = vunpack.c.l.b16 %v1826
    %v1912 = vunpack.c.h.b16 %v1826
    %v1913 = vunpack.c.l.b16 %v1827
    %v1914 = vunpack.c.h.b16 %v1827
    %v1915 = vunpack.c.l.b16 %v1828
    %v1916 = vunpack.c.h.b16 %v1828
    %v1917 = vunpack.c.l.b16 %v1829
    %v1918 = vunpack.c.h.b16 %v1829
    %v1919 = vunpack.c.l.b16 %v1830
    %v1920 = vunpack.c.h.b16 %v1830
    %v1921 = vunpack.c.l.b16 %v1831
    %v1922 = vunpack.c.h.b16 %v1831
    %v1923 = vunpack.c.l.b16 %v1832
    %v1924 = vunpack.c.h.b16 %v1832
    %v1925 = vunpack.c.l.b16 %v1833
    %v1926 = vunpack.c.h.b16 %v1833
    %v1927 = vunpack.c.l.b16 %v1834
    %v1928 = vunpack.c.h.b16 %v1834
    %v1929 = vunpack.c.l.b16 %v1835
    %v1930 = vunpack.c.h.b16 %v1835
    %v1931 = vunpack.c.l.b16 %v1836
    %v1932 = vunpack.c.h.b16 %v1836
    %v1933 = vpack.c.b16 %v1873, %v1869
    %v1934 = vpack.c.b16 %v1874, %v1870
    %v1935 = vpack.c.b16 %v1875, %v1871
    %v1936 = vpack.c.b16 %v1876, %v1872
    %v1937 = vpack.c.b16 %v1881, %v1877
    %v1938 = vpack.c.b16 %v1882, %v1878
    %v1939 = vpack.c.b16 %v1883, %v1879
    %v1940 = vpack.c.b16 %v1884, %v1880
    %v1941 = vpack.c.b16 %v1889, %v1885
    %v1942 = vpack.c.b16 %v1890, %v1886
    %v1943 = vpack.c.b16 %v1891, %v1887
    %v1944 = vpack.c.b16 %v1892, %v1888
    %v1945 = vpack.c.b16 %v1897, %v1893
    %v1946 = vpack.c.b16 %v1898, %v1894
    %v1947 = vpack.c.b16 %v1899, %v1895
    %v1948 = vpack.c.b16 %v1900, %v1896
    %v1949 = vpack.c.b16 %v1905, %v1901
    %v1950 = vpack.c.b16 %v1906, %v1902
    %v1951 = vpack.c.b16 %v1907, %v1903
    %v1952 = vpack.c.b16 %v1908, %v1904
    %v1953 = vpack.c.b16 %v1913, %v1909
    %v1954 = vpack.c.b16 %v1914, %v1910
    %v1955 = vpack.c.b16 %v1915, %v1911
    %v1956 = vpack.c.b16 %v1916, %v1912
    %v1957 = vpack.c.b16 %v1921, %v1917
    %v1958 = vpack.c.b16 %v1922, %v1918
    %v1959 = vpack.c.b16 %v1923, %v1919
    %v1960 = vpack.c.b16 %v1924, %v1920
    %v1961 = vpack.c.b16 %v1929, %v1925
    %v1962 = vpack.c.b16 %v1930, %v1926
    %v1963 = vpack.c.b16 %v1931, %v1927
    %v1964 = vpack.c.b16 %v1932, %v1928
    %1997 = vmatprep.subr.bf16.mxu0 %v1934
    %1998 = vmatpush1.bf16.msra.mxu0 %v1933
    %1999 = vmatprep.subr.bf16.mxu0 %v1938
    %2000 = vmatpush1.bf16.msra.mxu0 %v1937
    %2001 = vmatprep.subr.bf16.mxu0 %v1942
    %2002 = vmatpush1.bf16.msra.mxu0 %v1941
    %2003 = vmatprep.subr.bf16.mxu0 %v1946
    %2004 = vmatpush1.bf16.msra.mxu0 %v1945
    %2005 = vmatprep.subr.bf16.mxu0 %v1950
    %2006 = vmatpush1.bf16.msra.mxu0 %v1949
    %2007 = vmatprep.subr.bf16.mxu0 %v1954
    %2008 = vmatpush1.bf16.msra.mxu0 %v1953
    %2009 = vmatprep.subr.bf16.mxu0 %v1958
    %2010 = vmatpush1.bf16.msra.mxu0 %v1957
    %2011 = vmatprep.subr.bf16.mxu0 %v1962
    %2012 = vmatpush1.bf16.msra.mxu0 %v1961
    %2013 = vmatprep.subr.bf16.mxu0 0
    %2014 = vmatpush1.bf16.msra.mxu0 0
    %2015 = vmatprep.subr.bf16.mxu0 0
    %2016 = vmatpush1.bf16.msra.mxu0 0
    %2017 = vmatprep.subr.bf16.mxu0 0
    %2018 = vmatpush1.bf16.msra.mxu0 0
    %2019 = vmatprep.subr.bf16.mxu0 0
    %2020 = vmatpush1.bf16.msra.mxu0 0
    %2021 = vmatprep.subr.bf16.mxu0 0
    %2022 = vmatpush1.bf16.msra.mxu0 0
    %2023 = vmatprep.subr.bf16.mxu0 0
    %2024 = vmatpush1.bf16.msra.mxu0 0
    %2025 = vmatprep.subr.bf16.mxu0 0
    %2026 = vmatpush1.bf16.msra.mxu0 0
    %2027 = vmatprep.subr.bf16.mxu0 0
    %2028 = vmatpush1.bf16.msra.mxu0 0
    %2029 = vmatprep.mubr.bf16.mxu0 0
    %2030 = vmatmul.mubr.bf16.gmra.mrb[0].mxu0 %v1804
    %v2031 = vpop.f32.mrb[0].mxu0
    %v2032 = vadd.f32 0.0, %v2031
    %v2033 = vpop.f32.mrb[0].mxu0
    %v2034 = vadd.f32 0.0, %v2033
    %v2035 = vpop.f32.mrb[0].mxu0
    %v2036 = vpop.f32.mrb[0].mxu0
    %2037 = vdwg.mxu0
    %2038 = vmatprep.subr.bf16.mxu0 %v1936
    %2039 = vmatpush1.bf16.msra.mxu0 %v1935
    %2040 = vmatprep.subr.bf16.mxu0 %v1940
    %2041 = vmatpush1.bf16.msra.mxu0 %v1939
    %2042 = vmatprep.subr.bf16.mxu0 %v1944
    %2043 = vmatpush1.bf16.msra.mxu0 %v1943
    %2044 = vmatprep.subr.bf16.mxu0 %v1948
    %2045 = vmatpush1.bf16.msra.mxu0 %v1947
    %2046 = vmatprep.subr.bf16.mxu0 %v1952
    %2047 = vmatpush1.bf16.msra.mxu0 %v1951
    %2048 = vmatprep.subr.bf16.mxu0 %v1956
    %2049 = vmatpush1.bf16.msra.mxu0 %v1955
    %2050 = vmatprep.subr.bf16.mxu0 %v1960
    %2051 = vmatpush1.bf16.msra.mxu0 %v1959
    %2052 = vmatprep.subr.bf16.mxu0 %v1964
    %2053 = vmatpush1.bf16.msra.mxu0 %v1963
    %2054 = vmatprep.subr.bf16.mxu0 0
    %2055 = vmatpush1.bf16.msra.mxu0 0
    %2056 = vmatprep.subr.bf16.mxu0 0
    %2057 = vmatpush1.bf16.msra.mxu0 0
    %2058 = vmatprep.subr.bf16.mxu0 0
    %2059 = vmatpush1.bf16.msra.mxu0 0
    %2060 = vmatprep.subr.bf16.mxu0 0
    %2061 = vmatpush1.bf16.msra.mxu0 0
    %2062 = vmatprep.subr.bf16.mxu0 0
    %2063 = vmatpush1.bf16.msra.mxu0 0
    %2064 = vmatprep.subr.bf16.mxu0 0
    %2065 = vmatpush1.bf16.msra.mxu0 0
    %2066 = vmatprep.subr.bf16.mxu0 0
    %2067 = vmatpush1.bf16.msra.mxu0 0
    %2068 = vmatprep.subr.bf16.mxu0 0
    %2069 = vmatpush1.bf16.msra.mxu0 0
    %2070 = vmatprep.mubr.bf16.mxu0 0
    %2071 = vmatmul.mubr.bf16.gmra.mrb[0].mxu0 %v1804
    %v2072 = vpop.f32.mrb[0].mxu0
    %v2073 = vadd.f32 0.0, %v2072
    %v2074 = vpop.f32.mrb[0].mxu0
    %v2075 = vadd.f32 0.0, %v2074
    %v2076 = vpop.f32.mrb[0].mxu0
    %v2077 = vpop.f32.mrb[0].mxu0
    %2078 = vdwg.mxu0
    %v2079 = vadd.f32 %v1800, %v2032
    %v2080 = vadd.f32 %v1801, %v2034
    %v2081 = vadd.f32 %v1802, %v2073
    %v2082 = vadd.f32 %v1803, %v2075
    %v2083 = vxor.u32 %v2079, 2147483648
    %v2084 = vmul.f32 %v2083, 1.442695
    %v2085 = vpow.pop %v2084
    %v2086 = vadd.f32 %v2085, 1.0
    %v2087 = vrcp.pop %v2086
    %v2088 = vmul.f32 1.0, %v2087
    %v2089 = vxor.u32 %v2080, 2147483648
    %v2090 = vmul.f32 %v2089, 1.442695
    %v2091 = vpow.pop %v2090
    %v2092 = vadd.f32 %v2091, 1.0
    %v2093 = vrcp.pop %v2092
    %v2094 = vmul.f32 1.0, %v2093
    %v2095 = vtanh.pop %v2081
    %v2096 = vxor.u32 %v2082, 2147483648
    %v2097 = vmul.f32 %v2096, 1.442695
    %v2098 = vpow.pop %v2097
    %v2099 = vadd.f32 %v2098, 1.0
    %v2100 = vrcp.pop %v2099
    %v2101 = vmul.f32 1.0, %v2100
    %v2102 = vmul.f32 %v2094, %v1796
    %v2103 = vmul.f32 %v2088, %v2095
    %v2104 = vadd.f32 %v2102, %v2103
    %v2105 = vtanh.pop %v2104
    %v2106 = vmul.f32 %v2101, %v2105
    %2107 = vst [vmem:[#allocation3 + $0x20] sm:$0xff] %v2106
    %v2108 = vld [vmem:[#allocation2 + $0xa0] sm:$0xff]
    %v2109 = vld [vmem:[#allocation2 + $0xa8] sm:$0xff]
    %v2110 = vld [vmem:[#allocation2 + $0xb0] sm:$0xff]
    %v2111 = vld [vmem:[#allocation2 + $0xb8] sm:$0xff]
    %v2112 = vpack.c.bf16 %v2106, %v2106
    %v2113 = vld [vmem:[#allocation6] sm:$0xff]
    %v2114 = vld [vmem:[#allocation6 + $0x8] sm:$0xff]
    %v2115 = vld [vmem:[#allocation6 + $0x10] sm:$0xff]
    %v2116 = vld [vmem:[#allocation6 + $0x18] sm:$0xff]
    %v2117 = vld [vmem:[#allocation6 + $0x20] sm:$0xff]
    %v2118 = vld [vmem:[#allocation6 + $0x28] sm:$0xff]
    %v2119 = vld [vmem:[#allocation6 + $0x30] sm:$0xff]
    %v2120 = vld [vmem:[#allocation6 + $0x38] sm:$0xff]
    %v2121 = vld [vmem:[#allocation6 + $0x40] sm:$0xff]
    %v2122 = vld [vmem:[#allocation6 + $0x48] sm:$0xff]
    %v2123 = vld [vmem:[#allocation6 + $0x50] sm:$0xff]
    %v2124 = vld [vmem:[#allocation6 + $0x58] sm:$0xff]
    %v2125 = vld [vmem:[#allocation6 + $0x60] sm:$0xff]
    %v2126 = vld [vmem:[#allocation6 + $0x68] sm:$0xff]
    %v2127 = vld [vmem:[#allocation6 + $0x70] sm:$0xff]
    %v2128 = vld [vmem:[#allocation6 + $0x78] sm:$0xff]
    %v2129 = vld [vmem:[#allocation6 + $0x80] sm:$0xff]
    %v2130 = vld [vmem:[#allocation6 + $0x88] sm:$0xff]
    %v2131 = vld [vmem:[#allocation6 + $0x90] sm:$0xff]
    %v2132 = vld [vmem:[#allocation6 + $0x98] sm:$0xff]
    %v2133 = vld [vmem:[#allocation6 + $0xa0] sm:$0xff]
    %v2134 = vld [vmem:[#allocation6 + $0xa8] sm:$0xff]
    %v2135 = vld [vmem:[#allocation6 + $0xb0] sm:$0xff]
    %v2136 = vld [vmem:[#allocation6 + $0xb8] sm:$0xff]
    %v2137 = vld [vmem:[#allocation6 + $0xc0] sm:$0xff]
    %v2138 = vld [vmem:[#allocation6 + $0xc8] sm:$0xff]
    %v2139 = vld [vmem:[#allocation6 + $0xd0] sm:$0xff]
    %v2140 = vld [vmem:[#allocation6 + $0xd8] sm:$0xff]
    %v2141 = vld [vmem:[#allocation6 + $0xe0] sm:$0xff]
    %v2142 = vld [vmem:[#allocation6 + $0xe8] sm:$0xff]
    %v2143 = vld [vmem:[#allocation6 + $0xf0] sm:$0xff]
    %v2144 = vld [vmem:[#allocation6 + $0xf8] sm:$0xff]
    %v2177 = vunpack.c.l.b16 %v2113
    %v2178 = vunpack.c.h.b16 %v2113
    %v2179 = vunpack.c.l.b16 %v2114
    %v2180 = vunpack.c.h.b16 %v2114
    %v2181 = vunpack.c.l.b16 %v2115
    %v2182 = vunpack.c.h.b16 %v2115
    %v2183 = vunpack.c.l.b16 %v2116
    %v2184 = vunpack.c.h.b16 %v2116
    %v2185 = vunpack.c.l.b16 %v2117
    %v2186 = vunpack.c.h.b16 %v2117
    %v2187 = vunpack.c.l.b16 %v2118
    %v2188 = vunpack.c.h.b16 %v2118
    %v2189 = vunpack.c.l.b16 %v2119
    %v2190 = vunpack.c.h.b16 %v2119
    %v2191 = vunpack.c.l.b16 %v2120
    %v2192 = vunpack.c.h.b16 %v2120
    %v2193 = vunpack.c.l.b16 %v2121
    %v2194 = vunpack.c.h.b16 %v2121
    %v2195 = vunpack.c.l.b16 %v2122
    %v2196 = vunpack.c.h.b16 %v2122
    %v2197 = vunpack.c.l.b16 %v2123
    %v2198 = vunpack.c.h.b16 %v2123
    %v2199 = vunpack.c.l.b16 %v2124
    %v2200 = vunpack.c.h.b16 %v2124
    %v2201 = vunpack.c.l.b16 %v2125
    %v2202 = vunpack.c.h.b16 %v2125
    %v2203 = vunpack.c.l.b16 %v2126
    %v2204 = vunpack.c.h.b16 %v2126
    %v2205 = vunpack.c.l.b16 %v2127
    %v2206 = vunpack.c.h.b16 %v2127
    %v2207 = vunpack.c.l.b16 %v2128
    %v2208 = vunpack.c.h.b16 %v2128
    %v2209 = vunpack.c.l.b16 %v2129
    %v2210 = vunpack.c.h.b16 %v2129
    %v2211 = vunpack.c.l.b16 %v2130
    %v2212 = vunpack.c.h.b16 %v2130
    %v2213 = vunpack.c.l.b16 %v2131
    %v2214 = vunpack.c.h.b16 %v2131
    %v2215 = vunpack.c.l.b16 %v2132
    %v2216 = vunpack.c.h.b16 %v2132
    %v2217 = vunpack.c.l.b16 %v2133
    %v2218 = vunpack.c.h.b16 %v2133
    %v2219 = vunpack.c.l.b16 %v2134
    %v2220 = vunpack.c.h.b16 %v2134
    %v2221 = vunpack.c.l.b16 %v2135
    %v2222 = vunpack.c.h.b16 %v2135
    %v2223 = vunpack.c.l.b16 %v2136
    %v2224 = vunpack.c.h.b16 %v2136
    %v2225 = vunpack.c.l.b16 %v2137
    %v2226 = vunpack.c.h.b16 %v2137
    %v2227 = vunpack.c.l.b16 %v2138
    %v2228 = vunpack.c.h.b16 %v2138
    %v2229 = vunpack.c.l.b16 %v2139
    %v2230 = vunpack.c.h.b16 %v2139
    %v2231 = vunpack.c.l.b16 %v2140
    %v2232 = vunpack.c.h.b16 %v2140
    %v2233 = vunpack.c.l.b16 %v2141
    %v2234 = vunpack.c.h.b16 %v2141
    %v2235 = vunpack.c.l.b16 %v2142
    %v2236 = vunpack.c.h.b16 %v2142
    %v2237 = vunpack.c.l.b16 %v2143
    %v2238 = vunpack.c.h.b16 %v2143
    %v2239 = vunpack.c.l.b16 %v2144
    %v2240 = vunpack.c.h.b16 %v2144
    %v2241 = vpack.c.b16 %v2181, %v2177
    %v2242 = vpack.c.b16 %v2182, %v2178
    %v2243 = vpack.c.b16 %v2183, %v2179
    %v2244 = vpack.c.b16 %v2184, %v2180
    %v2245 = vpack.c.b16 %v2189, %v2185
    %v2246 = vpack.c.b16 %v2190, %v2186
    %v2247 = vpack.c.b16 %v2191, %v2187
    %v2248 = vpack.c.b16 %v2192, %v2188
    %v2249 = vpack.c.b16 %v2197, %v2193
    %v2250 = vpack.c.b16 %v2198, %v2194
    %v2251 = vpack.c.b16 %v2199, %v2195
    %v2252 = vpack.c.b16 %v2200, %v2196
    %v2253 = vpack.c.b16 %v2205, %v2201
    %v2254 = vpack.c.b16 %v2206, %v2202
    %v2255 = vpack.c.b16 %v2207, %v2203
    %v2256 = vpack.c.b16 %v2208, %v2204
    %v2257 = vpack.c.b16 %v2213, %v2209
    %v2258 = vpack.c.b16 %v2214, %v2210
    %v2259 = vpack.c.b16 %v2215, %v2211
    %v2260 = vpack.c.b16 %v2216, %v2212
    %v2261 = vpack.c.b16 %v2221, %v2217
    %v2262 = vpack.c.b16 %v2222, %v2218
    %v2263 = vpack.c.b16 %v2223, %v2219
    %v2264 = vpack.c.b16 %v2224, %v2220
    %v2265 = vpack.c.b16 %v2229, %v2225
    %v2266 = vpack.c.b16 %v2230, %v2226
    %v2267 = vpack.c.b16 %v2231, %v2227
    %v2268 = vpack.c.b16 %v2232, %v2228
    %v2269 = vpack.c.b16 %v2237, %v2233
    %v2270 = vpack.c.b16 %v2238, %v2234
    %v2271 = vpack.c.b16 %v2239, %v2235
    %v2272 = vpack.c.b16 %v2240, %v2236
    %2305 = vmatprep.subr.bf16.mxu0 %v2242
    %2306 = vmatpush1.bf16.msra.mxu0 %v2241
    %2307 = vmatprep.subr.bf16.mxu0 %v2246
    %2308 = vmatpush1.bf16.msra.mxu0 %v2245
    %2309 = vmatprep.subr.bf16.mxu0 %v2250
    %2310 = vmatpush1.bf16.msra.mxu0 %v2249
    %2311 = vmatprep.subr.bf16.mxu0 %v2254
    %2312 = vmatpush1.bf16.msra.mxu0 %v2253
    %2313 = vmatprep.subr.bf16.mxu0 %v2258
    %2314 = vmatpush1.bf16.msra.mxu0 %v2257
    %2315 = vmatprep.subr.bf16.mxu0 %v2262
    %2316 = vmatpush1.bf16.msra.mxu0 %v2261
    %2317 = vmatprep.subr.bf16.mxu0 %v2266
    %2318 = vmatpush1.bf16.msra.mxu0 %v2265
    %2319 = vmatprep.subr.bf16.mxu0 %v2270
    %2320 = vmatpush1.bf16.msra.mxu0 %v2269
    %2321 = vmatprep.subr.bf16.mxu0 0
    %2322 = vmatpush1.bf16.msra.mxu0 0
    %2323 = vmatprep.subr.bf16.mxu0 0
    %2324 = vmatpush1.bf16.msra.mxu0 0
    %2325 = vmatprep.subr.bf16.mxu0 0
    %2326 = vmatpush1.bf16.msra.mxu0 0
    %2327 = vmatprep.subr.bf16.mxu0 0
    %2328 = vmatpush1.bf16.msra.mxu0 0
    %2329 = vmatprep.subr.bf16.mxu0 0
    %2330 = vmatpush1.bf16.msra.mxu0 0
    %2331 = vmatprep.subr.bf16.mxu0 0
    %2332 = vmatpush1.bf16.msra.mxu0 0
    %2333 = vmatprep.subr.bf16.mxu0 0
    %2334 = vmatpush1.bf16.msra.mxu0 0
    %2335 = vmatprep.subr.bf16.mxu0 0
    %2336 = vmatpush1.bf16.msra.mxu0 0
    %2337 = vmatprep.mubr.bf16.mxu0 0
    %2338 = vmatmul.mubr.bf16.gmra.mrb[0].mxu0 %v2112
    %v2339 = vpop.f32.mrb[0].mxu0
    %v2340 = vadd.f32 0.0, %v2339
    %v2341 = vpop.f32.mrb[0].mxu0
    %v2342 = vadd.f32 0.0, %v2341
    %v2343 = vpop.f32.mrb[0].mxu0
    %v2344 = vpop.f32.mrb[0].mxu0
    %2345 = vdwg.mxu0
    %2346 = vmatprep.subr.bf16.mxu0 %v2244
    %2347 = vmatpush1.bf16.msra.mxu0 %v2243
    %2348 = vmatprep.subr.bf16.mxu0 %v2248
    %2349 = vmatpush1.bf16.msra.mxu0 %v2247
    %2350 = vmatprep.subr.bf16.mxu0 %v2252
    %2351 = vmatpush1.bf16.msra.mxu0 %v2251
    %2352 = vmatprep.subr.bf16.mxu0 %v2256
    %2353 = vmatpush1.bf16.msra.mxu0 %v2255
    %2354 = vmatprep.subr.bf16.mxu0 %v2260
    %2355 = vmatpush1.bf16.msra.mxu0 %v2259
    %2356 = vmatprep.subr.bf16.mxu0 %v2264
    %2357 = vmatpush1.bf16.msra.mxu0 %v2263
    %2358 = vmatprep.subr.bf16.mxu0 %v2268
    %2359 = vmatpush1.bf16.msra.mxu0 %v2267
    %2360 = vmatprep.subr.bf16.mxu0 %v2272
    %2361 = vmatpush1.bf16.msra.mxu0 %v2271
    %2362 = vmatprep.subr.bf16.mxu0 0
    %2363 = vmatpush1.bf16.msra.mxu0 0
    %2364 = vmatprep.subr.bf16.mxu0 0
    %2365 = vmatpush1.bf16.msra.mxu0 0
    %2366 = vmatprep.subr.bf16.mxu0 0
    %2367 = vmatpush1.bf16.msra.mxu0 0
    %2368 = vmatprep.subr.bf16.mxu0 0
    %2369 = vmatpush1.bf16.msra.mxu0 0
    %2370 = vmatprep.subr.bf16.mxu0 0
    %2371 = vmatpush1.bf16.msra.mxu0 0
    %2372 = vmatprep.subr.bf16.mxu0 0
    %2373 = vmatpush1.bf16.msra.mxu0 0
    %2374 = vmatprep.subr.bf16.mxu0 0
    %2375 = vmatpush1.bf16.msra.mxu0 0
    %2376 = vmatprep.subr.bf16.mxu0 0
    %2377 = vmatpush1.bf16.msra.mxu0 0
    %2378 = vmatprep.mubr.bf16.mxu0 0
    %2379 = vmatmul.mubr.bf16.gmra.mrb[0].mxu0 %v2112
    %v2380 = vpop.f32.mrb[0].mxu0
    %v2381 = vadd.f32 0.0, %v2380
    %v2382 = vpop.f32.mrb[0].mxu0
    %v2383 = vadd.f32 0.0, %v2382
    %v2384 = vpop.f32.mrb[0].mxu0
    %v2385 = vpop.f32.mrb[0].mxu0
    %2386 = vdwg.mxu0
    %v2387 = vadd.f32 %v2108, %v2340
    %v2388 = vadd.f32 %v2109, %v2342
    %v2389 = vadd.f32 %v2110, %v2381
    %v2390 = vadd.f32 %v2111, %v2383
    %v2391 = vxor.u32 %v2387, 2147483648
    %v2392 = vmul.f32 %v2391, 1.442695
    %v2393 = vpow.pop %v2392
    %v2394 = vadd.f32 %v2393, 1.0
    %v2395 = vrcp.pop %v2394
    %v2396 = vmul.f32 1.0, %v2395
    %v2397 = vxor.u32 %v2388, 2147483648
    %v2398 = vmul.f32 %v2397, 1.442695
    %v2399 = vpow.pop %v2398
    %v2400 = vadd.f32 %v2399, 1.0
    %v2401 = vrcp.pop %v2400
    %v2402 = vmul.f32 1.0, %v2401
    %v2403 = vtanh.pop %v2389
    %v2404 = vxor.u32 %v2390, 2147483648
    %v2405 = vmul.f32 %v2404, 1.442695
    %v2406 = vpow.pop %v2405
    %v2407 = vadd.f32 %v2406, 1.0
    %v2408 = vrcp.pop %v2407
    %v2409 = vmul.f32 1.0, %v2408
    %v2410 = vmul.f32 %v2402, %v2104
    %v2411 = vmul.f32 %v2396, %v2403
    %v2412 = vadd.f32 %v2410, %v2411
    %v2413 = vtanh.pop %v2412
    %v2414 = vmul.f32 %v2409, %v2413
    %2415 = vst [vmem:[#allocation3 + $0x28] sm:$0xff] %v2414
    %v2416 = vld [vmem:[#allocation2 + $0xc0] sm:$0xff]
    %v2417 = vld [vmem:[#allocation2 + $0xc8] sm:$0xff]
    %v2418 = vld [vmem:[#allocation2 + $0xd0] sm:$0xff]
    %v2419 = vld [vmem:[#allocation2 + $0xd8] sm:$0xff]
    %v2420 = vpack.c.bf16 %v2414, %v2414
    %v2421 = vld [vmem:[#allocation6] sm:$0xff]
    %v2422 = vld [vmem:[#allocation6 + $0x8] sm:$0xff]
    %v2423 = vld [vmem:[#allocation6 + $0x10] sm:$0xff]
    %v2424 = vld [vmem:[#allocation6 + $0x18] sm:$0xff]
    %v2425 = vld [vmem:[#allocation6 + $0x20] sm:$0xff]
    %v2426 = vld [vmem:[#allocation6 + $0x28] sm:$0xff]
    %v2427 = vld [vmem:[#allocation6 + $0x30] sm:$0xff]
    %v2428 = vld [vmem:[#allocation6 + $0x38] sm:$0xff]
    %v2429 = vld [vmem:[#allocation6 + $0x40] sm:$0xff]
    %v2430 = vld [vmem:[#allocation6 + $0x48] sm:$0xff]
    %v2431 = vld [vmem:[#allocation6 + $0x50] sm:$0xff]
    %v2432 = vld [vmem:[#allocation6 + $0x58] sm:$0xff]
    %v2433 = vld [vmem:[#allocation6 + $0x60] sm:$0xff]
    %v2434 = vld [vmem:[#allocation6 + $0x68] sm:$0xff]
    %v2435 = vld [vmem:[#allocation6 + $0x70] sm:$0xff]
    %v2436 = vld [vmem:[#allocation6 + $0x78] sm:$0xff]
    %v2437 = vld [vmem:[#allocation6 + $0x80] sm:$0xff]
    %v2438 = vld [vmem:[#allocation6 + $0x88] sm:$0xff]
    %v2439 = vld [vmem:[#allocation6 + $0x90] sm:$0xff]
    %v2440 = vld [vmem:[#allocation6 + $0x98] sm:$0xff]
    %v2441 = vld [vmem:[#allocation6 + $0xa0] sm:$0xff]
    %v2442 = vld [vmem:[#allocation6 + $0xa8] sm:$0xff]
    %v2443 = vld [vmem:[#allocation6 + $0xb0] sm:$0xff]
    %v2444 = vld [vmem:[#allocation6 + $0xb8] sm:$0xff]
    %v2445 = vld [vmem:[#allocation6 + $0xc0] sm:$0xff]
    %v2446 = vld [vmem:[#allocation6 + $0xc8] sm:$0xff]
    %v2447 = vld [vmem:[#allocation6 + $0xd0] sm:$0xff]
    %v2448 = vld [vmem:[#allocation6 + $0xd8] sm:$0xff]
    %v2449 = vld [vmem:[#allocation6 + $0xe0] sm:$0xff]
    %v2450 = vld [vmem:[#allocation6 + $0xe8] sm:$0xff]
    %v2451 = vld [vmem:[#allocation6 + $0xf0] sm:$0xff]
    %v2452 = vld [vmem:[#allocation6 + $0xf8] sm:$0xff]
    %v2485 = vunpack.c.l.b16 %v2421
    %v2486 = vunpack.c.h.b16 %v2421
    %v2487 = vunpack.c.l.b16 %v2422
    %v2488 = vunpack.c.h.b16 %v2422
    %v2489 = vunpack.c.l.b16 %v2423
    %v2490 = vunpack.c.h.b16 %v2423
    %v2491 = vunpack.c.l.b16 %v2424
    %v2492 = vunpack.c.h.b16 %v2424
    %v2493 = vunpack.c.l.b16 %v2425
    %v2494 = vunpack.c.h.b16 %v2425
    %v2495 = vunpack.c.l.b16 %v2426
    %v2496 = vunpack.c.h.b16 %v2426
    %v2497 = vunpack.c.l.b16 %v2427
    %v2498 = vunpack.c.h.b16 %v2427
    %v2499 = vunpack.c.l.b16 %v2428
    %v2500 = vunpack.c.h.b16 %v2428
    %v2501 = vunpack.c.l.b16 %v2429
    %v2502 = vunpack.c.h.b16 %v2429
    %v2503 = vunpack.c.l.b16 %v2430
    %v2504 = vunpack.c.h.b16 %v2430
    %v2505 = vunpack.c.l.b16 %v2431
    %v2506 = vunpack.c.h.b16 %v2431
    %v2507 = vunpack.c.l.b16 %v2432
    %v2508 = vunpack.c.h.b16 %v2432
    %v2509 = vunpack.c.l.b16 %v2433
    %v2510 = vunpack.c.h.b16 %v2433
    %v2511 = vunpack.c.l.b16 %v2434
    %v2512 = vunpack.c.h.b16 %v2434
    %v2513 = vunpack.c.l.b16 %v2435
    %v2514 = vunpack.c.h.b16 %v2435
    %v2515 = vunpack.c.l.b16 %v2436
    %v2516 = vunpack.c.h.b16 %v2436
    %v2517 = vunpack.c.l.b16 %v2437
    %v2518 = vunpack.c.h.b16 %v2437
    %v2519 = vunpack.c.l.b16 %v2438
    %v2520 = vunpack.c.h.b16 %v2438
    %v2521 = vunpack.c.l.b16 %v2439
    %v2522 = vunpack.c.h.b16 %v2439
    %v2523 = vunpack.c.l.b16 %v2440
    %v2524 = vunpack.c.h.b16 %v2440
    %v2525 = vunpack.c.l.b16 %v2441
    %v2526 = vunpack.c.h.b16 %v2441
    %v2527 = vunpack.c.l.b16 %v2442
    %v2528 = vunpack.c.h.b16 %v2442
    %v2529 = vunpack.c.l.b16 %v2443
    %v2530 = vunpack.c.h.b16 %v2443
    %v2531 = vunpack.c.l.b16 %v2444
    %v2532 = vunpack.c.h.b16 %v2444
    %v2533 = vunpack.c.l.b16 %v2445
    %v2534 = vunpack.c.h.b16 %v2445
    %v2535 = vunpack.c.l.b16 %v2446
    %v2536 = vunpack.c.h.b16 %v2446
    %v2537 = vunpack.c.l.b16 %v2447
    %v2538 = vunpack.c.h.b16 %v2447
    %v2539 = vunpack.c.l.b16 %v2448
    %v2540 = vunpack.c.h.b16 %v2448
    %v2541 = vunpack.c.l.b16 %v2449
    %v2542 = vunpack.c.h.b16 %v2449
    %v2543 = vunpack.c.l.b16 %v2450
    %v2544 = vunpack.c.h.b16 %v2450
    %v2545 = vunpack.c.l.b16 %v2451
    %v2546 = vunpack.c.h.b16 %v2451
    %v2547 = vunpack.c.l.b16 %v2452
    %v2548 = vunpack.c.h.b16 %v2452
    %v2549 = vpack.c.b16 %v2489, %v2485
    %v2550 = vpack.c.b16 %v2490, %v2486
    %v2551 = vpack.c.b16 %v2491, %v2487
    %v2552 = vpack.c.b16 %v2492, %v2488
    %v2553 = vpack.c.b16 %v2497, %v2493
    %v2554 = vpack.c.b16 %v2498, %v2494
    %v2555 = vpack.c.b16 %v2499, %v2495
    %v2556 = vpack.c.b16 %v2500, %v2496
    %v2557 = vpack.c.b16 %v2505, %v2501
    %v2558 = vpack.c.b16 %v2506, %v2502
    %v2559 = vpack.c.b16 %v2507, %v2503
    %v2560 = vpack.c.b16 %v2508, %v2504
    %v2561 = vpack.c.b16 %v2513, %v2509
    %v2562 = vpack.c.b16 %v2514, %v2510
    %v2563 = vpack.c.b16 %v2515, %v2511
    %v2564 = vpack.c.b16 %v2516, %v2512
    %v2565 = vpack.c.b16 %v2521, %v2517
    %v2566 = vpack.c.b16 %v2522, %v2518
    %v2567 = vpack.c.b16 %v2523, %v2519
    %v2568 = vpack.c.b16 %v2524, %v2520
    %v2569 = vpack.c.b16 %v2529, %v2525
    %v2570 = vpack.c.b16 %v2530, %v2526
    %v2571 = vpack.c.b16 %v2531, %v2527
    %v2572 = vpack.c.b16 %v2532, %v2528
    %v2573 = vpack.c.b16 %v2537, %v2533
    %v2574 = vpack.c.b16 %v2538, %v2534
    %v2575 = vpack.c.b16 %v2539, %v2535
    %v2576 = vpack.c.b16 %v2540, %v2536
    %v2577 = vpack.c.b16 %v2545, %v2541
    %v2578 = vpack.c.b16 %v2546, %v2542
    %v2579 = vpack.c.b16 %v2547, %v2543
    %v2580 = vpack.c.b16 %v2548, %v2544
    %2613 = vmatprep.subr.bf16.mxu0 %v2550
    %2614 = vmatpush1.bf16.msra.mxu0 %v2549
    %2615 = vmatprep.subr.bf16.mxu0 %v2554
    %2616 = vmatpush1.bf16.msra.mxu0 %v2553
    %2617 = vmatprep.subr.bf16.mxu0 %v2558
    %2618 = vmatpush1.bf16.msra.mxu0 %v2557
    %2619 = vmatprep.subr.bf16.mxu0 %v2562
    %2620 = vmatpush1.bf16.msra.mxu0 %v2561
    %2621 = vmatprep.subr.bf16.mxu0 %v2566
    %2622 = vmatpush1.bf16.msra.mxu0 %v2565
    %2623 = vmatprep.subr.bf16.mxu0 %v2570
    %2624 = vmatpush1.bf16.msra.mxu0 %v2569
    %2625 = vmatprep.subr.bf16.mxu0 %v2574
    %2626 = vmatpush1.bf16.msra.mxu0 %v2573
    %2627 = vmatprep.subr.bf16.mxu0 %v2578
    %2628 = vmatpush1.bf16.msra.mxu0 %v2577
    %2629 = vmatprep.subr.bf16.mxu0 0
    %2630 = vmatpush1.bf16.msra.mxu0 0
    %2631 = vmatprep.subr.bf16.mxu0 0
    %2632 = vmatpush1.bf16.msra.mxu0 0
    %2633 = vmatprep.subr.bf16.mxu0 0
    %2634 = vmatpush1.bf16.msra.mxu0 0
    %2635 = vmatprep.subr.bf16.mxu0 0
    %2636 = vmatpush1.bf16.msra.mxu0 0
    %2637 = vmatprep.subr.bf16.mxu0 0
    %2638 = vmatpush1.bf16.msra.mxu0 0
    %2639 = vmatprep.subr.bf16.mxu0 0
    %2640 = vmatpush1.bf16.msra.mxu0 0
    %2641 = vmatprep.subr.bf16.mxu0 0
    %2642 = vmatpush1.bf16.msra.mxu0 0
    %2643 = vmatprep.subr.bf16.mxu0 0
    %2644 = vmatpush1.bf16.msra.mxu0 0
    %2645 = vmatprep.mubr.bf16.mxu0 0
    %2646 = vmatmul.mubr.bf16.gmra.mrb[0].mxu0 %v2420
    %v2647 = vpop.f32.mrb[0].mxu0
    %v2648 = vadd.f32 0.0, %v2647
    %v2649 = vpop.f32.mrb[0].mxu0
    %v2650 = vadd.f32 0.0, %v2649
    %v2651 = vpop.f32.mrb[0].mxu0
    %v2652 = vpop.f32.mrb[0].mxu0
    %2653 = vdwg.mxu0
    %2654 = vmatprep.subr.bf16.mxu0 %v2552
    %2655 = vmatpush1.bf16.msra.mxu0 %v2551
    %2656 = vmatprep.subr.bf16.mxu0 %v2556
    %2657 = vmatpush1.bf16.msra.mxu0 %v2555
    %2658 = vmatprep.subr.bf16.mxu0 %v2560
    %2659 = vmatpush1.bf16.msra.mxu0 %v2559
    %2660 = vmatprep.subr.bf16.mxu0 %v2564
    %2661 = vmatpush1.bf16.msra.mxu0 %v2563
    %2662 = vmatprep.subr.bf16.mxu0 %v2568
    %2663 = vmatpush1.bf16.msra.mxu0 %v2567
    %2664 = vmatprep.subr.bf16.mxu0 %v2572
    %2665 = vmatpush1.bf16.msra.mxu0 %v2571
    %2666 = vmatprep.subr.bf16.mxu0 %v2576
    %2667 = vmatpush1.bf16.msra.mxu0 %v2575
    %2668 = vmatprep.subr.bf16.mxu0 %v2580
    %2669 = vmatpush1.bf16.msra.mxu0 %v2579
    %2670 = vmatprep.subr.bf16.mxu0 0
    %2671 = vmatpush1.bf16.msra.mxu0 0
    %2672 = vmatprep.subr.bf16.mxu0 0
    %2673 = vmatpush1.bf16.msra.mxu0 0
    %2674 = vmatprep.subr.bf16.mxu0 0
    %2675 = vmatpush1.bf16.msra.mxu0 0
    %2676 = vmatprep.subr.bf16.mxu0 0
    %2677 = vmatpush1.bf16.msra.mxu0 0
    %2678 = vmatprep.subr.bf16.mxu0 0
    %2679 = vmatpush1.bf16.msra.mxu0 0
    %2680 = vmatprep.subr.bf16.mxu0 0
    %2681 = vmatpush1.bf16.msra.mxu0 0
    %2682 = vmatprep.subr.bf16.mxu0 0
    %2683 = vmatpush1.bf16.msra.mxu0 0
    %2684 = vmatprep.subr.bf16.mxu0 0
    %2685 = vmatpush1.bf16.msra.mxu0 0
    %2686 = vmatprep.mubr.bf16.mxu0 0
    %2687 = vmatmul.mubr.bf16.gmra.mrb[0].mxu0 %v2420
    %v2688 = vpop.f32.mrb[0].mxu0
    %v2689 = vadd.f32 0.0, %v2688
    %v2690 = vpop.f32.mrb[0].mxu0
    %v2691 = vadd.f32 0.0, %v2690
    %v2692 = vpop.f32.mrb[0].mxu0
    %v2693 = vpop.f32.mrb[0].mxu0
    %2694 = vdwg.mxu0
    %v2695 = vadd.f32 %v2416, %v2648
    %v2696 = vadd.f32 %v2417, %v2650
    %v2697 = vadd.f32 %v2418, %v2689
    %v2698 = vadd.f32 %v2419, %v2691
    %v2699 = vxor.u32 %v2695, 2147483648
    %v2700 = vmul.f32 %v2699, 1.442695
    %v2701 = vpow.pop %v2700
    %v2702 = vadd.f32 %v2701, 1.0
    %v2703 = vrcp.pop %v2702
    %v2704 = vmul.f32 1.0, %v2703
    %v2705 = vxor.u32 %v2696, 2147483648
    %v2706 = vmul.f32 %v2705, 1.442695
    %v2707 = vpow.pop %v2706
    %v2708 = vadd.f32 %v2707, 1.0
    %v2709 = vrcp.pop %v2708
    %v2710 = vmul.f32 1.0, %v2709
    %v2711 = vtanh.pop %v2697
    %v2712 = vxor.u32 %v2698, 2147483648
    %v2713 = vmul.f32 %v2712, 1.442695
    %v2714 = vpow.pop %v2713
    %v2715 = vadd.f32 %v2714, 1.0
    %v2716 = vrcp.pop %v2715
    %v2717 = vmul.f32 1.0, %v2716
    %v2718 = vmul.f32 %v2710, %v2412
    %v2719 = vmul.f32 %v2704, %v2711
    %v2720 = vadd.f32 %v2718, %v2719
    %v2721 = vtanh.pop %v2720
    %v2722 = vmul.f32 %v2717, %v2721
    %2723 = vst [vmem:[#allocation3 + $0x30] sm:$0xff] %v2722
    %v2724 = vld [vmem:[#allocation2 + $0xe0] sm:$0xff]
    %v2725 = vld [vmem:[#allocation2 + $0xe8] sm:$0xff]
    %v2726 = vld [vmem:[#allocation2 + $0xf0] sm:$0xff]
    %v2727 = vld [vmem:[#allocation2 + $0xf8] sm:$0xff]
    %v2728 = vpack.c.bf16 %v2722, %v2722
    %v2729 = vld [vmem:[#allocation6] sm:$0xff]
    %v2730 = vld [vmem:[#allocation6 + $0x8] sm:$0xff]
    %v2731 = vld [vmem:[#allocation6 + $0x10] sm:$0xff]
    %v2732 = vld [vmem:[#allocation6 + $0x18] sm:$0xff]
    %v2733 = vld [vmem:[#allocation6 + $0x20] sm:$0xff]
    %v2734 = vld [vmem:[#allocation6 + $0x28] sm:$0xff]
    %v2735 = vld [vmem:[#allocation6 + $0x30] sm:$0xff]
    %v2736 = vld [vmem:[#allocation6 + $0x38] sm:$0xff]
    %v2737 = vld [vmem:[#allocation6 + $0x40] sm:$0xff]
    %v2738 = vld [vmem:[#allocation6 + $0x48] sm:$0xff]
    %v2739 = vld [vmem:[#allocation6 + $0x50] sm:$0xff]
    %v2740 = vld [vmem:[#allocation6 + $0x58] sm:$0xff]
    %v2741 = vld [vmem:[#allocation6 + $0x60] sm:$0xff]
    %v2742 = vld [vmem:[#allocation6 + $0x68] sm:$0xff]
    %v2743 = vld [vmem:[#allocation6 + $0x70] sm:$0xff]
    %v2744 = vld [vmem:[#allocation6 + $0x78] sm:$0xff]
    %v2745 = vld [vmem:[#allocation6 + $0x80] sm:$0xff]
    %v2746 = vld [vmem:[#allocation6 + $0x88] sm:$0xff]
    %v2747 = vld [vmem:[#allocation6 + $0x90] sm:$0xff]
    %v2748 = vld [vmem:[#allocation6 + $0x98] sm:$0xff]
    %v2749 = vld [vmem:[#allocation6 + $0xa0] sm:$0xff]
    %v2750 = vld [vmem:[#allocation6 + $0xa8] sm:$0xff]
    %v2751 = vld [vmem:[#allocation6 + $0xb0] sm:$0xff]
    %v2752 = vld [vmem:[#allocation6 + $0xb8] sm:$0xff]
    %v2753 = vld [vmem:[#allocation6 + $0xc0] sm:$0xff]
    %v2754 = vld [vmem:[#allocation6 + $0xc8] sm:$0xff]
    %v2755 = vld [vmem:[#allocation6 + $0xd0] sm:$0xff]
    %v2756 = vld [vmem:[#allocation6 + $0xd8] sm:$0xff]
    %v2757 = vld [vmem:[#allocation6 + $0xe0] sm:$0xff]
    %v2758 = vld [vmem:[#allocation6 + $0xe8] sm:$0xff]
    %v2759 = vld [vmem:[#allocation6 + $0xf0] sm:$0xff]
    %v2760 = vld [vmem:[#allocation6 + $0xf8] sm:$0xff]
    %v2793 = vunpack.c.l.b16 %v2729
    %v2794 = vunpack.c.h.b16 %v2729
    %v2795 = vunpack.c.l.b16 %v2730
    %v2796 = vunpack.c.h.b16 %v2730
    %v2797 = vunpack.c.l.b16 %v2731
    %v2798 = vunpack.c.h.b16 %v2731
    %v2799 = vunpack.c.l.b16 %v2732
    %v2800 = vunpack.c.h.b16 %v2732
    %v2801 = vunpack.c.l.b16 %v2733
    %v2802 = vunpack.c.h.b16 %v2733
    %v2803 = vunpack.c.l.b16 %v2734
    %v2804 = vunpack.c.h.b16 %v2734
    %v2805 = vunpack.c.l.b16 %v2735
    %v2806 = vunpack.c.h.b16 %v2735
    %v2807 = vunpack.c.l.b16 %v2736
    %v2808 = vunpack.c.h.b16 %v2736
    %v2809 = vunpack.c.l.b16 %v2737
    %v2810 = vunpack.c.h.b16 %v2737
    %v2811 = vunpack.c.l.b16 %v2738
    %v2812 = vunpack.c.h.b16 %v2738
    %v2813 = vunpack.c.l.b16 %v2739
    %v2814 = vunpack.c.h.b16 %v2739
    %v2815 = vunpack.c.l.b16 %v2740
    %v2816 = vunpack.c.h.b16 %v2740
    %v2817 = vunpack.c.l.b16 %v2741
    %v2818 = vunpack.c.h.b16 %v2741
    %v2819 = vunpack.c.l.b16 %v2742
    %v2820 = vunpack.c.h.b16 %v2742
    %v2821 = vunpack.c.l.b16 %v2743
    %v2822 = vunpack.c.h.b16 %v2743
    %v2823 = vunpack.c.l.b16 %v2744
    %v2824 = vunpack.c.h.b16 %v2744
    %v2825 = vunpack.c.l.b16 %v2745
    %v2826 = vunpack.c.h.b16 %v2745
    %v2827 = vunpack.c.l.b16 %v2746
    %v2828 = vunpack.c.h.b16 %v2746
    %v2829 = vunpack.c.l.b16 %v2747
    %v2830 = vunpack.c.h.b16 %v2747
    %v2831 = vunpack.c.l.b16 %v2748
    %v2832 = vunpack.c.h.b16 %v2748
    %v2833 = vunpack.c.l.b16 %v2749
    %v2834 = vunpack.c.h.b16 %v2749
    %v2835 = vunpack.c.l.b16 %v2750
    %v2836 = vunpack.c.h.b16 %v2750
    %v2837 = vunpack.c.l.b16 %v2751
    %v2838 = vunpack.c.h.b16 %v2751
    %v2839 = vunpack.c.l.b16 %v2752
    %v2840 = vunpack.c.h.b16 %v2752
    %v2841 = vunpack.c.l.b16 %v2753
    %v2842 = vunpack.c.h.b16 %v2753
    %v2843 = vunpack.c.l.b16 %v2754
    %v2844 = vunpack.c.h.b16 %v2754
    %v2845 = vunpack.c.l.b16 %v2755
    %v2846 = vunpack.c.h.b16 %v2755
    %v2847 = vunpack.c.l.b16 %v2756
    %v2848 = vunpack.c.h.b16 %v2756
    %v2849 = vunpack.c.l.b16 %v2757
    %v2850 = vunpack.c.h.b16 %v2757
    %v2851 = vunpack.c.l.b16 %v2758
    %v2852 = vunpack.c.h.b16 %v2758
    %v2853 = vunpack.c.l.b16 %v2759
    %v2854 = vunpack.c.h.b16 %v2759
    %v2855 = vunpack.c.l.b16 %v2760
    %v2856 = vunpack.c.h.b16 %v2760
    %v2857 = vpack.c.b16 %v2797, %v2793
    %v2858 = vpack.c.b16 %v2798, %v2794
    %v2859 = vpack.c.b16 %v2799, %v2795
    %v2860 = vpack.c.b16 %v2800, %v2796
    %v2861 = vpack.c.b16 %v2805, %v2801
    %v2862 = vpack.c.b16 %v2806, %v2802
    %v2863 = vpack.c.b16 %v2807, %v2803
    %v2864 = vpack.c.b16 %v2808, %v2804
    %v2865 = vpack.c.b16 %v2813, %v2809
    %v2866 = vpack.c.b16 %v2814, %v2810
    %v2867 = vpack.c.b16 %v2815, %v2811
    %v2868 = vpack.c.b16 %v2816, %v2812
    %v2869 = vpack.c.b16 %v2821, %v2817
    %v2870 = vpack.c.b16 %v2822, %v2818
    %v2871 = vpack.c.b16 %v2823, %v2819
    %v2872 = vpack.c.b16 %v2824, %v2820
    %v2873 = vpack.c.b16 %v2829, %v2825
    %v2874 = vpack.c.b16 %v2830, %v2826
    %v2875 = vpack.c.b16 %v2831, %v2827
    %v2876 = vpack.c.b16 %v2832, %v2828
    %v2877 = vpack.c.b16 %v2837, %v2833
    %v2878 = vpack.c.b16 %v2838, %v2834
    %v2879 = vpack.c.b16 %v2839, %v2835
    %v2880 = vpack.c.b16 %v2840, %v2836
    %v2881 = vpack.c.b16 %v2845, %v2841
    %v2882 = vpack.c.b16 %v2846, %v2842
    %v2883 = vpack.c.b16 %v2847, %v2843
    %v2884 = vpack.c.b16 %v2848, %v2844
    %v2885 = vpack.c.b16 %v2853, %v2849
    %v2886 = vpack.c.b16 %v2854, %v2850
    %v2887 = vpack.c.b16 %v2855, %v2851
    %v2888 = vpack.c.b16 %v2856, %v2852
    %2921 = vmatprep.subr.bf16.mxu0 %v2858
    %2922 = vmatpush1.bf16.msra.mxu0 %v2857
    %2923 = vmatprep.subr.bf16.mxu0 %v2862
    %2924 = vmatpush1.bf16.msra.mxu0 %v2861
    %2925 = vmatprep.subr.bf16.mxu0 %v2866
    %2926 = vmatpush1.bf16.msra.mxu0 %v2865
    %2927 = vmatprep.subr.bf16.mxu0 %v2870
    %2928 = vmatpush1.bf16.msra.mxu0 %v2869
    %2929 = vmatprep.subr.bf16.mxu0 %v2874
    %2930 = vmatpush1.bf16.msra.mxu0 %v2873
    %2931 = vmatprep.subr.bf16.mxu0 %v2878
    %2932 = vmatpush1.bf16.msra.mxu0 %v2877
    %2933 = vmatprep.subr.bf16.mxu0 %v2882
    %2934 = vmatpush1.bf16.msra.mxu0 %v2881
    %2935 = vmatprep.subr.bf16.mxu0 %v2886
    %2936 = vmatpush1.bf16.msra.mxu0 %v2885
    %2937 = vmatprep.subr.bf16.mxu0 0
    %2938 = vmatpush1.bf16.msra.mxu0 0
    %2939 = vmatprep.subr.bf16.mxu0 0
    %2940 = vmatpush1.bf16.msra.mxu0 0
    %2941 = vmatprep.subr.bf16.mxu0 0
    %2942 = vmatpush1.bf16.msra.mxu0 0
    %2943 = vmatprep.subr.bf16.mxu0 0
    %2944 = vmatpush1.bf16.msra.mxu0 0
    %2945 = vmatprep.subr.bf16.mxu0 0
    %2946 = vmatpush1.bf16.msra.mxu0 0
    %2947 = vmatprep.subr.bf16.mxu0 0
    %2948 = vmatpush1.bf16.msra.mxu0 0
    %2949 = vmatprep.subr.bf16.mxu0 0
    %2950 = vmatpush1.bf16.msra.mxu0 0
    %2951 = vmatprep.subr.bf16.mxu0 0
    %2952 = vmatpush1.bf16.msra.mxu0 0
    %2953 = vmatprep.mubr.bf16.mxu0 0
    %2954 = vmatmul.mubr.bf16.gmra.mrb[0].mxu0 %v2728
    %v2955 = vpop.f32.mrb[0].mxu0
    %v2956 = vadd.f32 0.0, %v2955
    %v2957 = vpop.f32.mrb[0].mxu0
    %v2958 = vadd.f32 0.0, %v2957
    %v2959 = vpop.f32.mrb[0].mxu0
    %v2960 = vpop.f32.mrb[0].mxu0
    %2961 = vdwg.mxu0
    %2962 = vmatprep.subr.bf16.mxu0 %v2860
    %2963 = vmatpush1.bf16.msra.mxu0 %v2859
    %2964 = vmatprep.subr.bf16.mxu0 %v2864
    %2965 = vmatpush1.bf16.msra.mxu0 %v2863
    %2966 = vmatprep.subr.bf16.mxu0 %v2868
    %2967 = vmatpush1.bf16.msra.mxu0 %v2867
    %2968 = vmatprep.subr.bf16.mxu0 %v2872
    %2969 = vmatpush1.bf16.msra.mxu0 %v2871
    %2970 = vmatprep.subr.bf16.mxu0 %v2876
    %2971 = vmatpush1.bf16.msra.mxu0 %v2875
    %2972 = vmatprep.subr.bf16.mxu0 %v2880
    %2973 = vmatpush1.bf16.msra.mxu0 %v2879
    %2974 = vmatprep.subr.bf16.mxu0 %v2884
    %2975 = vmatpush1.bf16.msra.mxu0 %v2883
    %2976 = vmatprep.subr.bf16.mxu0 %v2888
    %2977 = vmatpush1.bf16.msra.mxu0 %v2887
    %2978 = vmatprep.subr.bf16.mxu0 0
    %2979 = vmatpush1.bf16.msra.mxu0 0
    %2980 = vmatprep.subr.bf16.mxu0 0
    %2981 = vmatpush1.bf16.msra.mxu0 0
    %2982 = vmatprep.subr.bf16.mxu0 0
    %2983 = vmatpush1.bf16.msra.mxu0 0
    %2984 = vmatprep.subr.bf16.mxu0 0
    %2985 = vmatpush1.bf16.msra.mxu0 0
    %2986 = vmatprep.subr.bf16.mxu0 0
    %2987 = vmatpush1.bf16.msra.mxu0 0
    %2988 = vmatprep.subr.bf16.mxu0 0
    %2989 = vmatpush1.bf16.msra.mxu0 0
    %2990 = vmatprep.subr.bf16.mxu0 0
    %2991 = vmatpush1.bf16.msra.mxu0 0
    %2992 = vmatprep.subr.bf16.mxu0 0
    %2993 = vmatpush1.bf16.msra.mxu0 0
    %2994 = vmatprep.mubr.bf16.mxu0 0
    %2995 = vmatmul.mubr.bf16.gmra.mrb[0].mxu0 %v2728
    %v2996 = vpop.f32.mrb[0].mxu0
    %v2997 = vadd.f32 0.0, %v2996
    %v2998 = vpop.f32.mrb[0].mxu0
    %v2999 = vadd.f32 0.0, %v2998
    %v3000 = vpop.f32.mrb[0].mxu0
    %v3001 = vpop.f32.mrb[0].mxu0
    %3002 = vdwg.mxu0
    %v3003 = vadd.f32 %v2724, %v2956
    %v3004 = vadd.f32 %v2725, %v2958
    %v3005 = vadd.f32 %v2726, %v2997
    %v3006 = vadd.f32 %v2727, %v2999
    %v3007 = vxor.u32 %v3003, 2147483648
    %v3008 = vmul.f32 %v3007, 1.442695
    %v3009 = vpow.pop %v3008
    %v3010 = vadd.f32 %v3009, 1.0
    %v3011 = vrcp.pop %v3010
    %v3012 = vmul.f32 1.0, %v3011
    %v3013 = vxor.u32 %v3004, 2147483648
    %v3014 = vmul.f32 %v3013, 1.442695
    %v3015 = vpow.pop %v3014
    %v3016 = vadd.f32 %v3015, 1.0
    %v3017 = vrcp.pop %v3016
    %v3018 = vmul.f32 1.0, %v3017
    %v3019 = vtanh.pop %v3005
    %v3020 = vxor.u32 %v3006, 2147483648
    %v3021 = vmul.f32 %v3020, 1.442695
    %v3022 = vpow.pop %v3021
    %v3023 = vadd.f32 %v3022, 1.0
    %v3024 = vrcp.pop %v3023
    %v3025 = vmul.f32 1.0, %v3024
    %v3026 = vmul.f32 %v3018, %v2720
    %v3027 = vmul.f32 %v3012, %v3019
    %v3028 = vadd.f32 %v3026, %v3027
    %v3029 = vtanh.pop %v3028
    %v3030 = vmul.f32 %v3025, %v3029
    %3031 = vst [vmem:[#allocation3 + $0x38] sm:$0xff] %v3030
    %v3032 = vld [vmem:[#allocation3] sm:$0xff]
    %v3033 = vld [vmem:[#allocation3 + $0x8] sm:$0xff]
    %v3034 = vld [vmem:[#allocation3 + $0x10] sm:$0xff]
    %v3035 = vld [vmem:[#allocation3 + $0x18] sm:$0xff]
    %v3036 = vld [vmem:[#allocation3 + $0x20] sm:$0xff]
    %v3037 = vld [vmem:[#allocation3 + $0x28] sm:$0xff]
    %v3038 = vld [vmem:[#allocation3 + $0x30] sm:$0xff]
    %v3039 = vld [vmem:[#allocation3 + $0x38] sm:$0xff]
    %v3040 = vmax.f32 %v3032, 0.0
    %v3041 = vmax.f32 %v3033, 0.0
    %v3042 = vmax.f32 %v3034, 0.0
    %v3043 = vmax.f32 %v3035, 0.0
    %v3044 = vmax.f32 %v3036, 0.0
    %v3045 = vmax.f32 %v3037, 0.0
    %v3046 = vmax.f32 %v3038, 0.0
    %v3047 = vmax.f32 %v3039, 0.0
    %v3048 = vld [vmem:[#allocation8] sm:$0xff]
    %v3049 = vld [vmem:[#allocation8 + $0x8] sm:$0xff]
    %v3050 = vld [vmem:[#allocation8 + $0x10] sm:$0xff]
    %v3051 = vld [vmem:[#allocation8 + $0x18] sm:$0xff]
    %v3052 = vld [vmem:[#allocation8 + $0x20] sm:$0xff]
    %v3053 = vld [vmem:[#allocation8 + $0x28] sm:$0xff]
    %v3054 = vld [vmem:[#allocation8 + $0x30] sm:$0xff]
    %v3055 = vld [vmem:[#allocation8 + $0x38] sm:$0xff]
    %v3056 = vld [vmem:[#allocation8 + $0x40] sm:$0xff]
    %v3057 = vld [vmem:[#allocation8 + $0x48] sm:$0xff]
    %v3058 = vld [vmem:[#allocation8 + $0x50] sm:$0xff]
    %v3059 = vld [vmem:[#allocation8 + $0x58] sm:$0xff]
    %v3060 = vld [vmem:[#allocation8 + $0x60] sm:$0xff]
    %v3061 = vld [vmem:[#allocation8 + $0x68] sm:$0xff]
    %v3062 = vld [vmem:[#allocation8 + $0x70] sm:$0xff]
    %v3063 = vld [vmem:[#allocation8 + $0x78] sm:$0xff]
    %v3064 = vld [vmem:[%s7] sm:$0x1]
    %v3066 = vlaneseq
    %v3067 = vshrl.u32 %v3066, 7
    %v3068 = vsub.s32 0, %v3067
    %v3069 = vrot.slane %v3064, %v3068
    %3071 = vmatprep.subr.mxu0 0.0
    %3072 = vmatpush1.msra.mxu0 %v3048
    %3073 = vmatprep.subr.mxu0 0.0
    %3074 = vmatpush1.msra.mxu0 %v3049
    %3075 = vmatprep.subr.mxu0 0.0
    %3076 = vmatpush1.msra.mxu0 %v3050
    %3077 = vmatprep.subr.mxu0 0.0
    %3078 = vmatpush1.msra.mxu0 %v3051
    %3079 = vmatprep.subr.mxu0 0.0
    %3080 = vmatpush1.msra.mxu0 %v3052
    %3081 = vmatprep.subr.mxu0 0.0
    %3082 = vmatpush1.msra.mxu0 %v3053
    %3083 = vmatprep.subr.mxu0 0.0
    %3084 = vmatpush1.msra.mxu0 %v3054
    %3085 = vmatprep.subr.mxu0 0.0
    %3086 = vmatpush1.msra.mxu0 %v3055
    %3087 = vmatprep.subr.mxu0 0.0
    %3088 = vmatpush1.msra.mxu0 %v3056
    %3089 = vmatprep.subr.mxu0 0.0
    %3090 = vmatpush1.msra.mxu0 %v3057
    %3091 = vmatprep.subr.mxu0 0.0
    %3092 = vmatpush1.msra.mxu0 %v3058
    %3093 = vmatprep.subr.mxu0 0.0
    %3094 = vmatpush1.msra.mxu0 %v3059
    %3095 = vmatprep.subr.mxu0 0.0
    %3096 = vmatpush1.msra.mxu0 %v3060
    %3097 = vmatprep.subr.mxu0 0.0
    %3098 = vmatpush1.msra.mxu0 %v3061
    %3099 = vmatprep.subr.mxu0 0.0
    %3100 = vmatpush1.msra.mxu0 %v3062
    %3101 = vmatprep.subr.mxu0 0.0
    %3102 = vmatpush1.msra.mxu0 %v3063
    %3103 = vmatprep.subr.mxu0 0.0
    %3104 = vmatpush1.msra.mxu0 0.0
    %3105 = vmatprep.subr.mxu0 0.0
    %3106 = vmatpush1.msra.mxu0 0.0
    %3107 = vmatprep.subr.mxu0 0.0
    %3108 = vmatpush1.msra.mxu0 0.0
    %3109 = vmatprep.subr.mxu0 0.0
    %3110 = vmatpush1.msra.mxu0 0.0
    %3111 = vmatprep.subr.mxu0 0.0
    %3112 = vmatpush1.msra.mxu0 0.0
    %3113 = vmatprep.subr.mxu0 0.0
    %3114 = vmatpush1.msra.mxu0 0.0
    %3115 = vmatprep.subr.mxu0 0.0
    %3116 = vmatpush1.msra.mxu0 0.0
    %3117 = vmatprep.subr.mxu0 0.0
    %3118 = vmatpush1.msra.mxu0 0.0
    %3119 = vmatprep.subr.mxu0 0.0
    %3120 = vmatpush1.msra.mxu0 0.0
    %3121 = vmatprep.subr.mxu0 0.0
    %3122 = vmatpush1.msra.mxu0 0.0
    %3123 = vmatprep.subr.mxu0 0.0
    %3124 = vmatpush1.msra.mxu0 0.0
    %3125 = vmatprep.subr.mxu0 0.0
    %3126 = vmatpush1.msra.mxu0 0.0
    %3127 = vmatprep.subr.mxu0 0.0
    %3128 = vmatpush1.msra.mxu0 0.0
    %3129 = vmatprep.subr.mxu0 0.0
    %3130 = vmatpush1.msra.mxu0 0.0
    %3131 = vmatprep.subr.mxu0 0.0
    %3132 = vmatpush1.msra.mxu0 0.0
    %3133 = vmatprep.subr.mxu0 0.0
    %3134 = vmatpush1.msra.mxu0 0.0
    %3135 = vmatprep.mubr.f32.mxu0 0.0
    %3136 = vmatmul.mubr.f32.gmra.mrb[0].mxu0 %v3040
    %v3137 = vpop.f32.mrb[0].mxu0
    %v3138 = vadd.f32 %v3069, %v3137
    %v3139 = vpop.f32.mrb[0].mxu0
    %3140 = vmatprep.mubr.f32.mxu0 0.0
    %3141 = vmatmul.mubr.f32.gmra.mrb[0].mxu0 %v3041
    %v3142 = vpop.f32.mrb[0].mxu0
    %v3143 = vadd.f32 %v3069, %v3142
    %v3144 = vpop.f32.mrb[0].mxu0
    %3145 = vmatprep.mubr.f32.mxu0 0.0
    %3146 = vmatmul.mubr.f32.gmra.mrb[0].mxu0 %v3042
    %v3147 = vpop.f32.mrb[0].mxu0
    %v3148 = vadd.f32 %v3069, %v3147
    %v3149 = vpop.f32.mrb[0].mxu0
    %3150 = vmatprep.mubr.f32.mxu0 0.0
    %3151 = vmatmul.mubr.f32.gmra.mrb[0].mxu0 %v3043
    %v3152 = vpop.f32.mrb[0].mxu0
    %v3153 = vadd.f32 %v3069, %v3152
    %v3154 = vpop.f32.mrb[0].mxu0
    %3155 = vmatprep.mubr.f32.mxu0 0.0
    %3156 = vmatmul.mubr.f32.gmra.mrb[0].mxu0 %v3044
    %v3157 = vpop.f32.mrb[0].mxu0
    %v3158 = vadd.f32 %v3069, %v3157
    %v3159 = vpop.f32.mrb[0].mxu0
    %3160 = vmatprep.mubr.f32.mxu0 0.0
    %3161 = vmatmul.mubr.f32.gmra.mrb[0].mxu0 %v3045
    %v3162 = vpop.f32.mrb[0].mxu0
    %v3163 = vadd.f32 %v3069, %v3162
    %v3164 = vpop.f32.mrb[0].mxu0
    %3165 = vmatprep.mubr.f32.mxu0 0.0
    %3166 = vmatmul.mubr.f32.gmra.mrb[0].mxu0 %v3046
    %v3167 = vpop.f32.mrb[0].mxu0
    %v3168 = vadd.f32 %v3069, %v3167
    %v3169 = vpop.f32.mrb[0].mxu0
    %3170 = vmatprep.mubr.f32.mxu0 0.0
    %3171 = vmatmul.mubr.f32.gmra.mrb[0].mxu0 %v3047
    %v3172 = vpop.f32.mrb[0].mxu0
    %v3173 = vadd.f32 %v3069, %v3172
    %v3174 = vpop.f32.mrb[0].mxu0
    %3175 = vdwg.mxu0
    %v3176 = vtanh.pop %v3138
    %v3177 = vtanh.pop %v3143
    %v3178 = vtanh.pop %v3148
    %v3179 = vtanh.pop %v3153
    %v3180 = vtanh.pop %v3158
    %v3181 = vtanh.pop %v3163
    %v3182 = vtanh.pop %v3168
    %v3183 = vtanh.pop %v3173
    %3184 = vst [vmem:[%s8] sm:$0xff] %v3176
    %3185 = vst [vmem:[%s8 + $0x8] sm:$0xff] %v3177
    %3186 = vst [vmem:[%s8 + $0x10] sm:$0xff] %v3178
    %3187 = vst [vmem:[%s8 + $0x18] sm:$0xff] %v3179
    %3188 = vst [vmem:[%s8 + $0x20] sm:$0xff] %v3180
    %3189 = vst [vmem:[%s8 + $0x28] sm:$0xff] %v3181
    %3190 = vst [vmem:[%s8 + $0x30] sm:$0xff] %v3182
    %3191 = vst [vmem:[%s8 + $0x38] sm:$0xff] %v3183
    // Predicated region
    $region46: #{seekndestroy_forward.1} parent=1 // pred_check
      _
    $region47: #{seekndestroy_forward.1} parent=1 // pred_check_branch
      %3193 = sbr.rel (0) target = $region49
    $region48: #{seekndestroy_forward.1} parent=1 // pred_region
      _
    $region49: #{seekndestroy_forward.1} parent=1 // pred_fallthru
      _
    // Predicated region
    $region50: #{seekndestroy_forward.1} parent=1 // pred_check
      _
    $region51: #{seekndestroy_forward.1} parent=1 // pred_check_branch
      %3195 = sbr.rel (0) target = $region53
    $region52: #{seekndestroy_forward.1} parent=1 // pred_region
      _
    $region53: #{seekndestroy_forward.1} parent=1 // pred_fallthru
      _
    %3196 = vsyncpa [#allocation5], 1
    %3197 = vsyncpa [#allocation7], 1

</llo_original>
